<compile_context>
chip_gen: v7x
topology: tpu7x:2x2x1
jax: 0.10.0
libtpu: 0.0.40
codegen_flags: <defaults>
</compile_context>

<pallas_src>
import functools

import jax
import jax.numpy as jnp
import numpy as np
from jax.experimental import pallas as pl
from jax.experimental.pallas import tpu as pltpu


def _attention_kernel(x_ref, mask_ref, wqkv_ref, wp_ref, bp_ref, o_ref, *,
                      num_heads, head_dim):
    """One grid step == `bb` batch rows.

    x_ref    : (bb, Np, Cp)   bf16, sequence- and channel-padded input
    mask_ref : (bb, 1, Np)    f32 key mask (1 = attend)
    wqkv_ref : (Cp, 3*Cp)     bf16 stacked [q|k|v] weights (q pre-scaled)
    wp_ref   : (C, Cp)        bf16 output-projection weights
    bp_ref   : (1, Cp)        f32 output-projection bias (zero padded lanes)
    o_ref    : (bb, Np, Cp)   output block
    """
    bb, Np, Cp = x_ref.shape
    H, D = num_heads, head_dim
    C = H * D

    # Fold batch into the MXU M dimension for the dense projections.
    xf = x_ref[...].reshape(bb * Np, Cp)                       # bf16

    # (1) Fused QKV projection: a single wide MXU call (output width 3*Cp),
    #     bf16 operands, f32 accumulation.
    qkv = jnp.dot(xf, wqkv_ref[...],
                  preferred_element_type=jnp.float32).astype(jnp.bfloat16)

    # Additive key-mask bias, shared across heads and queries (f32).
    bias = jnp.where(mask_ref[...] != 1, -10000.0, 0.0).astype(jnp.float32)

    # (2) Per-head attention core (scores / softmax / PV are inherently
    #     per-head).  Softmax scale is already folded into wq; the 1/sum(p)
    #     normalisation is deferred to the small [*, Np, D] head output.
    head_outs = []
    for h in range(H):
        qh = qkv[:, 0 * Cp + h * D:0 * Cp + (h + 1) * D].reshape(bb, Np, D)
        kh = qkv[:, 1 * Cp + h * D:1 * Cp + (h + 1) * D].reshape(bb, Np, D)
        vh = qkv[:, 2 * Cp + h * D:2 * Cp + (h + 1) * D].reshape(bb, Np, D)

        # Scores in f32 (softmax path stays f32 on all TPU generations).
        s = jnp.einsum('bnd,bmd->bnm', qh, kh,
                       preferred_element_type=jnp.float32)     # [bb, Np, Np]
        s = s + bias
        m = jnp.max(s, axis=-1, keepdims=True)
        p = jnp.exp(s - m)
        l = jnp.sum(p, axis=-1, keepdims=True)

        oh = jnp.einsum('bnm,bmd->bnd', p.astype(jnp.bfloat16), vh,
                        preferred_element_type=jnp.float32)    # [bb, Np, D]
        oh = oh * pl.reciprocal(l, approx=True)                # deferred norm
        head_outs.append(oh.astype(jnp.bfloat16))

    # (3) Merge heads on the lane axis -> one full-depth (K=C) projection.
    o_cat = jnp.concatenate(head_outs, axis=-1).reshape(bb * Np, C)
    y = jnp.dot(o_cat, wp_ref[...], preferred_element_type=jnp.float32)
    y = y + bp_ref[...].astype(jnp.float32)                    # [1, Cp] bcast
    o_ref[...] = y.reshape(bb, Np, Cp).astype(o_ref.dtype)


def attention_pallas(x, mask, w_qkv, w_proj, b_proj, *, num_heads):
    """x: [B, N, C], mask: [B, N]; jnp weight convention (y = x @ W + b)."""
    B, N, C = x.shape
    H = num_heads
    D = C // H
    scale = D ** (-0.5)
    cdt = jnp.bfloat16          # MXU operand dtype; accumulation stays f32

    # ---- lane-dense padding: channels and sequence to multiples of 128 ----
    Cp = ((C + 127) // 128) * 128
    Np = ((N + 127) // 128) * 128
    cpad, npad = Cp - C, Np - N

    xp = jnp.pad(x, ((0, 0), (0, npad), (0, cpad))).astype(cdt)
    # Padded key positions carry mask=0 -> they receive the -10000 bias.
    maskp = jnp.pad(mask, ((0, 0), (0, npad))).reshape(B, 1, Np)
    maskp = maskp.astype(jnp.float32)

    # ---- stacked QKV weight [Cp, 3*Cp]; softmax scale folded into q ----
    def _pad_block(w):
        return jnp.pad(w, ((0, cpad), (0, cpad))) if cpad else w

    wq = _pad_block(w_qkv[:, 0 * C:1 * C] * scale)
    wk = _pad_block(w_qkv[:, 1 * C:2 * C])
    wv = _pad_block(w_qkv[:, 2 * C:3 * C])
    wqkv = jnp.concatenate([wq, wk, wv], axis=1).astype(cdt)      # [Cp, 3*Cp]

    wp = (jnp.pad(w_proj, ((0, 0), (0, cpad))) if cpad else w_proj).astype(cdt)
    bp = (jnp.pad(b_proj, (0, cpad)) if cpad else b_proj).reshape(1, Cp)
    bp = bp.astype(jnp.float32)

    # ---- generation-aware VMEM budget -> batch rows per grid step (bb) ----
    try:
        vmem_cap = int(pltpu.get_tpu_info().vmem_capacity_bytes)
    except Exception:
        vmem_cap = 128 * 1024 * 1024

    bf16, f32 = 2, 4
    weight_bytes = (Cp * 3 * Cp + C * Cp) * bf16 + Cp * f32
    weight_resident = 2 * weight_bytes           # blocked specs: 2 buffers
    per_bb = (2 * Np * Cp * bf16                 # x block (double-buffered)
              + 2 * Np * Cp * f32                # out block (double-buffered)
              + 3 * Np * Cp * (bf16 + f32)       # fused qkv activation
              + 2 * Np * Np * f32                # scores + probs (live head)
              + 2 * Np * C * f32                 # head outputs / merged heads
              + Np * Cp * f32)                   # projected y before store
    budget = int(0.4 * vmem_cap) - weight_resident
    limit_vmem = max(1, budget // per_bb) if budget > 0 else 1
    limit_cores = max(1, B // 2)                 # >= 2 grid steps (v7x: 2 TCs)
    cap = max(1, min(B, limit_vmem, limit_cores))
    bb = 1
    for cand in range(1, cap + 1):
        if B % cand == 0:
            bb = cand
    grid = (B // bb,)

    vmem_need = weight_resident + bb * per_bb + (4 << 20)
    vmem_limit = int(min(int(0.9 * vmem_cap), max(48 << 20, 2 * vmem_need)))

    kernel = functools.partial(_attention_kernel, num_heads=H, head_dim=D)

    out_padded = pl.pallas_call(
        kernel,
        out_shape=jax.ShapeDtypeStruct((B, Np, Cp), x.dtype),
        grid_spec=pltpu.PrefetchScalarGridSpec(
            num_scalar_prefetch=0,
            grid=grid,
            in_specs=[
                pl.BlockSpec((bb, Np, Cp), lambda i: (i, 0, 0)),   # x (padded)
                pl.BlockSpec((bb, 1, Np), lambda i: (i, 0, 0)),    # mask
                pl.BlockSpec((Cp, 3 * Cp), lambda i: (0, 0)),      # wqkv
                pl.BlockSpec((C, Cp), lambda i: (0, 0)),           # w_proj
                pl.BlockSpec((1, Cp), lambda i: (0, 0)),           # b_proj
            ],
            out_specs=pl.BlockSpec((bb, Np, Cp), lambda i: (i, 0, 0)),
        ),
        compiler_params=pltpu.CompilerParams(
            dimension_semantics=("parallel",),
            vmem_limit_bytes=vmem_limit,
        ),
    )(xp, maskp, wqkv, wp, bp)

    return out_padded[:, :N, :C]


def attention_reference(x, mask, w_qkv, w_proj, b_proj, *, num_heads):
    """Pure-JAX (f32) reference mirroring the PyTorch forward."""
    B, N, C = x.shape
    D = C // num_heads
    scale = D ** (-0.5)
    qkv = (x @ w_qkv).reshape(B, N, 3, num_heads, D).transpose(2, 0, 3, 1, 4)
    q, k, v = qkv[0], qkv[1], qkv[2]                      # [B, H, N, D]
    attn = jnp.einsum("bhnd,bhmd->bhnm", q, k) * scale
    bias = (mask[:, None, None, :] != 1).astype(jnp.float32) * (-10000.0)
    attn = attn + bias
    attn = jax.nn.softmax(attn, axis=-1)
    out = jnp.einsum("bhnm,bhmd->bhnd", attn, v)
    out = out.transpose(0, 2, 1, 3).reshape(B, N, C)
    return out @ w_proj + b_proj


if __name__ == "__main__":
    # Small shapes consistent with the module: B=2, N=8, dim=32, heads=8.
    B, N, C = 2, 8, 32
    num_heads = 8

    key = jax.random.PRNGKey(0)
    kx, kw1, kw2, kb = jax.random.split(key, 4)

    x = jax.random.normal(kx, (B, N, C), dtype=jnp.float32)
    # mask: 1 = attend, 0 = masked-out (last two key positions of batch 1).
    mask = jnp.ones((B, N), dtype=jnp.float32)
    mask = mask.at[1, -2:].set(0.0)

    # Deterministic parameter init (nn.Linear-like uniform bounds).
    bound = 1.0 / np.sqrt(C)
    w_qkv = jax.random.uniform(kw1, (C, 3 * C), jnp.float32, -bound, bound)
    w_proj = jax.random.uniform(kw2, (C, C), jnp.float32, -bound, bound)
    b_proj = jax.random.uniform(kb, (C,), jnp.float32, -bound, bound)

    out = attention_pallas(x, mask, w_qkv, w_proj, b_proj, num_heads=num_heads)
    out = jax.block_until_ready(out)

    ref = attention_reference(x, mask, w_qkv, w_proj, b_proj,
                              num_heads=num_heads)
    # bf16 MXU operands + approx softmax reciprocal -> relaxed tolerance.
    np.testing.assert_allclose(np.asarray(out), np.asarray(ref),
                               rtol=3e-2, atol=3e-2)
    print("KERNEL_OK")
</pallas_src>

<mosaic_0001>
module attributes {stable_mosaic.version = 11 : i64} {
  func.func @_attention_kernel(%arg0: i32, %arg1: memref<1x128x128xbf16, #tpu.memory_space<vmem>>, %arg2: memref<1x1x128xf32, #tpu.memory_space<vmem>>, %arg3: memref<128x384xbf16, #tpu.memory_space<vmem>>, %arg4: memref<32x128xbf16, #tpu.memory_space<vmem>>, %arg5: memref<1x128xf32, #tpu.memory_space<vmem>>, %arg6: memref<1x128x128xf32, #tpu.memory_space<vmem>>) attributes {dimension_semantics = [#tpu.dimension_semantics<parallel>], iteration_bounds = array<i64: 2>, scalar_prefetch = 0 : i64, scratch_operands = 0 : i64, tpu.core_type = #tpu.core_type<tc>, window_params = [{transform_indices = @transform_0, window_bounds = array<i64: 1, 128, 128>}, {transform_indices = @transform_1, window_bounds = array<i64: 1, 1, 128>}, {pipeline_mode = #tpu.pipeline_mode<synchronous>, transform_indices = @transform_2, window_bounds = array<i64: 128, 384>}, {pipeline_mode = #tpu.pipeline_mode<synchronous>, transform_indices = @transform_3, window_bounds = array<i64: 32, 128>}, {pipeline_mode = #tpu.pipeline_mode<synchronous>, transform_indices = @transform_4, window_bounds = array<i64: 1, 128>}, {transform_indices = @transform_5, window_bounds = array<i64: 1, 128, 128>}]} {
    %c0 = arith.constant 0 : index
    %c0_0 = arith.constant 0 : index
    %c0_1 = arith.constant 0 : index
    %0 = vector.load %arg1[%c0, %c0_0, %c0_1] : memref<1x128x128xbf16, #tpu.memory_space<vmem>>, vector<1x128x128xbf16>
    %1 = vector.shape_cast %0 : vector<1x128x128xbf16> to vector<128x128xbf16>
    %c0_2 = arith.constant 0 : index
    %c0_3 = arith.constant 0 : index
    %2 = vector.load %arg3[%c0_2, %c0_3] : memref<128x384xbf16, #tpu.memory_space<vmem>>, vector<128x384xbf16>
    %cst = arith.constant dense<0.000000e+00> : vector<128x384xf32>
    %3 = tpu.matmul %1, %2, %cst {dimension_numbers = #tpu.dot_dimension_numbers<[1], [0], [0], [1], [0, 0, 1, 1], [], []>} : vector<128x128xbf16>, vector<128x384xbf16>, vector<128x384xf32> -> vector<128x384xf32>
    %4 = arith.truncf %3 : vector<128x384xf32> to vector<128x384xbf16>
    %c0_4 = arith.constant 0 : index
    %c0_5 = arith.constant 0 : index
    %c0_6 = arith.constant 0 : index
    %5 = vector.load %arg2[%c0_4, %c0_5, %c0_6] : memref<1x1x128xf32, #tpu.memory_space<vmem>>, vector<1x1x128xf32>
    %cst_7 = arith.constant 1.000000e+00 : f32
    %6 = vector.broadcast %cst_7 : f32 to vector<1x1x128xf32>
    %7 = arith.cmpf one, %5, %6 : vector<1x1x128xf32>
    %cst_8 = arith.constant -1.000000e+04 : f32
    %cst_9 = arith.constant 0.000000e+00 : f32
    %8 = vector.broadcast %cst_8 : f32 to vector<1x1x128xf32>
    %9 = vector.broadcast %cst_9 : f32 to vector<1x1x128xf32>
    %10 = arith.select %7, %8, %9 : vector<1x1x128xi1>, vector<1x1x128xf32>
    %11 = vector.extract_strided_slice %4 {offsets = [0, 0], sizes = [128, 4], strides = [1, 1]} : vector<128x384xbf16> to vector<128x4xbf16>
    %12 = vector.shape_cast %11 : vector<128x4xbf16> to vector<1x128x4xbf16>
    %13 = vector.extract_strided_slice %4 {offsets = [0, 128], sizes = [128, 4], strides = [1, 1]} : vector<128x384xbf16> to vector<128x4xbf16>
    %14 = vector.shape_cast %13 : vector<128x4xbf16> to vector<1x128x4xbf16>
    %15 = vector.extract_strided_slice %4 {offsets = [0, 256], sizes = [128, 4], strides = [1, 1]} : vector<128x384xbf16> to vector<128x4xbf16>
    %16 = vector.shape_cast %15 : vector<128x4xbf16> to vector<1x128x4xbf16>
    "tpu.trace_start"() <{level = 10 : i32, message = "bnd,bmd->bnm"}> : () -> ()
    %cst_10 = arith.constant dense<0.000000e+00> : vector<1x128x128xf32>
    %17 = tpu.matmul %12, %14, %cst_10 {dimension_numbers = #tpu.dot_dimension_numbers<[2], [2], [1], [1], [0, 0, 0, 1, 1, 1], [0], [0]>} : vector<1x128x4xbf16>, vector<1x128x4xbf16>, vector<1x128x128xf32> -> vector<1x128x128xf32>
    "tpu.trace_stop"() : () -> ()
    %18 = vector.broadcast %10 : vector<1x1x128xf32> to vector<1x128x128xf32>
    %19 = arith.addf %17, %18 : vector<1x128x128xf32>
    %cst_11 = arith.constant dense<0xFF800000> : vector<1x128xf32>
    %20 = vector.multi_reduction <maximumf>, %19, %cst_11 [2] : vector<1x128x128xf32> to vector<1x128xf32>
    %21 = vector.shape_cast %20 : vector<1x128xf32> to vector<1x128x1xf32>
    %22 = vector.broadcast %21 : vector<1x128x1xf32> to vector<1x128x128xf32>
    %23 = arith.subf %19, %22 : vector<1x128x128xf32>
    %24 = math.exp %23 : vector<1x128x128xf32>
    %cst_12 = arith.constant dense<0.000000e+00> : vector<1x128xf32>
    %25 = vector.multi_reduction <add>, %24, %cst_12 [2] : vector<1x128x128xf32> to vector<1x128xf32>
    %26 = vector.shape_cast %25 : vector<1x128xf32> to vector<1x128x1xf32>
    %27 = arith.truncf %24 : vector<1x128x128xf32> to vector<1x128x128xbf16>
    "tpu.trace_start"() <{level = 10 : i32, message = "bnm,bmd->bnd"}> : () -> ()
    %cst_13 = arith.constant dense<0.000000e+00> : vector<1x128x4xf32>
    %28 = tpu.matmul %27, %16, %cst_13 {dimension_numbers = #tpu.dot_dimension_numbers<[2], [1], [1], [2], [0, 0, 0, 1, 1, 2], [0], [0]>} : vector<1x128x128xbf16>, vector<1x128x4xbf16>, vector<1x128x4xf32> -> vector<1x128x4xf32>
    "tpu.trace_stop"() : () -> ()
    %29 = tpu.reciprocal %26 {approx = true} : vector<1x128x1xf32> -> vector<1x128x1xf32>
    %30 = vector.broadcast %29 : vector<1x128x1xf32> to vector<1x128x4xf32>
    %31 = arith.mulf %28, %30 : vector<1x128x4xf32>
    %32 = arith.truncf %31 : vector<1x128x4xf32> to vector<1x128x4xbf16>
    %33 = vector.extract_strided_slice %4 {offsets = [0, 4], sizes = [128, 4], strides = [1, 1]} : vector<128x384xbf16> to vector<128x4xbf16>
    %34 = vector.shape_cast %33 : vector<128x4xbf16> to vector<1x128x4xbf16>
    %35 = vector.extract_strided_slice %4 {offsets = [0, 132], sizes = [128, 4], strides = [1, 1]} : vector<128x384xbf16> to vector<128x4xbf16>
    %36 = vector.shape_cast %35 : vector<128x4xbf16> to vector<1x128x4xbf16>
    %37 = vector.extract_strided_slice %4 {offsets = [0, 260], sizes = [128, 4], strides = [1, 1]} : vector<128x384xbf16> to vector<128x4xbf16>
    %38 = vector.shape_cast %37 : vector<128x4xbf16> to vector<1x128x4xbf16>
    "tpu.trace_start"() <{level = 10 : i32, message = "bnd,bmd->bnm"}> : () -> ()
    %cst_14 = arith.constant dense<0.000000e+00> : vector<1x128x128xf32>
    %39 = tpu.matmul %34, %36, %cst_14 {dimension_numbers = #tpu.dot_dimension_numbers<[2], [2], [1], [1], [0, 0, 0, 1, 1, 1], [0], [0]>} : vector<1x128x4xbf16>, vector<1x128x4xbf16>, vector<1x128x128xf32> -> vector<1x128x128xf32>
    "tpu.trace_stop"() : () -> ()
    %40 = vector.broadcast %10 : vector<1x1x128xf32> to vector<1x128x128xf32>
    %41 = arith.addf %39, %40 : vector<1x128x128xf32>
    %cst_15 = arith.constant dense<0xFF800000> : vector<1x128xf32>
    %42 = vector.multi_reduction <maximumf>, %41, %cst_15 [2] : vector<1x128x128xf32> to vector<1x128xf32>
    %43 = vector.shape_cast %42 : vector<1x128xf32> to vector<1x128x1xf32>
    %44 = vector.broadcast %43 : vector<1x128x1xf32> to vector<1x128x128xf32>
    %45 = arith.subf %41, %44 : vector<1x128x128xf32>
    %46 = math.exp %45 : vector<1x128x128xf32>
    %cst_16 = arith.constant dense<0.000000e+00> : vector<1x128xf32>
    %47 = vector.multi_reduction <add>, %46, %cst_16 [2] : vector<1x128x128xf32> to vector<1x128xf32>
    %48 = vector.shape_cast %47 : vector<1x128xf32> to vector<1x128x1xf32>
    %49 = arith.truncf %46 : vector<1x128x128xf32> to vector<1x128x128xbf16>
    "tpu.trace_start"() <{level = 10 : i32, message = "bnm,bmd->bnd"}> : () -> ()
    %cst_17 = arith.constant dense<0.000000e+00> : vector<1x128x4xf32>
    %50 = tpu.matmul %49, %38, %cst_17 {dimension_numbers = #tpu.dot_dimension_numbers<[2], [1], [1], [2], [0, 0, 0, 1, 1, 2], [0], [0]>} : vector<1x128x128xbf16>, vector<1x128x4xbf16>, vector<1x128x4xf32> -> vector<1x128x4xf32>
    "tpu.trace_stop"() : () -> ()
    %51 = tpu.reciprocal %48 {approx = true} : vector<1x128x1xf32> -> vector<1x128x1xf32>
    %52 = vector.broadcast %51 : vector<1x128x1xf32> to vector<1x128x4xf32>
    %53 = arith.mulf %50, %52 : vector<1x128x4xf32>
    %54 = arith.truncf %53 : vector<1x128x4xf32> to vector<1x128x4xbf16>
    %55 = vector.extract_strided_slice %4 {offsets = [0, 8], sizes = [128, 4], strides = [1, 1]} : vector<128x384xbf16> to vector<128x4xbf16>
    %56 = vector.shape_cast %55 : vector<128x4xbf16> to vector<1x128x4xbf16>
    %57 = vector.extract_strided_slice %4 {offsets = [0, 136], sizes = [128, 4], strides = [1, 1]} : vector<128x384xbf16> to vector<128x4xbf16>
    %58 = vector.shape_cast %57 : vector<128x4xbf16> to vector<1x128x4xbf16>
    %59 = vector.extract_strided_slice %4 {offsets = [0, 264], sizes = [128, 4], strides = [1, 1]} : vector<128x384xbf16> to vector<128x4xbf16>
    %60 = vector.shape_cast %59 : vector<128x4xbf16> to vector<1x128x4xbf16>
    "tpu.trace_start"() <{level = 10 : i32, message = "bnd,bmd->bnm"}> : () -> ()
    %cst_18 = arith.constant dense<0.000000e+00> : vector<1x128x128xf32>
    %61 = tpu.matmul %56, %58, %cst_18 {dimension_numbers = #tpu.dot_dimension_numbers<[2], [2], [1], [1], [0, 0, 0, 1, 1, 1], [0], [0]>} : vector<1x128x4xbf16>, vector<1x128x4xbf16>, vector<1x128x128xf32> -> vector<1x128x128xf32>
    "tpu.trace_stop"() : () -> ()
    %62 = vector.broadcast %10 : vector<1x1x128xf32> to vector<1x128x128xf32>
    %63 = arith.addf %61, %62 : vector<1x128x128xf32>
    %cst_19 = arith.constant dense<0xFF800000> : vector<1x128xf32>
    %64 = vector.multi_reduction <maximumf>, %63, %cst_19 [2] : vector<1x128x128xf32> to vector<1x128xf32>
    %65 = vector.shape_cast %64 : vector<1x128xf32> to vector<1x128x1xf32>
    %66 = vector.broadcast %65 : vector<1x128x1xf32> to vector<1x128x128xf32>
    %67 = arith.subf %63, %66 : vector<1x128x128xf32>
    %68 = math.exp %67 : vector<1x128x128xf32>
    %cst_20 = arith.constant dense<0.000000e+00> : vector<1x128xf32>
    %69 = vector.multi_reduction <add>, %68, %cst_20 [2] : vector<1x128x128xf32> to vector<1x128xf32>
    %70 = vector.shape_cast %69 : vector<1x128xf32> to vector<1x128x1xf32>
    %71 = arith.truncf %68 : vector<1x128x128xf32> to vector<1x128x128xbf16>
    "tpu.trace_start"() <{level = 10 : i32, message = "bnm,bmd->bnd"}> : () -> ()
    %cst_21 = arith.constant dense<0.000000e+00> : vector<1x128x4xf32>
    %72 = tpu.matmul %71, %60, %cst_21 {dimension_numbers = #tpu.dot_dimension_numbers<[2], [1], [1], [2], [0, 0, 0, 1, 1, 2], [0], [0]>} : vector<1x128x128xbf16>, vector<1x128x4xbf16>, vector<1x128x4xf32> -> vector<1x128x4xf32>
    "tpu.trace_stop"() : () -> ()
    %73 = tpu.reciprocal %70 {approx = true} : vector<1x128x1xf32> -> vector<1x128x1xf32>
    %74 = vector.broadcast %73 : vector<1x128x1xf32> to vector<1x128x4xf32>
    %75 = arith.mulf %72, %74 : vector<1x128x4xf32>
    %76 = arith.truncf %75 : vector<1x128x4xf32> to vector<1x128x4xbf16>
    %77 = vector.extract_strided_slice %4 {offsets = [0, 12], sizes = [128, 4], strides = [1, 1]} : vector<128x384xbf16> to vector<128x4xbf16>
    %78 = vector.shape_cast %77 : vector<128x4xbf16> to vector<1x128x4xbf16>
    %79 = vector.extract_strided_slice %4 {offsets = [0, 140], sizes = [128, 4], strides = [1, 1]} : vector<128x384xbf16> to vector<128x4xbf16>
    %80 = vector.shape_cast %79 : vector<128x4xbf16> to vector<1x128x4xbf16>
    %81 = vector.extract_strided_slice %4 {offsets = [0, 268], sizes = [128, 4], strides = [1, 1]} : vector<128x384xbf16> to vector<128x4xbf16>
    %82 = vector.shape_cast %81 : vector<128x4xbf16> to vector<1x128x4xbf16>
    "tpu.trace_start"() <{level = 10 : i32, message = "bnd,bmd->bnm"}> : () -> ()
    %cst_22 = arith.constant dense<0.000000e+00> : vector<1x128x128xf32>
    %83 = tpu.matmul %78, %80, %cst_22 {dimension_numbers = #tpu.dot_dimension_numbers<[2], [2], [1], [1], [0, 0, 0, 1, 1, 1], [0], [0]>} : vector<1x128x4xbf16>, vector<1x128x4xbf16>, vector<1x128x128xf32> -> vector<1x128x128xf32>
    "tpu.trace_stop"() : () -> ()
    %84 = vector.broadcast %10 : vector<1x1x128xf32> to vector<1x128x128xf32>
    %85 = arith.addf %83, %84 : vector<1x128x128xf32>
    %cst_23 = arith.constant dense<0xFF800000> : vector<1x128xf32>
    %86 = vector.multi_reduction <maximumf>, %85, %cst_23 [2] : vector<1x128x128xf32> to vector<1x128xf32>
    %87 = vector.shape_cast %86 : vector<1x128xf32> to vector<1x128x1xf32>
    %88 = vector.broadcast %87 : vector<1x128x1xf32> to vector<1x128x128xf32>
    %89 = arith.subf %85, %88 : vector<1x128x128xf32>
    %90 = math.exp %89 : vector<1x128x128xf32>
    %cst_24 = arith.constant dense<0.000000e+00> : vector<1x128xf32>
    %91 = vector.multi_reduction <add>, %90, %cst_24 [2] : vector<1x128x128xf32> to vector<1x128xf32>
    %92 = vector.shape_cast %91 : vector<1x128xf32> to vector<1x128x1xf32>
    %93 = arith.truncf %90 : vector<1x128x128xf32> to vector<1x128x128xbf16>
    "tpu.trace_start"() <{level = 10 : i32, message = "bnm,bmd->bnd"}> : () -> ()
    %cst_25 = arith.constant dense<0.000000e+00> : vector<1x128x4xf32>
    %94 = tpu.matmul %93, %82, %cst_25 {dimension_numbers = #tpu.dot_dimension_numbers<[2], [1], [1], [2], [0, 0, 0, 1, 1, 2], [0], [0]>} : vector<1x128x128xbf16>, vector<1x128x4xbf16>, vector<1x128x4xf32> -> vector<1x128x4xf32>
    "tpu.trace_stop"() : () -> ()
    %95 = tpu.reciprocal %92 {approx = true} : vector<1x128x1xf32> -> vector<1x128x1xf32>
    %96 = vector.broadcast %95 : vector<1x128x1xf32> to vector<1x128x4xf32>
    %97 = arith.mulf %94, %96 : vector<1x128x4xf32>
    %98 = arith.truncf %97 : vector<1x128x4xf32> to vector<1x128x4xbf16>
    %99 = vector.extract_strided_slice %4 {offsets = [0, 16], sizes = [128, 4], strides = [1, 1]} : vector<128x384xbf16> to vector<128x4xbf16>
    %100 = vector.shape_cast %99 : vector<128x4xbf16> to vector<1x128x4xbf16>
    %101 = vector.extract_strided_slice %4 {offsets = [0, 144], sizes = [128, 4], strides = [1, 1]} : vector<128x384xbf16> to vector<128x4xbf16>
    %102 = vector.shape_cast %101 : vector<128x4xbf16> to vector<1x128x4xbf16>
    %103 = vector.extract_strided_slice %4 {offsets = [0, 272], sizes = [128, 4], strides = [1, 1]} : vector<128x384xbf16> to vector<128x4xbf16>
    %104 = vector.shape_cast %103 : vector<128x4xbf16> to vector<1x128x4xbf16>
    "tpu.trace_start"() <{level = 10 : i32, message = "bnd,bmd->bnm"}> : () -> ()
    %cst_26 = arith.constant dense<0.000000e+00> : vector<1x128x128xf32>
    %105 = tpu.matmul %100, %102, %cst_26 {dimension_numbers = #tpu.dot_dimension_numbers<[2], [2], [1], [1], [0, 0, 0, 1, 1, 1], [0], [0]>} : vector<1x128x4xbf16>, vector<1x128x4xbf16>, vector<1x128x128xf32> -> vector<1x128x128xf32>
    "tpu.trace_stop"() : () -> ()
    %106 = vector.broadcast %10 : vector<1x1x128xf32> to vector<1x128x128xf32>
    %107 = arith.addf %105, %106 : vector<1x128x128xf32>
    %cst_27 = arith.constant dense<0xFF800000> : vector<1x128xf32>
    %108 = vector.multi_reduction <maximumf>, %107, %cst_27 [2] : vector<1x128x128xf32> to vector<1x128xf32>
    %109 = vector.shape_cast %108 : vector<1x128xf32> to vector<1x128x1xf32>
    %110 = vector.broadcast %109 : vector<1x128x1xf32> to vector<1x128x128xf32>
    %111 = arith.subf %107, %110 : vector<1x128x128xf32>
    %112 = math.exp %111 : vector<1x128x128xf32>
    %cst_28 = arith.constant dense<0.000000e+00> : vector<1x128xf32>
    %113 = vector.multi_reduction <add>, %112, %cst_28 [2] : vector<1x128x128xf32> to vector<1x128xf32>
    %114 = vector.shape_cast %113 : vector<1x128xf32> to vector<1x128x1xf32>
    %115 = arith.truncf %112 : vector<1x128x128xf32> to vector<1x128x128xbf16>
    "tpu.trace_start"() <{level = 10 : i32, message = "bnm,bmd->bnd"}> : () -> ()
    %cst_29 = arith.constant dense<0.000000e+00> : vector<1x128x4xf32>
    %116 = tpu.matmul %115, %104, %cst_29 {dimension_numbers = #tpu.dot_dimension_numbers<[2], [1], [1], [2], [0, 0, 0, 1, 1, 2], [0], [0]>} : vector<1x128x128xbf16>, vector<1x128x4xbf16>, vector<1x128x4xf32> -> vector<1x128x4xf32>
    "tpu.trace_stop"() : () -> ()
    %117 = tpu.reciprocal %114 {approx = true} : vector<1x128x1xf32> -> vector<1x128x1xf32>
    %118 = vector.broadcast %117 : vector<1x128x1xf32> to vector<1x128x4xf32>
    %119 = arith.mulf %116, %118 : vector<1x128x4xf32>
    %120 = arith.truncf %119 : vector<1x128x4xf32> to vector<1x128x4xbf16>
    %121 = vector.extract_strided_slice %4 {offsets = [0, 20], sizes = [128, 4], strides = [1, 1]} : vector<128x384xbf16> to vector<128x4xbf16>
    %122 = vector.shape_cast %121 : vector<128x4xbf16> to vector<1x128x4xbf16>
    %123 = vector.extract_strided_slice %4 {offsets = [0, 148], sizes = [128, 4], strides = [1, 1]} : vector<128x384xbf16> to vector<128x4xbf16>
    %124 = vector.shape_cast %123 : vector<128x4xbf16> to vector<1x128x4xbf16>
    %125 = vector.extract_strided_slice %4 {offsets = [0, 276], sizes = [128, 4], strides = [1, 1]} : vector<128x384xbf16> to vector<128x4xbf16>
    %126 = vector.shape_cast %125 : vector<128x4xbf16> to vector<1x128x4xbf16>
    "tpu.trace_start"() <{level = 10 : i32, message = "bnd,bmd->bnm"}> : () -> ()
    %cst_30 = arith.constant dense<0.000000e+00> : vector<1x128x128xf32>
    %127 = tpu.matmul %122, %124, %cst_30 {dimension_numbers = #tpu.dot_dimension_numbers<[2], [2], [1], [1], [0, 0, 0, 1, 1, 1], [0], [0]>} : vector<1x128x4xbf16>, vector<1x128x4xbf16>, vector<1x128x128xf32> -> vector<1x128x128xf32>
    "tpu.trace_stop"() : () -> ()
    %128 = vector.broadcast %10 : vector<1x1x128xf32> to vector<1x128x128xf32>
    %129 = arith.addf %127, %128 : vector<1x128x128xf32>
    %cst_31 = arith.constant dense<0xFF800000> : vector<1x128xf32>
    %130 = vector.multi_reduction <maximumf>, %129, %cst_31 [2] : vector<1x128x128xf32> to vector<1x128xf32>
    %131 = vector.shape_cast %130 : vector<1x128xf32> to vector<1x128x1xf32>
    %132 = vector.broadcast %131 : vector<1x128x1xf32> to vector<1x128x128xf32>
    %133 = arith.subf %129, %132 : vector<1x128x128xf32>
    %134 = math.exp %133 : vector<1x128x128xf32>
    %cst_32 = arith.constant dense<0.000000e+00> : vector<1x128xf32>
    %135 = vector.multi_reduction <add>, %134, %cst_32 [2] : vector<1x128x128xf32> to vector<1x128xf32>
    %136 = vector.shape_cast %135 : vector<1x128xf32> to vector<1x128x1xf32>
    %137 = arith.truncf %134 : vector<1x128x128xf32> to vector<1x128x128xbf16>
    "tpu.trace_start"() <{level = 10 : i32, message = "bnm,bmd->bnd"}> : () -> ()
    %cst_33 = arith.constant dense<0.000000e+00> : vector<1x128x4xf32>
    %138 = tpu.matmul %137, %126, %cst_33 {dimension_numbers = #tpu.dot_dimension_numbers<[2], [1], [1], [2], [0, 0, 0, 1, 1, 2], [0], [0]>} : vector<1x128x128xbf16>, vector<1x128x4xbf16>, vector<1x128x4xf32> -> vector<1x128x4xf32>
    "tpu.trace_stop"() : () -> ()
    %139 = tpu.reciprocal %136 {approx = true} : vector<1x128x1xf32> -> vector<1x128x1xf32>
    %140 = vector.broadcast %139 : vector<1x128x1xf32> to vector<1x128x4xf32>
    %141 = arith.mulf %138, %140 : vector<1x128x4xf32>
    %142 = arith.truncf %141 : vector<1x128x4xf32> to vector<1x128x4xbf16>
    %143 = vector.extract_strided_slice %4 {offsets = [0, 24], sizes = [128, 4], strides = [1, 1]} : vector<128x384xbf16> to vector<128x4xbf16>
    %144 = vector.shape_cast %143 : vector<128x4xbf16> to vector<1x128x4xbf16>
    %145 = vector.extract_strided_slice %4 {offsets = [0, 152], sizes = [128, 4], strides = [1, 1]} : vector<128x384xbf16> to vector<128x4xbf16>
    %146 = vector.shape_cast %145 : vector<128x4xbf16> to vector<1x128x4xbf16>
    %147 = vector.extract_strided_slice %4 {offsets = [0, 280], sizes = [128, 4], strides = [1, 1]} : vector<128x384xbf16> to vector<128x4xbf16>
    %148 = vector.shape_cast %147 : vector<128x4xbf16> to vector<1x128x4xbf16>
    "tpu.trace_start"() <{level = 10 : i32, message = "bnd,bmd->bnm"}> : () -> ()
    %cst_34 = arith.constant dense<0.000000e+00> : vector<1x128x128xf32>
    %149 = tpu.matmul %144, %146, %cst_34 {dimension_numbers = #tpu.dot_dimension_numbers<[2], [2], [1], [1], [0, 0, 0, 1, 1, 1], [0], [0]>} : vector<1x128x4xbf16>, vector<1x128x4xbf16>, vector<1x128x128xf32> -> vector<1x128x128xf32>
    "tpu.trace_stop"() : () -> ()
    %150 = vector.broadcast %10 : vector<1x1x128xf32> to vector<1x128x128xf32>
    %151 = arith.addf %149, %150 : vector<1x128x128xf32>
    %cst_35 = arith.constant dense<0xFF800000> : vector<1x128xf32>
    %152 = vector.multi_reduction <maximumf>, %151, %cst_35 [2] : vector<1x128x128xf32> to vector<1x128xf32>
    %153 = vector.shape_cast %152 : vector<1x128xf32> to vector<1x128x1xf32>
    %154 = vector.broadcast %153 : vector<1x128x1xf32> to vector<1x128x128xf32>
    %155 = arith.subf %151, %154 : vector<1x128x128xf32>
    %156 = math.exp %155 : vector<1x128x128xf32>
    %cst_36 = arith.constant dense<0.000000e+00> : vector<1x128xf32>
    %157 = vector.multi_reduction <add>, %156, %cst_36 [2] : vector<1x128x128xf32> to vector<1x128xf32>
    %158 = vector.shape_cast %157 : vector<1x128xf32> to vector<1x128x1xf32>
    %159 = arith.truncf %156 : vector<1x128x128xf32> to vector<1x128x128xbf16>
    "tpu.trace_start"() <{level = 10 : i32, message = "bnm,bmd->bnd"}> : () -> ()
    %cst_37 = arith.constant dense<0.000000e+00> : vector<1x128x4xf32>
    %160 = tpu.matmul %159, %148, %cst_37 {dimension_numbers = #tpu.dot_dimension_numbers<[2], [1], [1], [2], [0, 0, 0, 1, 1, 2], [0], [0]>} : vector<1x128x128xbf16>, vector<1x128x4xbf16>, vector<1x128x4xf32> -> vector<1x128x4xf32>
    "tpu.trace_stop"() : () -> ()
    %161 = tpu.reciprocal %158 {approx = true} : vector<1x128x1xf32> -> vector<1x128x1xf32>
    %162 = vector.broadcast %161 : vector<1x128x1xf32> to vector<1x128x4xf32>
    %163 = arith.mulf %160, %162 : vector<1x128x4xf32>
    %164 = arith.truncf %163 : vector<1x128x4xf32> to vector<1x128x4xbf16>
    %165 = vector.extract_strided_slice %4 {offsets = [0, 28], sizes = [128, 4], strides = [1, 1]} : vector<128x384xbf16> to vector<128x4xbf16>
    %166 = vector.shape_cast %165 : vector<128x4xbf16> to vector<1x128x4xbf16>
    %167 = vector.extract_strided_slice %4 {offsets = [0, 156], sizes = [128, 4], strides = [1, 1]} : vector<128x384xbf16> to vector<128x4xbf16>
    %168 = vector.shape_cast %167 : vector<128x4xbf16> to vector<1x128x4xbf16>
    %169 = vector.extract_strided_slice %4 {offsets = [0, 284], sizes = [128, 4], strides = [1, 1]} : vector<128x384xbf16> to vector<128x4xbf16>
    %170 = vector.shape_cast %169 : vector<128x4xbf16> to vector<1x128x4xbf16>
    "tpu.trace_start"() <{level = 10 : i32, message = "bnd,bmd->bnm"}> : () -> ()
    %cst_38 = arith.constant dense<0.000000e+00> : vector<1x128x128xf32>
    %171 = tpu.matmul %166, %168, %cst_38 {dimension_numbers = #tpu.dot_dimension_numbers<[2], [2], [1], [1], [0, 0, 0, 1, 1, 1], [0], [0]>} : vector<1x128x4xbf16>, vector<1x128x4xbf16>, vector<1x128x128xf32> -> vector<1x128x128xf32>
    "tpu.trace_stop"() : () -> ()
    %172 = vector.broadcast %10 : vector<1x1x128xf32> to vector<1x128x128xf32>
    %173 = arith.addf %171, %172 : vector<1x128x128xf32>
    %cst_39 = arith.constant dense<0xFF800000> : vector<1x128xf32>
    %174 = vector.multi_reduction <maximumf>, %173, %cst_39 [2] : vector<1x128x128xf32> to vector<1x128xf32>
    %175 = vector.shape_cast %174 : vector<1x128xf32> to vector<1x128x1xf32>
    %176 = vector.broadcast %175 : vector<1x128x1xf32> to vector<1x128x128xf32>
    %177 = arith.subf %173, %176 : vector<1x128x128xf32>
    %178 = math.exp %177 : vector<1x128x128xf32>
    %cst_40 = arith.constant dense<0.000000e+00> : vector<1x128xf32>
    %179 = vector.multi_reduction <add>, %178, %cst_40 [2] : vector<1x128x128xf32> to vector<1x128xf32>
    %180 = vector.shape_cast %179 : vector<1x128xf32> to vector<1x128x1xf32>
    %181 = arith.truncf %178 : vector<1x128x128xf32> to vector<1x128x128xbf16>
    "tpu.trace_start"() <{level = 10 : i32, message = "bnm,bmd->bnd"}> : () -> ()
    %cst_41 = arith.constant dense<0.000000e+00> : vector<1x128x4xf32>
    %182 = tpu.matmul %181, %170, %cst_41 {dimension_numbers = #tpu.dot_dimension_numbers<[2], [1], [1], [2], [0, 0, 0, 1, 1, 2], [0], [0]>} : vector<1x128x128xbf16>, vector<1x128x4xbf16>, vector<1x128x4xf32> -> vector<1x128x4xf32>
    "tpu.trace_stop"() : () -> ()
    %183 = tpu.reciprocal %180 {approx = true} : vector<1x128x1xf32> -> vector<1x128x1xf32>
    %184 = vector.broadcast %183 : vector<1x128x1xf32> to vector<1x128x4xf32>
    %185 = arith.mulf %182, %184 : vector<1x128x4xf32>
    %186 = arith.truncf %185 : vector<1x128x4xf32> to vector<1x128x4xbf16>
    %187 = tpu.concatenate %32, %54, %76, %98, %120, %142, %164, %186 in 2 : vector<1x128x4xbf16>, vector<1x128x4xbf16>, vector<1x128x4xbf16>, vector<1x128x4xbf16>, vector<1x128x4xbf16>, vector<1x128x4xbf16>, vector<1x128x4xbf16>, vector<1x128x4xbf16> -> vector<1x128x32xbf16>
    %188 = vector.shape_cast %187 : vector<1x128x32xbf16> to vector<128x32xbf16>
    %c0_42 = arith.constant 0 : index
    %c0_43 = arith.constant 0 : index
    %189 = vector.load %arg4[%c0_42, %c0_43] : memref<32x128xbf16, #tpu.memory_space<vmem>>, vector<32x128xbf16>
    %cst_44 = arith.constant dense<0.000000e+00> : vector<128x128xf32>
    %190 = tpu.matmul %188, %189, %cst_44 {dimension_numbers = #tpu.dot_dimension_numbers<[1], [0], [0], [1], [0, 0, 1, 1], [], []>} : vector<128x32xbf16>, vector<32x128xbf16>, vector<128x128xf32> -> vector<128x128xf32>
    %c0_45 = arith.constant 0 : index
    %c0_46 = arith.constant 0 : index
    %191 = vector.load %arg5[%c0_45, %c0_46] : memref<1x128xf32, #tpu.memory_space<vmem>>, vector<1x128xf32>
    %192 = vector.broadcast %191 : vector<1x128xf32> to vector<128x128xf32>
    %193 = arith.addf %190, %192 : vector<128x128xf32>
    %194 = vector.shape_cast %193 : vector<128x128xf32> to vector<1x128x128xf32>
    %c0_47 = arith.constant 0 : index
    %c0_48 = arith.constant 0 : index
    %c0_49 = arith.constant 0 : index
    %195 = vector.load %arg6[%c0_47, %c0_48, %c0_49] : memref<1x128x128xf32, #tpu.memory_space<vmem>>, vector<1x128x128xf32>
    tpu.vector_store %arg6[%c0_47, %c0_48, %c0_49], %194 {strides = array<i32>} : memref<1x128x128xf32, #tpu.memory_space<vmem>>, vector<1x128x128xf32>,
    return
  }
  func.func @transform_0(%arg0: i32) -> (i32, i32, i32) {
    %c0_i32 = arith.constant 0 : i32
    %c0_i32_0 = arith.constant 0 : i32
    %c0_i32_1 = arith.constant 0 : i32
    return %arg0, %c0_i32, %c0_i32_0 : i32, i32, i32
  }
  func.func @transform_1(%arg0: i32) -> (i32, i32, i32) {
    %c0_i32 = arith.constant 0 : i32
    %c0_i32_0 = arith.constant 0 : i32
    %c0_i32_1 = arith.constant 0 : i32
    return %arg0, %c0_i32, %c0_i32_0 : i32, i32, i32
  }
  func.func @transform_2(%arg0: i32) -> (i32, i32) {
    %c0_i32 = arith.constant 0 : i32
    %c0_i32_0 = arith.constant 0 : i32
    %c0_i32_1 = arith.constant 0 : i32
    return %c0_i32, %c0_i32_0 : i32, i32
  }
  func.func @transform_3(%arg0: i32) -> (i32, i32) {
    %c0_i32 = arith.constant 0 : i32
    %c0_i32_0 = arith.constant 0 : i32
    %c0_i32_1 = arith.constant 0 : i32
    return %c0_i32, %c0_i32_0 : i32, i32
  }
  func.func @transform_4(%arg0: i32) -> (i32, i32) {
    %c0_i32 = arith.constant 0 : i32
    %c0_i32_0 = arith.constant 0 : i32
    %c0_i32_1 = arith.constant 0 : i32
    return %c0_i32, %c0_i32_0 : i32, i32
  }
  func.func @transform_5(%arg0: i32) -> (i32, i32, i32) {
    %c0_i32 = arith.constant 0 : i32
    %c0_i32_0 = arith.constant 0 : i32
    %c0_i32_1 = arith.constant 0 : i32
    return %arg0, %c0_i32, %c0_i32_0 : i32, i32, i32
  }
}

</mosaic_0001>

<llo_original>
// kernel: tpu_custom_call.1
$region0: #{tpu_custom_call.1}
  #allocation0 [shape = 'u32[]', space=smem, size = 0x4, offset = 0x4, fixed_abs, tag = 'smem constant byte address 0x4 - core index']
  #allocation1 [shape = 'u32[144,128]{1,0:T(1,128)}', space=vmem, size = 0x12000, scoped, tag = 'internal scratch']
  %s0 = inlined_call_operand.hbm [shape: bf16[2,128,128], index: 0, kind: input, shape index: {}]
  %s1 = inlined_call_operand.vmem [shape: f32[2,1,128], index: 1, kind: input, shape index: {}]
  %s2 = inlined_call_operand.hbm [shape: bf16[128,384], index: 2, kind: input, shape index: {}]
  %s3 = inlined_call_operand.hbm [shape: bf16[32,128], index: 3, kind: input, shape index: {}]
  %s4 = inlined_call_operand.vmem [shape: f32[1,128], index: 4, kind: input, shape index: {}]
  %s5 = inlined_call_operand.hbm [shape: f32[2,128,128], index: 5, kind: output, shape index: {}]
  %s6 = sld [smem:[#allocation0]]
  $region65: #{tpu_custom_call.1} parent=0
    _
  %s8 = ssub.s32 1, %s6
  %s9 = scalar_select 0, %s8, %s6
  $region1: #{tpu_custom_call.1} parent=0
    #allocation2 [shape = 'u8[65536]{0}', space=vmem, size = 0x10000, scoped, tag = 'input window, operand 0']
    #allocation3 [shape = 's32[2]{0}', space=sflag, size = 0x8, scoped, tag = 'scoped memory for tpu_custom_call.1']
    #allocation4 [shape = 's32[2]{0}', space=sflag, size = 0x8, scoped, tag = 'scoped memory for tpu_custom_call.1']
    #allocation5 [shape = 'u8[98304]{0}', space=vmem, size = 0x18000, scoped, tag = 'input window, operand 2, single buffered']
    #allocation6 [shape = 's32[1]{0}', space=sflag, size = 0x4, scoped, tag = 'scoped memory for tpu_custom_call.1']
    #allocation7 [shape = 'u8[8192]{0}', space=vmem, size = 0x2000, scoped, tag = 'input window, operand 3, single buffered']
    #allocation8 [shape = 'u8[131072]{0}', space=vmem, size = 0x20000, scoped, tag = 'output window, operand 0']
    %10 = vsyncpa [#allocation3], 0
    %s11 = scalar_lea.sflag [#allocation3], 1
    %12 = vsyncpa %s11, 0
    %13 = vsyncpa [#allocation6], 0
    %14 = vsyncpa [#allocation4], 0
    %s15 = scalar_lea.sflag [#allocation4], 1
    %16 = vsyncpa %s15, 0
    loop: start=0, step=1, limit=4
    $region2: #{tpu_custom_call.1} parent=1 // loop_pre_header
      _
    $region3: #{tpu_custom_call.1} parent=1 // loop_header
      %s18 = sphi 0, %s22
      %p19 = scmp.ge.s32.totalorder %s18, 4
      %s28 = sphi 0, %s30
      %s31 = sphi 0, %s28
      %s32 = sphi 0, %s31
      %s48 = sphi 0, %s32
      %s54 = sphi 0, %s56
      %s57 = sphi 0, %s54
      %s58 = sphi 0, %s57
      %s74 = sphi 0, %s58
      %s78 = sphi 0, %s78
      %s80 = sphi 0, %s78
      %s81 = sphi 0, %s80
      %s95 = sphi 0, %s81
      %s99 = sphi 0, %s99
      %s101 = sphi 0, %s99
      %s102 = sphi 0, %s101
      %s116 = sphi 0, %s102
      %s120 = sphi 0, %s120
      %s122 = sphi 0, %s120
      %s123 = sphi 0, %s122
      %s137 = sphi 0, %s123
      %s143 = sphi 0, %s145
      %s146 = sphi 0, %s143
      %s147 = sphi 0, %s146
      %s163 = sphi 0, %s147
    $region4: #{tpu_custom_call.1} parent=1 // loop_header_branch
      %21 = sbr.rel (%p19) target = $region8
    $region5: #{tpu_custom_call.1} parent=1 // loop_body
      %s23 = ssub.s32 %s18, 1
      %s24 = ssub.s32 %s18, 2
      %s25 = sadd.s32 %s18, 1
      %s26 = ssub.s32 %s18, %s25
      %p27 = scmp.eq.s32.totalorder %s26, 0
      %s29 = sadd.s32 %s28, 1
      %s30 = scalar_select %p27, %s28, %s29
      %p33 = pneg %p27
      %p34 = scmp.eq.s32.totalorder %s18, 1
      %p35 = por %p33, %p34
      %p36 = scmp.ne.s32.totalorder %s28, %s31
      %p37 = scmp.eq.s32.totalorder %s18, 0
      %p38 = por %p36, %p37
      %p39 = scmp.ne.s32.totalorder %s28, %s31
      %p40 = scmp.eq.s32.totalorder %s23, 1
      %p41 = por %p39, %p40
      %p42 = scmp.ne.s32.totalorder %s31, %s32
      %p43 = scmp.eq.s32.totalorder %s23, 0
      %p44 = por %p42, %p43
      %p45 = scmp.ne.s32.totalorder %s31, %s32
      %p46 = scmp.eq.s32.totalorder %s24, 1
      %p47 = por %p45, %p46
      %p49 = scmp.ne.s32.totalorder %s32, %s48
      %p50 = scmp.eq.s32.totalorder %s24, 0
      %p51 = por %p49, %p50
      %s52 = ssub.s32 %s18, %s25
      %p53 = scmp.eq.s32.totalorder %s52, 0
      %s55 = sadd.s32 %s54, 1
      %s56 = scalar_select %p53, %s54, %s55
      %p59 = pneg %p53
      %p60 = scmp.eq.s32.totalorder %s18, 1
      %p61 = por %p59, %p60
      %p62 = scmp.ne.s32.totalorder %s54, %s57
      %p63 = scmp.eq.s32.totalorder %s18, 0
      %p64 = por %p62, %p63
      %p65 = scmp.ne.s32.totalorder %s54, %s57
      %p66 = scmp.eq.s32.totalorder %s23, 1
      %p67 = por %p65, %p66
      %p68 = scmp.ne.s32.totalorder %s57, %s58
      %p69 = scmp.eq.s32.totalorder %s23, 0
      %p70 = por %p68, %p69
      %p71 = scmp.ne.s32.totalorder %s57, %s58
      %p72 = scmp.eq.s32.totalorder %s24, 1
      %p73 = por %p71, %p72
      %p75 = scmp.ne.s32.totalorder %s58, %s74
      %p76 = scmp.eq.s32.totalorder %s24, 0
      %p77 = por %p75, %p76
      %s79 = sadd.s32 %s78, 1
      %p82 = scmp.eq.s32.totalorder %s18, 1
      %p83 = scmp.ne.s32.totalorder %s78, %s80
      %p84 = scmp.eq.s32.totalorder %s18, 0
      %p85 = por %p83, %p84
      %p86 = scmp.ne.s32.totalorder %s78, %s80
      %p87 = scmp.eq.s32.totalorder %s23, 1
      %p88 = por %p86, %p87
      %p89 = scmp.ne.s32.totalorder %s80, %s81
      %p90 = scmp.eq.s32.totalorder %s23, 0
      %p91 = por %p89, %p90
      %p92 = scmp.ne.s32.totalorder %s80, %s81
      %p93 = scmp.eq.s32.totalorder %s24, 1
      %p94 = por %p92, %p93
      %p96 = scmp.ne.s32.totalorder %s81, %s95
      %p97 = scmp.eq.s32.totalorder %s24, 0
      %p98 = por %p96, %p97
      %s100 = sadd.s32 %s99, 1
      %p103 = scmp.eq.s32.totalorder %s18, 1
      %p104 = scmp.ne.s32.totalorder %s99, %s101
      %p105 = scmp.eq.s32.totalorder %s18, 0
      %p106 = por %p104, %p105
      %p107 = scmp.ne.s32.totalorder %s99, %s101
      %p108 = scmp.eq.s32.totalorder %s23, 1
      %p109 = por %p107, %p108
      %p110 = scmp.ne.s32.totalorder %s101, %s102
      %p111 = scmp.eq.s32.totalorder %s23, 0
      %p112 = por %p110, %p111
      %p113 = scmp.ne.s32.totalorder %s101, %s102
      %p114 = scmp.eq.s32.totalorder %s24, 1
      %p115 = por %p113, %p114
      %p117 = scmp.ne.s32.totalorder %s102, %s116
      %p118 = scmp.eq.s32.totalorder %s24, 0
      %p119 = por %p117, %p118
      %s121 = sadd.s32 %s120, 1
      %p124 = scmp.eq.s32.totalorder %s18, 1
      %p125 = scmp.ne.s32.totalorder %s120, %s122
      %p126 = scmp.eq.s32.totalorder %s18, 0
      %p127 = por %p125, %p126
      %p128 = scmp.ne.s32.totalorder %s120, %s122
      %p129 = scmp.eq.s32.totalorder %s23, 1
      %p130 = por %p128, %p129
      %p131 = scmp.ne.s32.totalorder %s122, %s123
      %p132 = scmp.eq.s32.totalorder %s23, 0
      %p133 = por %p131, %p132
      %p134 = scmp.ne.s32.totalorder %s122, %s123
      %p135 = scmp.eq.s32.totalorder %s24, 1
      %p136 = por %p134, %p135
      %p138 = scmp.ne.s32.totalorder %s123, %s137
      %p139 = scmp.eq.s32.totalorder %s24, 0
      %p140 = por %p138, %p139
      %s141 = ssub.s32 %s18, %s25
      %p142 = scmp.eq.s32.totalorder %s141, 0
      %s144 = sadd.s32 %s143, 1
      %s145 = scalar_select %p142, %s143, %s144
      %p148 = pneg %p142
      %p149 = scmp.eq.s32.totalorder %s18, 1
      %p150 = por %p148, %p149
      %p151 = scmp.ne.s32.totalorder %s143, %s146
      %p152 = scmp.eq.s32.totalorder %s18, 0
      %p153 = por %p151, %p152
      %p154 = scmp.ne.s32.totalorder %s143, %s146
      %p155 = scmp.eq.s32.totalorder %s23, 1
      %p156 = por %p154, %p155
      %p157 = scmp.ne.s32.totalorder %s146, %s147
      %p158 = scmp.eq.s32.totalorder %s23, 0
      %p159 = por %p157, %p158
      %p160 = scmp.ne.s32.totalorder %s146, %s147
      %p161 = scmp.eq.s32.totalorder %s24, 1
      %p162 = por %p160, %p161
      %p164 = scmp.ne.s32.totalorder %s147, %s163
      %p165 = scmp.eq.s32.totalorder %s24, 0
      %p166 = por %p164, %p165
      %p167 = scmp.le.s32.totalorder 1, %s18
      %p168 = scmp.lt.s32.totalorder %s18, 3
      %p169 = pnand %p167, %p168
      %p170 = pneg %p169
      // Predicated region
      $region9: #{tpu_custom_call.1} parent=5 // pred_check
        _
      $region10: #{tpu_custom_call.1} parent=5 // pred_check_branch
        %172 = sbr.rel (%p169) target = $region12
      $region11: #{tpu_custom_call.1} parent=5 // pred_region
        %s173 = ssub.s32 %s18, 1
        // Predicated region
        $region13: #{tpu_custom_call.1} parent=11 // pred_check
          %p174 = pneg %p91
        $region14: #{tpu_custom_call.1} parent=11 // pred_check_branch
          %176 = sbr.rel (%p174) target = $region16
        $region15: #{tpu_custom_call.1} parent=11 // pred_region
          %s178 = ssub.s32 3072, 3072
          %179 = vsyncadd [#allocation6], %s178
          %s180 = sshll.u32 [#allocation5], 4
          %s181 = int_to_ptr.vmem [resolvable:$true] %s180
          %186 = dma.hbm_to_vmem [thread:$0]  %s2, 3072, %s181, [#allocation6], 192, 192, 12
        $region16: #{tpu_custom_call.1} parent=11 // pred_fallthru
          _
        // Predicated region
        $region17: #{tpu_custom_call.1} parent=11 // pred_check
          %p187 = pneg %p112
        $region18: #{tpu_custom_call.1} parent=11 // pred_check_branch
          %189 = sbr.rel (%p187) target = $region20
        $region19: #{tpu_custom_call.1} parent=11 // pred_region
          %s191 = ssub.s32 256, 256
          %192 = vsyncadd [#allocation6], %s191
          %s193 = sshll.u32 [#allocation7], 4
          %s194 = int_to_ptr.vmem [resolvable:$true] %s193
          %199 = dma.hbm_to_vmem [thread:$0]  %s3, 256, %s194, [#allocation6], 64, 64, 4
        $region20: #{tpu_custom_call.1} parent=11 // pred_fallthru
          _
        // Predicated region
        $region21: #{tpu_custom_call.1} parent=11 // pred_check
          %p200 = pneg %p133
        $region22: #{tpu_custom_call.1} parent=11 // pred_check_branch
          %202 = sbr.rel (%p200) target = $region24
        $region23: #{tpu_custom_call.1} parent=11 // pred_region
          _
        $region24: #{tpu_custom_call.1} parent=11 // pred_fallthru
          _
      $region12: #{tpu_custom_call.1} parent=5 // pred_fallthru
        _
      %p203 = scmp.lt.s32.totalorder %s18, 2
      // Predicated region
      $region25: #{tpu_custom_call.1} parent=5 // pred_check
        %p204 = pneg %p203
      $region26: #{tpu_custom_call.1} parent=5 // pred_check_branch
        %206 = sbr.rel (%p204) target = $region28
      $region27: #{tpu_custom_call.1} parent=5 // pred_region
        // Predicated region
        $region29: #{tpu_custom_call.1} parent=27 // pred_check
          %p207 = pneg %p38
        $region30: #{tpu_custom_call.1} parent=27 // pred_check_branch
          %209 = sbr.rel (%p207) target = $region32
        $region31: #{tpu_custom_call.1} parent=27 // pred_region
          %s210 = sand.u32 %s28, 1
          %s211 = scalar_lea.sflag [#allocation3], %s210
          %s212 = sand.u32 %s28, 1
          %s213 = smul.addr %s212, 64
          %s214 = scalar_lea.vmem [#allocation2], %s213
          %s216 = ssub.s32 1024, 1024
          %217 = vsyncadd %s211, %s216
          %s218 = smul.addr %s18, 16
          %s219 = smul.addr %s218, 64
          %s220 = scalar_lea.hbm %s0, %s219
          %s221 = sshll.u32 %s214, 4
          %s222 = int_to_ptr.vmem [resolvable:$true] %s221
          %227 = dma.hbm_to_vmem [thread:$0]  %s220, 1024, %s222, %s211, 64, 64, 4
        $region32: #{tpu_custom_call.1} parent=27 // pred_fallthru
          _
        // Predicated region
        $region33: #{tpu_custom_call.1} parent=27 // pred_check
          %p228 = pneg %p64
        $region34: #{tpu_custom_call.1} parent=27 // pred_check_branch
          %230 = sbr.rel (%p228) target = $region36
        $region35: #{tpu_custom_call.1} parent=27 // pred_region
          %p231 = scmp.lt.s32.totalorder %s18, 1
          %s232 = scalar_select %p231, %s18, 1
          %s233 = scalar_lea.vmem %s1, %s232
        $region36: #{tpu_custom_call.1} parent=27 // pred_fallthru
          _
      $region28: #{tpu_custom_call.1} parent=5 // pred_fallthru
        _
      %p234 = scmp.le.s32.totalorder 1, %s18
      %p235 = scmp.lt.s32.totalorder %s18, 3
      %p236 = pnand %p234, %p235
      %p237 = pneg %p236
      // Predicated region
      $region37: #{tpu_custom_call.1} parent=5 // pred_check
        _
      $region38: #{tpu_custom_call.1} parent=5 // pred_check_branch
        %239 = sbr.rel (%p236) target = $region40
      $region39: #{tpu_custom_call.1} parent=5 // pred_region
        %s240 = ssub.s32 %s18, 1
        %s241 = sand.u32 %s31, 1
        %s242 = scalar_lea.sflag [#allocation3], %s241
        %s243 = sand.u32 %s31, 1
        %s244 = smul.addr %s243, 64
        %s245 = scalar_lea.vmem [#allocation2], %s244
        // Predicated region
        $region41: #{tpu_custom_call.1} parent=39 // pred_check
          %p246 = pneg %p44
        $region42: #{tpu_custom_call.1} parent=39 // pred_check_branch
          %248 = sbr.rel (%p246) target = $region44
        $region43: #{tpu_custom_call.1} parent=39 // pred_region
          %249 = dma.done %s242, 1024
        $region44: #{tpu_custom_call.1} parent=39 // pred_fallthru
          _
        // Predicated region
        $region45: #{tpu_custom_call.1} parent=39 // pred_check
          %p250 = pneg %p91
        $region46: #{tpu_custom_call.1} parent=39 // pred_check_branch
          %252 = sbr.rel (%p250) target = $region48
        $region47: #{tpu_custom_call.1} parent=39 // pred_region
          %253 = dma.done [#allocation6], 3072
        $region48: #{tpu_custom_call.1} parent=39 // pred_fallthru
          _
        // Predicated region
        $region49: #{tpu_custom_call.1} parent=39 // pred_check
          %p254 = pneg %p112
        $region50: #{tpu_custom_call.1} parent=39 // pred_check_branch
          %256 = sbr.rel (%p254) target = $region52
        $region51: #{tpu_custom_call.1} parent=39 // pred_region
          %257 = dma.done [#allocation6], 256
        $region52: #{tpu_custom_call.1} parent=39 // pred_fallthru
          _
        %s258 = sand.u32 %s31, 1
        %s259 = scalar_lea.sflag [#allocation3], %s258
        %s260 = sand.u32 %s31, 1
        %s261 = smul.addr %s260, 64
        %s262 = scalar_lea.vmem [#allocation2], %s261
        %p263 = pneg %p44
        %p264 = pneg %p41
        %p265 = scmp.lt.s32.totalorder %s23, 1
        %s266 = scalar_select %p265, %s23, 1
        %s267 = scalar_lea.vmem %s1, %s266
        %p268 = pneg %p70
        %p269 = pneg %p67
        %p270 = pneg %p91
        %p271 = pneg %p88
        %p272 = pneg %p112
        %p273 = pneg %p109
        %p274 = pneg %p133
        %p275 = pneg %p130
        %p276 = pneg %p159
        %p277 = pneg %p156
        %s278 = sand.u32 %s146, 1
        %s279 = scalar_lea.sflag [#allocation4], %s278
        %s280 = sand.u32 %s146, 1
        %s281 = smul.addr %s280, 128
        %s282 = scalar_lea.vmem [#allocation8], %s281
        %p283 = scmp.lt.s32.totalorder %s23, 1
        %s284 = scalar_select %p283, %s23, 1
        %s285 = scalar_lea.vmem %s1, %s284
        %v287 = vld [vmem:[%s245] sm:$0xf]
        %v288 = vld [vmem:[%s245 + $0x4] sm:$0xf]
        %v289 = vld [vmem:[%s245 + $0x8] sm:$0xf]
        %v290 = vld [vmem:[%s245 + $0xc] sm:$0xf]
        %v291 = vld [vmem:[%s245 + $0x10] sm:$0xf]
        %v292 = vld [vmem:[%s245 + $0x14] sm:$0xf]
        %v293 = vld [vmem:[%s245 + $0x18] sm:$0xf]
        %v294 = vld [vmem:[%s245 + $0x1c] sm:$0xf]
        %v295 = vld [vmem:[%s245 + $0x20] sm:$0xf]
        %v296 = vld [vmem:[%s245 + $0x24] sm:$0xf]
        %v297 = vld [vmem:[%s245 + $0x28] sm:$0xf]
        %v298 = vld [vmem:[%s245 + $0x2c] sm:$0xf]
        %v299 = vld [vmem:[%s245 + $0x30] sm:$0xf]
        %v300 = vld [vmem:[%s245 + $0x34] sm:$0xf]
        %v301 = vld [vmem:[%s245 + $0x38] sm:$0xf]
        %v302 = vld [vmem:[%s245 + $0x3c] sm:$0xf]
        %v303 = vld [vmem:[#allocation5] sm:$0xff]
        %v304 = vld [vmem:[#allocation5 + $0x8] sm:$0xf]
        %v305 = vld [vmem:[#allocation5 + $0xc] sm:$0xff]
        %v306 = vld [vmem:[#allocation5 + $0x14] sm:$0xf]
        %v307 = vld [vmem:[#allocation5 + $0x18] sm:$0xff]
        %v308 = vld [vmem:[#allocation5 + $0x20] sm:$0xf]
        %v309 = vld [vmem:[#allocation5 + $0x24] sm:$0xff]
        %v310 = vld [vmem:[#allocation5 + $0x2c] sm:$0xf]
        %v311 = vld [vmem:[#allocation5 + $0x30] sm:$0xff]
        %v312 = vld [vmem:[#allocation5 + $0x38] sm:$0xf]
        %v313 = vld [vmem:[#allocation5 + $0x3c] sm:$0xff]
        %v314 = vld [vmem:[#allocation5 + $0x44] sm:$0xf]
        %v315 = vld [vmem:[#allocation5 + $0x48] sm:$0xff]
        %v316 = vld [vmem:[#allocation5 + $0x50] sm:$0xf]
        %v317 = vld [vmem:[#allocation5 + $0x54] sm:$0xff]
        %v318 = vld [vmem:[#allocation5 + $0x5c] sm:$0xf]
        %v319 = vld [vmem:[#allocation5 + $0x60] sm:$0xff]
        %v320 = vld [vmem:[#allocation5 + $0x68] sm:$0xf]
        %v321 = vld [vmem:[#allocation5 + $0x6c] sm:$0xff]
        %v322 = vld [vmem:[#allocation5 + $0x74] sm:$0xf]
        %v323 = vld [vmem:[#allocation5 + $0x78] sm:$0xff]
        %v324 = vld [vmem:[#allocation5 + $0x80] sm:$0xf]
        %v325 = vld [vmem:[#allocation5 + $0x84] sm:$0xff]
        %v326 = vld [vmem:[#allocation5 + $0x8c] sm:$0xf]
        %v327 = vld [vmem:[#allocation5 + $0x90] sm:$0xff]
        %v328 = vld [vmem:[#allocation5 + $0x98] sm:$0xf]
        %v329 = vld [vmem:[#allocation5 + $0x9c] sm:$0xff]
        %v330 = vld [vmem:[#allocation5 + $0xa4] sm:$0xf]
        %v331 = vld [vmem:[#allocation5 + $0xa8] sm:$0xff]
        %v332 = vld [vmem:[#allocation5 + $0xb0] sm:$0xf]
        %v333 = vld [vmem:[#allocation5 + $0xb4] sm:$0xff]
        %v334 = vld [vmem:[#allocation5 + $0xbc] sm:$0xf]
        %v351 = vunpack.c.l.b16 %v287
        %v352 = vunpack.c.l.b16 %v288
        %v353 = vunpack.c.l.b16 %v289
        %v354 = vunpack.c.l.b16 %v290
        %v355 = vunpack.c.l.b16 %v291
        %v356 = vunpack.c.l.b16 %v292
        %v357 = vunpack.c.l.b16 %v293
        %v358 = vunpack.c.l.b16 %v294
        %v359 = vunpack.c.l.b16 %v295
        %v360 = vunpack.c.l.b16 %v296
        %v361 = vunpack.c.l.b16 %v297
        %v362 = vunpack.c.l.b16 %v298
        %v363 = vunpack.c.l.b16 %v299
        %v364 = vunpack.c.l.b16 %v300
        %v365 = vunpack.c.l.b16 %v301
        %v366 = vunpack.c.l.b16 %v302
        %v367 = vpack.c.b16 %v352, %v351
        %v368 = vpack.c.b16 %v354, %v353
        %v369 = vpack.c.b16 %v356, %v355
        %v370 = vpack.c.b16 %v358, %v357
        %v371 = vpack.c.b16 %v360, %v359
        %v372 = vpack.c.b16 %v362, %v361
        %v373 = vpack.c.b16 %v364, %v363
        %v374 = vpack.c.b16 %v366, %v365
        %v415 = vunpack.c.l.b16 %v303
        %v416 = vunpack.c.h.b16 %v303
        %v417 = vunpack.c.l.b16 %v304
        %v418 = vunpack.c.l.b16 %v305
        %v419 = vunpack.c.h.b16 %v305
        %v420 = vunpack.c.l.b16 %v306
        %v421 = vunpack.c.l.b16 %v307
        %v422 = vunpack.c.h.b16 %v307
        %v423 = vunpack.c.l.b16 %v308
        %v424 = vunpack.c.l.b16 %v309
        %v425 = vunpack.c.h.b16 %v309
        %v426 = vunpack.c.l.b16 %v310
        %v427 = vunpack.c.l.b16 %v311
        %v428 = vunpack.c.h.b16 %v311
        %v429 = vunpack.c.l.b16 %v312
        %v430 = vunpack.c.l.b16 %v313
        %v431 = vunpack.c.h.b16 %v313
        %v432 = vunpack.c.l.b16 %v314
        %v433 = vunpack.c.l.b16 %v315
        %v434 = vunpack.c.h.b16 %v315
        %v435 = vunpack.c.l.b16 %v316
        %v436 = vunpack.c.l.b16 %v317
        %v437 = vunpack.c.h.b16 %v317
        %v438 = vunpack.c.l.b16 %v318
        %v439 = vunpack.c.l.b16 %v319
        %v440 = vunpack.c.h.b16 %v319
        %v441 = vunpack.c.l.b16 %v320
        %v442 = vunpack.c.l.b16 %v321
        %v443 = vunpack.c.h.b16 %v321
        %v444 = vunpack.c.l.b16 %v322
        %v445 = vunpack.c.l.b16 %v323
        %v446 = vunpack.c.h.b16 %v323
        %v447 = vunpack.c.l.b16 %v324
        %v448 = vunpack.c.l.b16 %v325
        %v449 = vunpack.c.h.b16 %v325
        %v450 = vunpack.c.l.b16 %v326
        %v451 = vunpack.c.l.b16 %v327
        %v452 = vunpack.c.h.b16 %v327
        %v453 = vunpack.c.l.b16 %v328
        %v454 = vunpack.c.l.b16 %v329
        %v455 = vunpack.c.h.b16 %v329
        %v456 = vunpack.c.l.b16 %v330
        %v457 = vunpack.c.l.b16 %v331
        %v458 = vunpack.c.h.b16 %v331
        %v459 = vunpack.c.l.b16 %v332
        %v460 = vunpack.c.l.b16 %v333
        %v461 = vunpack.c.h.b16 %v333
        %v462 = vunpack.c.l.b16 %v334
        %v463 = vpack.c.b16 %v418, %v415
        %v464 = vpack.c.b16 %v419, %v416
        %v465 = vpack.c.b16 %v420, %v417
        %v466 = vpack.c.b16 %v424, %v421
        %v467 = vpack.c.b16 %v425, %v422
        %v468 = vpack.c.b16 %v426, %v423
        %v469 = vpack.c.b16 %v430, %v427
        %v470 = vpack.c.b16 %v431, %v428
        %v471 = vpack.c.b16 %v432, %v429
        %v472 = vpack.c.b16 %v436, %v433
        %v473 = vpack.c.b16 %v437, %v434
        %v474 = vpack.c.b16 %v438, %v435
        %v475 = vpack.c.b16 %v442, %v439
        %v476 = vpack.c.b16 %v443, %v440
        %v477 = vpack.c.b16 %v444, %v441
        %v478 = vpack.c.b16 %v448, %v445
        %v479 = vpack.c.b16 %v449, %v446
        %v480 = vpack.c.b16 %v450, %v447
        %v481 = vpack.c.b16 %v454, %v451
        %v482 = vpack.c.b16 %v455, %v452
        %v483 = vpack.c.b16 %v456, %v453
        %v484 = vpack.c.b16 %v460, %v457
        %v485 = vpack.c.b16 %v461, %v458
        %v486 = vpack.c.b16 %v462, %v459
        %511 = vmatprep.subr.bf16.mxu0 %v464
        %512 = vmatpush1.bf16.msra.mxu0 %v463
        %513 = vmatprep.subr.bf16.mxu0 %v467
        %514 = vmatpush1.bf16.msra.mxu0 %v466
        %515 = vmatprep.subr.bf16.mxu0 %v470
        %516 = vmatpush1.bf16.msra.mxu0 %v469
        %517 = vmatprep.subr.bf16.mxu0 %v473
        %518 = vmatpush1.bf16.msra.mxu0 %v472
        %519 = vmatprep.subr.bf16.mxu0 %v476
        %520 = vmatpush1.bf16.msra.mxu0 %v475
        %521 = vmatprep.subr.bf16.mxu0 %v479
        %522 = vmatpush1.bf16.msra.mxu0 %v478
        %523 = vmatprep.subr.bf16.mxu0 %v482
        %524 = vmatpush1.bf16.msra.mxu0 %v481
        %525 = vmatprep.subr.bf16.mxu0 %v485
        %526 = vmatpush1.bf16.msra.mxu0 %v484
        %527 = vmatprep.subr.bf16.mxu0 0
        %528 = vmatpush1.bf16.msra.mxu0 0
        %529 = vmatprep.subr.bf16.mxu0 0
        %530 = vmatpush1.bf16.msra.mxu0 0
        %531 = vmatprep.subr.bf16.mxu0 0
        %532 = vmatpush1.bf16.msra.mxu0 0
        %533 = vmatprep.subr.bf16.mxu0 0
        %534 = vmatpush1.bf16.msra.mxu0 0
        %535 = vmatprep.subr.bf16.mxu0 0
        %536 = vmatpush1.bf16.msra.mxu0 0
        %537 = vmatprep.subr.bf16.mxu0 0
        %538 = vmatpush1.bf16.msra.mxu0 0
        %539 = vmatprep.subr.bf16.mxu0 0
        %540 = vmatpush1.bf16.msra.mxu0 0
        %541 = vmatprep.subr.bf16.mxu0 0
        %542 = vmatpush1.bf16.msra.mxu0 0
        %543 = vmatprep.mubr.bf16.mxu0 0
        %544 = vmatmul.mubr.bf16.gmra.mrb[0].mxu0 %v367
        %v545 = vpop.f32.mrb[0].mxu0
        %v546 = vadd.f32 0.0, %v545
        %v547 = vpop.f32.mrb[0].mxu0
        %v548 = vadd.f32 0.0, %v547
        %v549 = vpop.f32.mrb[0].mxu0
        %v550 = vadd.f32 0.0, %v549
        %v551 = vpop.f32.mrb[0].mxu0
        %v552 = vadd.f32 0.0, %v551
        %553 = vmatprep.mubr.bf16.mxu0 0
        %554 = vmatmul.mubr.bf16.gmra.mrb[0].mxu0 %v368
        %v555 = vpop.f32.mrb[0].mxu0
        %v556 = vadd.f32 0.0, %v555
        %v557 = vpop.f32.mrb[0].mxu0
        %v558 = vadd.f32 0.0, %v557
        %v559 = vpop.f32.mrb[0].mxu0
        %v560 = vadd.f32 0.0, %v559
        %v561 = vpop.f32.mrb[0].mxu0
        %v562 = vadd.f32 0.0, %v561
        %563 = vmatprep.mubr.bf16.mxu0 0
        %564 = vmatmul.mubr.bf16.gmra.mrb[0].mxu0 %v369
        %v565 = vpop.f32.mrb[0].mxu0
        %v566 = vadd.f32 0.0, %v565
        %v567 = vpop.f32.mrb[0].mxu0
        %v568 = vadd.f32 0.0, %v567
        %v569 = vpop.f32.mrb[0].mxu0
        %v570 = vadd.f32 0.0, %v569
        %v571 = vpop.f32.mrb[0].mxu0
        %v572 = vadd.f32 0.0, %v571
        %573 = vmatprep.mubr.bf16.mxu0 0
        %574 = vmatmul.mubr.bf16.gmra.mrb[0].mxu0 %v370
        %v575 = vpop.f32.mrb[0].mxu0
        %v576 = vadd.f32 0.0, %v575
        %v577 = vpop.f32.mrb[0].mxu0
        %v578 = vadd.f32 0.0, %v577
        %v579 = vpop.f32.mrb[0].mxu0
        %v580 = vadd.f32 0.0, %v579
        %v581 = vpop.f32.mrb[0].mxu0
        %v582 = vadd.f32 0.0, %v581
        %583 = vmatprep.mubr.bf16.mxu0 0
        %584 = vmatmul.mubr.bf16.gmra.mrb[0].mxu0 %v371
        %v585 = vpop.f32.mrb[0].mxu0
        %v586 = vadd.f32 0.0, %v585
        %v587 = vpop.f32.mrb[0].mxu0
        %v588 = vadd.f32 0.0, %v587
        %v589 = vpop.f32.mrb[0].mxu0
        %v590 = vadd.f32 0.0, %v589
        %v591 = vpop.f32.mrb[0].mxu0
        %v592 = vadd.f32 0.0, %v591
        %593 = vmatprep.mubr.bf16.mxu0 0
        %594 = vmatmul.mubr.bf16.gmra.mrb[0].mxu0 %v372
        %v595 = vpop.f32.mrb[0].mxu0
        %v596 = vadd.f32 0.0, %v595
        %v597 = vpop.f32.mrb[0].mxu0
        %v598 = vadd.f32 0.0, %v597
        %v599 = vpop.f32.mrb[0].mxu0
        %v600 = vadd.f32 0.0, %v599
        %v601 = vpop.f32.mrb[0].mxu0
        %v602 = vadd.f32 0.0, %v601
        %603 = vmatprep.mubr.bf16.mxu0 0
        %604 = vmatmul.mubr.bf16.gmra.mrb[0].mxu0 %v373
        %v605 = vpop.f32.mrb[0].mxu0
        %v606 = vadd.f32 0.0, %v605
        %v607 = vpop.f32.mrb[0].mxu0
        %v608 = vadd.f32 0.0, %v607
        %v609 = vpop.f32.mrb[0].mxu0
        %v610 = vadd.f32 0.0, %v609
        %v611 = vpop.f32.mrb[0].mxu0
        %v612 = vadd.f32 0.0, %v611
        %613 = vmatprep.mubr.bf16.mxu0 0
        %614 = vmatmul.mubr.bf16.gmra.mrb[0].mxu0 %v374
        %v615 = vpop.f32.mrb[0].mxu0
        %v616 = vadd.f32 0.0, %v615
        %v617 = vpop.f32.mrb[0].mxu0
        %v618 = vadd.f32 0.0, %v617
        %v619 = vpop.f32.mrb[0].mxu0
        %v620 = vadd.f32 0.0, %v619
        %v621 = vpop.f32.mrb[0].mxu0
        %v622 = vadd.f32 0.0, %v621
        %623 = vdwg.mxu0
        %624 = vmatprep.subr.bf16.mxu0 0
        %625 = vmatpush1.bf16.msra.mxu0 %v465
        %626 = vmatprep.subr.bf16.mxu0 0
        %627 = vmatpush1.bf16.msra.mxu0 %v468
        %628 = vmatprep.subr.bf16.mxu0 0
        %629 = vmatpush1.bf16.msra.mxu0 %v471
        %630 = vmatprep.subr.bf16.mxu0 0
        %631 = vmatpush1.bf16.msra.mxu0 %v474
        %632 = vmatprep.subr.bf16.mxu0 0
        %633 = vmatpush1.bf16.msra.mxu0 %v477
        %634 = vmatprep.subr.bf16.mxu0 0
        %635 = vmatpush1.bf16.msra.mxu0 %v480
        %636 = vmatprep.subr.bf16.mxu0 0
        %637 = vmatpush1.bf16.msra.mxu0 %v483
        %638 = vmatprep.subr.bf16.mxu0 0
        %639 = vmatpush1.bf16.msra.mxu0 %v486
        %640 = vmatprep.subr.bf16.mxu0 0
        %641 = vmatpush1.bf16.msra.mxu0 0
        %642 = vmatprep.subr.bf16.mxu0 0
        %643 = vmatpush1.bf16.msra.mxu0 0
        %644 = vmatprep.subr.bf16.mxu0 0
        %645 = vmatpush1.bf16.msra.mxu0 0
        %646 = vmatprep.subr.bf16.mxu0 0
        %647 = vmatpush1.bf16.msra.mxu0 0
        %648 = vmatprep.subr.bf16.mxu0 0
        %649 = vmatpush1.bf16.msra.mxu0 0
        %650 = vmatprep.subr.bf16.mxu0 0
        %651 = vmatpush1.bf16.msra.mxu0 0
        %652 = vmatprep.subr.bf16.mxu0 0
        %653 = vmatpush1.bf16.msra.mxu0 0
        %654 = vmatprep.subr.bf16.mxu0 0
        %655 = vmatpush1.bf16.msra.mxu0 0
        %656 = vmatprep.mubr.bf16.mxu0 0
        %657 = vmatmul.mubr.bf16.gmra.mrb[0].mxu0 %v367
        %v658 = vpop.f32.mrb[0].mxu0
        %v659 = vadd.f32 0.0, %v658
        %v660 = vpop.f32.mrb[0].mxu0
        %v661 = vpop.f32.mrb[0].mxu0
        %v662 = vadd.f32 0.0, %v661
        %v663 = vpop.f32.mrb[0].mxu0
        %664 = vmatprep.mubr.bf16.mxu0 0
        %665 = vmatmul.mubr.bf16.gmra.mrb[0].mxu0 %v368
        %v666 = vpop.f32.mrb[0].mxu0
        %v667 = vadd.f32 0.0, %v666
        %v668 = vpop.f32.mrb[0].mxu0
        %v669 = vpop.f32.mrb[0].mxu0
        %v670 = vadd.f32 0.0, %v669
        %v671 = vpop.f32.mrb[0].mxu0
        %672 = vmatprep.mubr.bf16.mxu0 0
        %673 = vmatmul.mubr.bf16.gmra.mrb[0].mxu0 %v369
        %v674 = vpop.f32.mrb[0].mxu0
        %v675 = vadd.f32 0.0, %v674
        %v676 = vpop.f32.mrb[0].mxu0
        %v677 = vpop.f32.mrb[0].mxu0
        %v678 = vadd.f32 0.0, %v677
        %v679 = vpop.f32.mrb[0].mxu0
        %680 = vmatprep.mubr.bf16.mxu0 0
        %681 = vmatmul.mubr.bf16.gmra.mrb[0].mxu0 %v370
        %v682 = vpop.f32.mrb[0].mxu0
        %v683 = vadd.f32 0.0, %v682
        %v684 = vpop.f32.mrb[0].mxu0
        %v685 = vpop.f32.mrb[0].mxu0
        %v686 = vadd.f32 0.0, %v685
        %v687 = vpop.f32.mrb[0].mxu0
        %688 = vmatprep.mubr.bf16.mxu0 0
        %689 = vmatmul.mubr.bf16.gmra.mrb[0].mxu0 %v371
        %v690 = vpop.f32.mrb[0].mxu0
        %v691 = vadd.f32 0.0, %v690
        %v692 = vpop.f32.mrb[0].mxu0
        %v693 = vpop.f32.mrb[0].mxu0
        %v694 = vadd.f32 0.0, %v693
        %v695 = vpop.f32.mrb[0].mxu0
        %696 = vmatprep.mubr.bf16.mxu0 0
        %697 = vmatmul.mubr.bf16.gmra.mrb[0].mxu0 %v372
        %v698 = vpop.f32.mrb[0].mxu0
        %v699 = vadd.f32 0.0, %v698
        %v700 = vpop.f32.mrb[0].mxu0
        %v701 = vpop.f32.mrb[0].mxu0
        %v702 = vadd.f32 0.0, %v701
        %v703 = vpop.f32.mrb[0].mxu0
        %704 = vmatprep.mubr.bf16.mxu0 0
        %705 = vmatmul.mubr.bf16.gmra.mrb[0].mxu0 %v373
        %v706 = vpop.f32.mrb[0].mxu0
        %v707 = vadd.f32 0.0, %v706
        %v708 = vpop.f32.mrb[0].mxu0
        %v709 = vpop.f32.mrb[0].mxu0
        %v710 = vadd.f32 0.0, %v709
        %v711 = vpop.f32.mrb[0].mxu0
        %712 = vmatprep.mubr.bf16.mxu0 0
        %713 = vmatmul.mubr.bf16.gmra.mrb[0].mxu0 %v374
        %v714 = vpop.f32.mrb[0].mxu0
        %v715 = vadd.f32 0.0, %v714
        %v716 = vpop.f32.mrb[0].mxu0
        %v717 = vpop.f32.mrb[0].mxu0
        %v718 = vadd.f32 0.0, %v717
        %v719 = vpop.f32.mrb[0].mxu0
        %720 = vdwg.mxu0
        %v721 = vpack.c.bf16 %v550, %v546
        %v722 = vpack.c.bf16 %v552, %v548
        %v723 = vpack.c.bf16 %v662, %v659
        %v724 = vpack.c.bf16 %v560, %v556
        %v725 = vpack.c.bf16 %v562, %v558
        %v726 = vpack.c.bf16 %v670, %v667
        %v727 = vpack.c.bf16 %v570, %v566
        %v728 = vpack.c.bf16 %v572, %v568
        %v729 = vpack.c.bf16 %v678, %v675
        %v730 = vpack.c.bf16 %v580, %v576
        %v731 = vpack.c.bf16 %v582, %v578
        %v732 = vpack.c.bf16 %v686, %v683
        %v733 = vpack.c.bf16 %v590, %v586
        %v734 = vpack.c.bf16 %v592, %v588
        %v735 = vpack.c.bf16 %v694, %v691
        %v736 = vpack.c.bf16 %v600, %v596
        %v737 = vpack.c.bf16 %v602, %v598
        %v738 = vpack.c.bf16 %v702, %v699
        %v739 = vpack.c.bf16 %v610, %v606
        %v740 = vpack.c.bf16 %v612, %v608
        %v741 = vpack.c.bf16 %v710, %v707
        %v742 = vpack.c.bf16 %v620, %v616
        %v743 = vpack.c.bf16 %v622, %v618
        %v744 = vpack.c.bf16 %v718, %v715
        %v745 = vld [vmem:[%s285] sm:$0x1]
        %vm746 = vcmp.ne.f32.partialorder %v745, 1.0
        %v747 = vsel %vm746, -10000.0, 0.0
        %v749 = vlaneseq
        %v750 = vshrl.u32 %v749, 7
        %v751 = vsub.s32 0, %v750
        %v752 = vrot.slane %v747, %v751
        %vm754 = vcmask 31744
        %v756 = vsel %vm754, %v721, 0
        %v759 = vsel %vm754, %v724, 0
        %v762 = vsel %vm754, %v727, 0
        %v765 = vsel %vm754, %v730, 0
        %v768 = vsel %vm754, %v733, 0
        %v771 = vsel %vm754, %v736, 0
        %v774 = vsel %vm754, %v739, 0
        %v777 = vsel %vm754, %v742, 0
        %v780 = vsel %vm754, %v722, 0
        %v783 = vsel %vm754, %v725, 0
        %v786 = vsel %vm754, %v728, 0
        %v789 = vsel %vm754, %v731, 0
        %v792 = vsel %vm754, %v734, 0
        %v795 = vsel %vm754, %v737, 0
        %v798 = vsel %vm754, %v740, 0
        %v801 = vsel %vm754, %v743, 0
        %803 = vmatprep.subr.bf16.mxu0 0
        %804 = vmatpush1.bf16.xpose.msra.mxu0 %v780
        %805 = vmatprep.subr.bf16.mxu0 0
        %806 = vmatpush1.bf16.xpose.msra.mxu0 %v783
        %807 = vmatprep.subr.bf16.mxu0 0
        %808 = vmatpush1.bf16.xpose.msra.mxu0 %v786
        %809 = vmatprep.subr.bf16.mxu0 0
        %810 = vmatpush1.bf16.xpose.msra.mxu0 %v789
        %811 = vmatprep.subr.bf16.mxu0 0
        %812 = vmatpush1.bf16.xpose.msra.mxu0 %v792
        %813 = vmatprep.subr.bf16.mxu0 0
        %814 = vmatpush1.bf16.xpose.msra.mxu0 %v795
        %815 = vmatprep.subr.bf16.mxu0 0
        %816 = vmatpush1.bf16.xpose.msra.mxu0 %v798
        %817 = vmatprep.subr.bf16.mxu0 0
        %818 = vmatpush1.bf16.xpose.msra.mxu0 %v801
        %819 = vmatprep.subr.bf16.mxu0 0
        %820 = vmatpush1.bf16.xpose.msra.mxu0 0
        %821 = vmatprep.subr.bf16.mxu0 0
        %822 = vmatpush1.bf16.xpose.msra.mxu0 0
        %823 = vmatprep.subr.bf16.mxu0 0
        %824 = vmatpush1.bf16.xpose.msra.mxu0 0
        %825 = vmatprep.subr.bf16.mxu0 0
        %826 = vmatpush1.bf16.xpose.msra.mxu0 0
        %827 = vmatprep.subr.bf16.mxu0 0
        %828 = vmatpush1.bf16.xpose.msra.mxu0 0
        %829 = vmatprep.subr.bf16.mxu0 0
        %830 = vmatpush1.bf16.xpose.msra.mxu0 0
        %831 = vmatprep.subr.bf16.mxu0 0
        %832 = vmatpush1.bf16.xpose.msra.mxu0 0
        %833 = vmatprep.subr.bf16.mxu0 0
        %834 = vmatpush1.bf16.xpose.msra.mxu0 0
        %835 = vmatprep.mubr.bf16.mxu0 0
        %836 = vmatmul.mubr.bf16.gmra.mrb[0].mxu0 %v756
        %v837 = vpop.f32.mrb[0].mxu0
        %v838 = vadd.f32 %v752, %v837
        %v839 = vpop.f32.mrb[0].mxu0
        %v840 = vpop.f32.mrb[0].mxu0
        %v841 = vadd.f32 %v752, %v840
        %v842 = vpop.f32.mrb[0].mxu0
        %843 = vmatprep.mubr.bf16.mxu0 0
        %844 = vmatmul.mubr.bf16.gmra.mrb[0].mxu0 %v759
        %v845 = vpop.f32.mrb[0].mxu0
        %v846 = vadd.f32 %v752, %v845
        %v847 = vpop.f32.mrb[0].mxu0
        %v848 = vpop.f32.mrb[0].mxu0
        %v849 = vadd.f32 %v752, %v848
        %v850 = vpop.f32.mrb[0].mxu0
        %851 = vmatprep.mubr.bf16.mxu0 0
        %852 = vmatmul.mubr.bf16.gmra.mrb[0].mxu0 %v762
        %v853 = vpop.f32.mrb[0].mxu0
        %v854 = vadd.f32 %v752, %v853
        %v855 = vpop.f32.mrb[0].mxu0
        %v856 = vpop.f32.mrb[0].mxu0
        %v857 = vadd.f32 %v752, %v856
        %v858 = vpop.f32.mrb[0].mxu0
        %859 = vmatprep.mubr.bf16.mxu0 0
        %860 = vmatmul.mubr.bf16.gmra.mrb[0].mxu0 %v765
        %v861 = vpop.f32.mrb[0].mxu0
        %v862 = vadd.f32 %v752, %v861
        %v863 = vpop.f32.mrb[0].mxu0
        %v864 = vpop.f32.mrb[0].mxu0
        %v865 = vadd.f32 %v752, %v864
        %v866 = vpop.f32.mrb[0].mxu0
        %867 = vmatprep.mubr.bf16.mxu0 0
        %868 = vmatmul.mubr.bf16.gmra.mrb[0].mxu0 %v768
        %v869 = vpop.f32.mrb[0].mxu0
        %v870 = vadd.f32 %v752, %v869
        %v871 = vpop.f32.mrb[0].mxu0
        %v872 = vpop.f32.mrb[0].mxu0
        %v873 = vadd.f32 %v752, %v872
        %v874 = vpop.f32.mrb[0].mxu0
        %875 = vmatprep.mubr.bf16.mxu0 0
        %876 = vmatmul.mubr.bf16.gmra.mrb[0].mxu0 %v771
        %v877 = vpop.f32.mrb[0].mxu0
        %v878 = vadd.f32 %v752, %v877
        %v879 = vpop.f32.mrb[0].mxu0
        %v880 = vpop.f32.mrb[0].mxu0
        %v881 = vadd.f32 %v752, %v880
        %v882 = vpop.f32.mrb[0].mxu0
        %883 = vmatprep.mubr.bf16.mxu0 0
        %884 = vmatmul.mubr.bf16.gmra.mrb[0].mxu0 %v774
        %v885 = vpop.f32.mrb[0].mxu0
        %v886 = vadd.f32 %v752, %v885
        %v887 = vpop.f32.mrb[0].mxu0
        %v888 = vpop.f32.mrb[0].mxu0
        %v889 = vadd.f32 %v752, %v888
        %v890 = vpop.f32.mrb[0].mxu0
        %891 = vmatprep.mubr.bf16.mxu0 0
        %892 = vmatmul.mubr.bf16.gmra.mrb[0].mxu0 %v777
        %v893 = vpop.f32.mrb[0].mxu0
        %v894 = vadd.f32 %v752, %v893
        %v895 = vpop.f32.mrb[0].mxu0
        %v896 = vpop.f32.mrb[0].mxu0
        %v897 = vadd.f32 %v752, %v896
        %v898 = vpop.f32.mrb[0].mxu0
        %899 = vdwg.mxu0
        %900 = vmax.xlane.f32.xlu0 %v838
        %v901 = vpop.xlane.xlu0 %900
        %902 = vmax.xlane.f32.xlu0 %v841
        %v903 = vpop.xlane.xlu0 %902
        %904 = vmax.xlane.f32.xlu0 %v846
        %v905 = vpop.xlane.xlu0 %904
        %906 = vmax.xlane.f32.xlu0 %v849
        %v907 = vpop.xlane.xlu0 %906
        %908 = vmax.xlane.f32.xlu0 %v854
        %v909 = vpop.xlane.xlu0 %908
        %910 = vmax.xlane.f32.xlu0 %v857
        %v911 = vpop.xlane.xlu0 %910
        %912 = vmax.xlane.f32.xlu0 %v862
        %v913 = vpop.xlane.xlu0 %912
        %914 = vmax.xlane.f32.xlu0 %v865
        %v915 = vpop.xlane.xlu0 %914
        %916 = vmax.xlane.f32.xlu0 %v870
        %v917 = vpop.xlane.xlu0 %916
        %918 = vmax.xlane.f32.xlu0 %v873
        %v919 = vpop.xlane.xlu0 %918
        %920 = vmax.xlane.f32.xlu0 %v878
        %v921 = vpop.xlane.xlu0 %920
        %922 = vmax.xlane.f32.xlu0 %v881
        %v923 = vpop.xlane.xlu0 %922
        %924 = vmax.xlane.f32.xlu0 %v886
        %v925 = vpop.xlane.xlu0 %924
        %926 = vmax.xlane.f32.xlu0 %v889
        %v927 = vpop.xlane.xlu0 %926
        %928 = vmax.xlane.f32.xlu0 %v894
        %v929 = vpop.xlane.xlu0 %928
        %930 = vmax.xlane.f32.xlu0 %v897
        %v931 = vpop.xlane.xlu0 %930
        %v932 = vsub.f32 %v838, %v901
        %v933 = vsub.f32 %v841, %v903
        %v934 = vsub.f32 %v846, %v905
        %v935 = vsub.f32 %v849, %v907
        %v936 = vsub.f32 %v854, %v909
        %v937 = vsub.f32 %v857, %v911
        %v938 = vsub.f32 %v862, %v913
        %v939 = vsub.f32 %v865, %v915
        %v940 = vsub.f32 %v870, %v917
        %v941 = vsub.f32 %v873, %v919
        %v942 = vsub.f32 %v878, %v921
        %v943 = vsub.f32 %v881, %v923
        %v944 = vsub.f32 %v886, %v925
        %v945 = vsub.f32 %v889, %v927
        %v946 = vsub.f32 %v894, %v929
        %v947 = vsub.f32 %v897, %v931
        %v948 = vmul.f32 %v932, 1.442695
        %v949 = vpow.pop %v948
        %v950 = vmul.f32 %v933, 1.442695
        %v951 = vpow.pop %v950
        %v952 = vmul.f32 %v934, 1.442695
        %v953 = vpow.pop %v952
        %v954 = vmul.f32 %v935, 1.442695
        %v955 = vpow.pop %v954
        %v956 = vmul.f32 %v936, 1.442695
        %v957 = vpow.pop %v956
        %v958 = vmul.f32 %v937, 1.442695
        %v959 = vpow.pop %v958
        %v960 = vmul.f32 %v938, 1.442695
        %v961 = vpow.pop %v960
        %v962 = vmul.f32 %v939, 1.442695
        %v963 = vpow.pop %v962
        %v964 = vmul.f32 %v940, 1.442695
        %v965 = vpow.pop %v964
        %v966 = vmul.f32 %v941, 1.442695
        %v967 = vpow.pop %v966
        %v968 = vmul.f32 %v942, 1.442695
        %v969 = vpow.pop %v968
        %v970 = vmul.f32 %v943, 1.442695
        %v971 = vpow.pop %v970
        %v972 = vmul.f32 %v944, 1.442695
        %v973 = vpow.pop %v972
        %v974 = vmul.f32 %v945, 1.442695
        %v975 = vpow.pop %v974
        %v976 = vmul.f32 %v946, 1.442695
        %v977 = vpow.pop %v976
        %v978 = vmul.f32 %v947, 1.442695
        %v979 = vpow.pop %v978
        %980 = vadd.xlane.f32.xlu0 %v949
        %v981 = vpop.xlane.xlu0 %980
        %982 = vadd.xlane.f32.xlu0 %v951
        %v983 = vpop.xlane.xlu0 %982
        %984 = vadd.xlane.f32.xlu0 %v953
        %v985 = vpop.xlane.xlu0 %984
        %986 = vadd.xlane.f32.xlu0 %v955
        %v987 = vpop.xlane.xlu0 %986
        %988 = vadd.xlane.f32.xlu0 %v957
        %v989 = vpop.xlane.xlu0 %988
        %990 = vadd.xlane.f32.xlu0 %v959
        %v991 = vpop.xlane.xlu0 %990
        %992 = vadd.xlane.f32.xlu0 %v961
        %v993 = vpop.xlane.xlu0 %992
        %994 = vadd.xlane.f32.xlu0 %v963
        %v995 = vpop.xlane.xlu0 %994
        %996 = vadd.xlane.f32.xlu0 %v965
        %v997 = vpop.xlane.xlu0 %996
        %998 = vadd.xlane.f32.xlu0 %v967
        %v999 = vpop.xlane.xlu0 %998
        %1000 = vadd.xlane.f32.xlu0 %v969
        %v1001 = vpop.xlane.xlu0 %1000
        %1002 = vadd.xlane.f32.xlu0 %v971
        %v1003 = vpop.xlane.xlu0 %1002
        %1004 = vadd.xlane.f32.xlu0 %v973
        %v1005 = vpop.xlane.xlu0 %1004
        %1006 = vadd.xlane.f32.xlu0 %v975
        %v1007 = vpop.xlane.xlu0 %1006
        %1008 = vadd.xlane.f32.xlu0 %v977
        %v1009 = vpop.xlane.xlu0 %1008
        %1010 = vadd.xlane.f32.xlu0 %v979
        %v1011 = vpop.xlane.xlu0 %1010
        %v1012 = vpack.c.bf16 %v951, %v949
        %v1013 = vpack.c.bf16 %v955, %v953
        %v1014 = vpack.c.bf16 %v959, %v957
        %v1015 = vpack.c.bf16 %v963, %v961
        %v1016 = vpack.c.bf16 %v967, %v965
        %v1017 = vpack.c.bf16 %v971, %v969
        %v1018 = vpack.c.bf16 %v975, %v973
        %v1019 = vpack.c.bf16 %v979, %v977
        %1020 = vmatprep.subr.bf16.mxu0 0
        %1021 = vmatpush1.bf16.msra.mxu0 %v723
        %1022 = vmatprep.subr.bf16.mxu0 0
        %1023 = vmatpush1.bf16.msra.mxu0 %v726
        %1024 = vmatprep.subr.bf16.mxu0 0
        %1025 = vmatpush1.bf16.msra.mxu0 %v729
        %1026 = vmatprep.subr.bf16.mxu0 0
        %1027 = vmatpush1.bf16.msra.mxu0 %v732
        %1028 = vmatprep.subr.bf16.mxu0 0
        %1029 = vmatpush1.bf16.msra.mxu0 %v735
        %1030 = vmatprep.subr.bf16.mxu0 0
        %1031 = vmatpush1.bf16.msra.mxu0 %v738
        %1032 = vmatprep.subr.bf16.mxu0 0
        %1033 = vmatpush1.bf16.msra.mxu0 %v741
        %1034 = vmatprep.subr.bf16.mxu0 0
        %1035 = vmatpush1.bf16.msra.mxu0 %v744
        %1036 = vmatprep.subr.bf16.mxu0 0
        %1037 = vmatpush1.bf16.msra.mxu0 0
        %1038 = vmatprep.subr.bf16.mxu0 0
        %1039 = vmatpush1.bf16.msra.mxu0 0
        %1040 = vmatprep.subr.bf16.mxu0 0
        %1041 = vmatpush1.bf16.msra.mxu0 0
        %1042 = vmatprep.subr.bf16.mxu0 0
        %1043 = vmatpush1.bf16.msra.mxu0 0
        %1044 = vmatprep.subr.bf16.mxu0 0
        %1045 = vmatpush1.bf16.msra.mxu0 0
        %1046 = vmatprep.subr.bf16.mxu0 0
        %1047 = vmatpush1.bf16.msra.mxu0 0
        %1048 = vmatprep.subr.bf16.mxu0 0
        %1049 = vmatpush1.bf16.msra.mxu0 0
        %1050 = vmatprep.subr.bf16.mxu0 0
        %1051 = vmatpush1.bf16.msra.mxu0 0
        %1052 = vmatprep.mubr.bf16.mxu0 0
        %1053 = vmatmul.mubr.bf16.gmra.mrb[0].mxu0 %v1012
        %v1054 = vpop.f32.mrb[0].mxu0
        %v1055 = vadd.f32 0.0, %v1054
        %v1056 = vpop.f32.mrb[0].mxu0
        %v1057 = vpop.f32.mrb[0].mxu0
        %v1058 = vadd.f32 0.0, %v1057
        %v1059 = vpop.f32.mrb[0].mxu0
        %1060 = vmatprep.mubr.bf16.mxu0 0
        %1061 = vmatmul.mubr.bf16.gmra.mrb[0].mxu0 %v1013
        %v1062 = vpop.f32.mrb[0].mxu0
        %v1063 = vadd.f32 0.0, %v1062
        %v1064 = vpop.f32.mrb[0].mxu0
        %v1065 = vpop.f32.mrb[0].mxu0
        %v1066 = vadd.f32 0.0, %v1065
        %v1067 = vpop.f32.mrb[0].mxu0
        %1068 = vmatprep.mubr.bf16.mxu0 0
        %1069 = vmatmul.mubr.bf16.gmra.mrb[0].mxu0 %v1014
        %v1070 = vpop.f32.mrb[0].mxu0
        %v1071 = vadd.f32 0.0, %v1070
        %v1072 = vpop.f32.mrb[0].mxu0
        %v1073 = vpop.f32.mrb[0].mxu0
        %v1074 = vadd.f32 0.0, %v1073
        %v1075 = vpop.f32.mrb[0].mxu0
        %1076 = vmatprep.mubr.bf16.mxu0 0
        %1077 = vmatmul.mubr.bf16.gmra.mrb[0].mxu0 %v1015
        %v1078 = vpop.f32.mrb[0].mxu0
        %v1079 = vadd.f32 0.0, %v1078
        %v1080 = vpop.f32.mrb[0].mxu0
        %v1081 = vpop.f32.mrb[0].mxu0
        %v1082 = vadd.f32 0.0, %v1081
        %v1083 = vpop.f32.mrb[0].mxu0
        %1084 = vmatprep.mubr.bf16.mxu0 0
        %1085 = vmatmul.mubr.bf16.gmra.mrb[0].mxu0 %v1016
        %v1086 = vpop.f32.mrb[0].mxu0
        %v1087 = vadd.f32 0.0, %v1086
        %v1088 = vpop.f32.mrb[0].mxu0
        %v1089 = vpop.f32.mrb[0].mxu0
        %v1090 = vadd.f32 0.0, %v1089
        %v1091 = vpop.f32.mrb[0].mxu0
        %1092 = vmatprep.mubr.bf16.mxu0 0
        %1093 = vmatmul.mubr.bf16.gmra.mrb[0].mxu0 %v1017
        %v1094 = vpop.f32.mrb[0].mxu0
        %v1095 = vadd.f32 0.0, %v1094
        %v1096 = vpop.f32.mrb[0].mxu0
        %v1097 = vpop.f32.mrb[0].mxu0
        %v1098 = vadd.f32 0.0, %v1097
        %v1099 = vpop.f32.mrb[0].mxu0
        %1100 = vmatprep.mubr.bf16.mxu0 0
        %1101 = vmatmul.mubr.bf16.gmra.mrb[0].mxu0 %v1018
        %v1102 = vpop.f32.mrb[0].mxu0
        %v1103 = vadd.f32 0.0, %v1102
        %v1104 = vpop.f32.mrb[0].mxu0
        %v1105 = vpop.f32.mrb[0].mxu0
        %v1106 = vadd.f32 0.0, %v1105
        %v1107 = vpop.f32.mrb[0].mxu0
        %1108 = vmatprep.mubr.bf16.mxu0 0
        %1109 = vmatmul.mubr.bf16.gmra.mrb[0].mxu0 %v1019
        %v1110 = vpop.f32.mrb[0].mxu0
        %v1111 = vadd.f32 0.0, %v1110
        %v1112 = vpop.f32.mrb[0].mxu0
        %v1113 = vpop.f32.mrb[0].mxu0
        %v1114 = vadd.f32 0.0, %v1113
        %v1115 = vpop.f32.mrb[0].mxu0
        %1116 = vdwg.mxu0
        %v1117 = vrcp.pop %v981
        %v1118 = vrcp.pop %v983
        %v1119 = vrcp.pop %v985
        %v1120 = vrcp.pop %v987
        %v1121 = vrcp.pop %v989
        %v1122 = vrcp.pop %v991
        %v1123 = vrcp.pop %v993
        %v1124 = vrcp.pop %v995
        %v1125 = vrcp.pop %v997
        %v1126 = vrcp.pop %v999
        %v1127 = vrcp.pop %v1001
        %v1128 = vrcp.pop %v1003
        %v1129 = vrcp.pop %v1005
        %v1130 = vrcp.pop %v1007
        %v1131 = vrcp.pop %v1009
        %v1132 = vrcp.pop %v1011
        %v1133 = vmul.f32 %v1055, %v1117
        %v1134 = vmul.f32 %v1058, %v1118
        %v1135 = vmul.f32 %v1063, %v1119
        %v1136 = vmul.f32 %v1066, %v1120
        %v1137 = vmul.f32 %v1071, %v1121
        %v1138 = vmul.f32 %v1074, %v1122
        %v1139 = vmul.f32 %v1079, %v1123
        %v1140 = vmul.f32 %v1082, %v1124
        %v1141 = vmul.f32 %v1087, %v1125
        %v1142 = vmul.f32 %v1090, %v1126
        %v1143 = vmul.f32 %v1095, %v1127
        %v1144 = vmul.f32 %v1098, %v1128
        %v1145 = vmul.f32 %v1103, %v1129
        %v1146 = vmul.f32 %v1106, %v1130
        %v1147 = vmul.f32 %v1111, %v1131
        %v1148 = vmul.f32 %v1114, %v1132
        %v1149 = vpack.c.bf16 %v1134, %v1133
        %v1150 = vpack.c.bf16 %v1136, %v1135
        %v1151 = vpack.c.bf16 %v1138, %v1137
        %v1152 = vpack.c.bf16 %v1140, %v1139
        %v1153 = vpack.c.bf16 %v1142, %v1141
        %v1154 = vpack.c.bf16 %v1144, %v1143
        %v1155 = vpack.c.bf16 %v1146, %v1145
        %v1156 = vpack.c.bf16 %v1148, %v1147
        %1165 = vrot.lane.b32.xlu0 %v721, 124
        %v1166 = vpop.permute.xlu0 %1165
        %1167 = vrot.lane.b32.xlu0 %v724, 124
        %v1168 = vpop.permute.xlu0 %1167
        %1169 = vrot.lane.b32.xlu0 %v727, 124
        %v1170 = vpop.permute.xlu0 %1169
        %1171 = vrot.lane.b32.xlu0 %v730, 124
        %v1172 = vpop.permute.xlu0 %1171
        %1173 = vrot.lane.b32.xlu0 %v733, 124
        %v1174 = vpop.permute.xlu0 %1173
        %1175 = vrot.lane.b32.xlu0 %v736, 124
        %v1176 = vpop.permute.xlu0 %1175
        %1177 = vrot.lane.b32.xlu0 %v739, 124
        %v1178 = vpop.permute.xlu0 %1177
        %1179 = vrot.lane.b32.xlu0 %v742, 124
        %v1180 = vpop.permute.xlu0 %1179
        %1189 = vrot.lane.b32.xlu0 %v722, 124
        %v1190 = vpop.permute.xlu0 %1189
        %1191 = vrot.lane.b32.xlu0 %v725, 124
        %v1192 = vpop.permute.xlu0 %1191
        %1193 = vrot.lane.b32.xlu0 %v728, 124
        %v1194 = vpop.permute.xlu0 %1193
        %1195 = vrot.lane.b32.xlu0 %v731, 124
        %v1196 = vpop.permute.xlu0 %1195
        %1197 = vrot.lane.b32.xlu0 %v734, 124
        %v1198 = vpop.permute.xlu0 %1197
        %1199 = vrot.lane.b32.xlu0 %v737, 124
        %v1200 = vpop.permute.xlu0 %1199
        %1201 = vrot.lane.b32.xlu0 %v740, 124
        %v1202 = vpop.permute.xlu0 %1201
        %1203 = vrot.lane.b32.xlu0 %v743, 124
        %v1204 = vpop.permute.xlu0 %1203
        %v1206 = vsel %vm754, %v1166, 0
        %v1209 = vsel %vm754, %v1168, 0
        %v1212 = vsel %vm754, %v1170, 0
        %v1215 = vsel %vm754, %v1172, 0
        %v1218 = vsel %vm754, %v1174, 0
        %v1221 = vsel %vm754, %v1176, 0
        %v1224 = vsel %vm754, %v1178, 0
        %v1227 = vsel %vm754, %v1180, 0
        %v1230 = vsel %vm754, %v1190, 0
        %v1233 = vsel %vm754, %v1192, 0
        %v1236 = vsel %vm754, %v1194, 0
        %v1239 = vsel %vm754, %v1196, 0
        %v1242 = vsel %vm754, %v1198, 0
        %v1245 = vsel %vm754, %v1200, 0
        %v1248 = vsel %vm754, %v1202, 0
        %v1251 = vsel %vm754, %v1204, 0
        %1253 = vmatprep.subr.bf16.mxu0 0
        %1254 = vmatpush1.bf16.xpose.msra.mxu0 %v1230
        %1255 = vmatprep.subr.bf16.mxu0 0
        %1256 = vmatpush1.bf16.xpose.msra.mxu0 %v1233
        %1257 = vmatprep.subr.bf16.mxu0 0
        %1258 = vmatpush1.bf16.xpose.msra.mxu0 %v1236
        %1259 = vmatprep.subr.bf16.mxu0 0
        %1260 = vmatpush1.bf16.xpose.msra.mxu0 %v1239
        %1261 = vmatprep.subr.bf16.mxu0 0
        %1262 = vmatpush1.bf16.xpose.msra.mxu0 %v1242
        %1263 = vmatprep.subr.bf16.mxu0 0
        %1264 = vmatpush1.bf16.xpose.msra.mxu0 %v1245
        %1265 = vmatprep.subr.bf16.mxu0 0
        %1266 = vmatpush1.bf16.xpose.msra.mxu0 %v1248
        %1267 = vmatprep.subr.bf16.mxu0 0
        %1268 = vmatpush1.bf16.xpose.msra.mxu0 %v1251
        %1269 = vmatprep.subr.bf16.mxu0 0
        %1270 = vmatpush1.bf16.xpose.msra.mxu0 0
        %1271 = vmatprep.subr.bf16.mxu0 0
        %1272 = vmatpush1.bf16.xpose.msra.mxu0 0
        %1273 = vmatprep.subr.bf16.mxu0 0
        %1274 = vmatpush1.bf16.xpose.msra.mxu0 0
        %1275 = vmatprep.subr.bf16.mxu0 0
        %1276 = vmatpush1.bf16.xpose.msra.mxu0 0
        %1277 = vmatprep.subr.bf16.mxu0 0
        %1278 = vmatpush1.bf16.xpose.msra.mxu0 0
        %1279 = vmatprep.subr.bf16.mxu0 0
        %1280 = vmatpush1.bf16.xpose.msra.mxu0 0
        %1281 = vmatprep.subr.bf16.mxu0 0
        %1282 = vmatpush1.bf16.xpose.msra.mxu0 0
        %1283 = vmatprep.subr.bf16.mxu0 0
        %1284 = vmatpush1.bf16.xpose.msra.mxu0 0
        %1285 = vmatprep.mubr.bf16.mxu0 0
        %1286 = vmatmul.mubr.bf16.gmra.mrb[0].mxu0 %v1206
        %v1287 = vpop.f32.mrb[0].mxu0
        %v1288 = vadd.f32 %v752, %v1287
        %v1289 = vpop.f32.mrb[0].mxu0
        %v1290 = vpop.f32.mrb[0].mxu0
        %v1291 = vadd.f32 %v752, %v1290
        %v1292 = vpop.f32.mrb[0].mxu0
        %1293 = vmatprep.mubr.bf16.mxu0 0
        %1294 = vmatmul.mubr.bf16.gmra.mrb[0].mxu0 %v1209
        %v1295 = vpop.f32.mrb[0].mxu0
        %v1296 = vadd.f32 %v752, %v1295
        %v1297 = vpop.f32.mrb[0].mxu0
        %v1298 = vpop.f32.mrb[0].mxu0
        %v1299 = vadd.f32 %v752, %v1298
        %v1300 = vpop.f32.mrb[0].mxu0
        %1301 = vmatprep.mubr.bf16.mxu0 0
        %1302 = vmatmul.mubr.bf16.gmra.mrb[0].mxu0 %v1212
        %v1303 = vpop.f32.mrb[0].mxu0
        %v1304 = vadd.f32 %v752, %v1303
        %v1305 = vpop.f32.mrb[0].mxu0
        %v1306 = vpop.f32.mrb[0].mxu0
        %v1307 = vadd.f32 %v752, %v1306
        %v1308 = vpop.f32.mrb[0].mxu0
        %1309 = vmatprep.mubr.bf16.mxu0 0
        %1310 = vmatmul.mubr.bf16.gmra.mrb[0].mxu0 %v1215
        %v1311 = vpop.f32.mrb[0].mxu0
        %v1312 = vadd.f32 %v752, %v1311
        %v1313 = vpop.f32.mrb[0].mxu0
        %v1314 = vpop.f32.mrb[0].mxu0
        %v1315 = vadd.f32 %v752, %v1314
        %v1316 = vpop.f32.mrb[0].mxu0
        %1317 = vmatprep.mubr.bf16.mxu0 0
        %1318 = vmatmul.mubr.bf16.gmra.mrb[0].mxu0 %v1218
        %v1319 = vpop.f32.mrb[0].mxu0
        %v1320 = vadd.f32 %v752, %v1319
        %v1321 = vpop.f32.mrb[0].mxu0
        %v1322 = vpop.f32.mrb[0].mxu0
        %v1323 = vadd.f32 %v752, %v1322
        %v1324 = vpop.f32.mrb[0].mxu0
        %1325 = vmatprep.mubr.bf16.mxu0 0
        %1326 = vmatmul.mubr.bf16.gmra.mrb[0].mxu0 %v1221
        %v1327 = vpop.f32.mrb[0].mxu0
        %v1328 = vadd.f32 %v752, %v1327
        %v1329 = vpop.f32.mrb[0].mxu0
        %v1330 = vpop.f32.mrb[0].mxu0
        %v1331 = vadd.f32 %v752, %v1330
        %v1332 = vpop.f32.mrb[0].mxu0
        %1333 = vmatprep.mubr.bf16.mxu0 0
        %1334 = vmatmul.mubr.bf16.gmra.mrb[0].mxu0 %v1224
        %v1335 = vpop.f32.mrb[0].mxu0
        %v1336 = vadd.f32 %v752, %v1335
        %v1337 = vpop.f32.mrb[0].mxu0
        %v1338 = vpop.f32.mrb[0].mxu0
        %v1339 = vadd.f32 %v752, %v1338
        %v1340 = vpop.f32.mrb[0].mxu0
        %1341 = vmatprep.mubr.bf16.mxu0 0
        %1342 = vmatmul.mubr.bf16.gmra.mrb[0].mxu0 %v1227
        %v1343 = vpop.f32.mrb[0].mxu0
        %v1344 = vadd.f32 %v752, %v1343
        %v1345 = vpop.f32.mrb[0].mxu0
        %v1346 = vpop.f32.mrb[0].mxu0
        %v1347 = vadd.f32 %v752, %v1346
        %v1348 = vpop.f32.mrb[0].mxu0
        %1349 = vdwg.mxu0
        %1350 = vmax.xlane.f32.xlu0 %v1288
        %v1351 = vpop.xlane.xlu0 %1350
        %1352 = vmax.xlane.f32.xlu0 %v1291
        %v1353 = vpop.xlane.xlu0 %1352
        %1354 = vmax.xlane.f32.xlu0 %v1296
        %v1355 = vpop.xlane.xlu0 %1354
        %1356 = vmax.xlane.f32.xlu0 %v1299
        %v1357 = vpop.xlane.xlu0 %1356
        %1358 = vmax.xlane.f32.xlu0 %v1304
        %v1359 = vpop.xlane.xlu0 %1358
        %1360 = vmax.xlane.f32.xlu0 %v1307
        %v1361 = vpop.xlane.xlu0 %1360
        %1362 = vmax.xlane.f32.xlu0 %v1312
        %v1363 = vpop.xlane.xlu0 %1362
        %1364 = vmax.xlane.f32.xlu0 %v1315
        %v1365 = vpop.xlane.xlu0 %1364
        %1366 = vmax.xlane.f32.xlu0 %v1320
        %v1367 = vpop.xlane.xlu0 %1366
        %1368 = vmax.xlane.f32.xlu0 %v1323
        %v1369 = vpop.xlane.xlu0 %1368
        %1370 = vmax.xlane.f32.xlu0 %v1328
        %v1371 = vpop.xlane.xlu0 %1370
        %1372 = vmax.xlane.f32.xlu0 %v1331
        %v1373 = vpop.xlane.xlu0 %1372
        %1374 = vmax.xlane.f32.xlu0 %v1336
        %v1375 = vpop.xlane.xlu0 %1374
        %1376 = vmax.xlane.f32.xlu0 %v1339
        %v1377 = vpop.xlane.xlu0 %1376
        %1378 = vmax.xlane.f32.xlu0 %v1344
        %v1379 = vpop.xlane.xlu0 %1378
        %1380 = vmax.xlane.f32.xlu0 %v1347
        %v1381 = vpop.xlane.xlu0 %1380
        %v1382 = vsub.f32 %v1288, %v1351
        %v1383 = vsub.f32 %v1291, %v1353
        %v1384 = vsub.f32 %v1296, %v1355
        %v1385 = vsub.f32 %v1299, %v1357
        %v1386 = vsub.f32 %v1304, %v1359
        %v1387 = vsub.f32 %v1307, %v1361
        %v1388 = vsub.f32 %v1312, %v1363
        %v1389 = vsub.f32 %v1315, %v1365
        %v1390 = vsub.f32 %v1320, %v1367
        %v1391 = vsub.f32 %v1323, %v1369
        %v1392 = vsub.f32 %v1328, %v1371
        %v1393 = vsub.f32 %v1331, %v1373
        %v1394 = vsub.f32 %v1336, %v1375
        %v1395 = vsub.f32 %v1339, %v1377
        %v1396 = vsub.f32 %v1344, %v1379
        %v1397 = vsub.f32 %v1347, %v1381
        %v1398 = vmul.f32 %v1382, 1.442695
        %v1399 = vpow.pop %v1398
        %v1400 = vmul.f32 %v1383, 1.442695
        %v1401 = vpow.pop %v1400
        %v1402 = vmul.f32 %v1384, 1.442695
        %v1403 = vpow.pop %v1402
        %v1404 = vmul.f32 %v1385, 1.442695
        %v1405 = vpow.pop %v1404
        %v1406 = vmul.f32 %v1386, 1.442695
        %v1407 = vpow.pop %v1406
        %v1408 = vmul.f32 %v1387, 1.442695
        %v1409 = vpow.pop %v1408
        %v1410 = vmul.f32 %v1388, 1.442695
        %v1411 = vpow.pop %v1410
        %v1412 = vmul.f32 %v1389, 1.442695
        %v1413 = vpow.pop %v1412
        %v1414 = vmul.f32 %v1390, 1.442695
        %v1415 = vpow.pop %v1414
        %v1416 = vmul.f32 %v1391, 1.442695
        %v1417 = vpow.pop %v1416
        %v1418 = vmul.f32 %v1392, 1.442695
        %v1419 = vpow.pop %v1418
        %v1420 = vmul.f32 %v1393, 1.442695
        %v1421 = vpow.pop %v1420
        %v1422 = vmul.f32 %v1394, 1.442695
        %v1423 = vpow.pop %v1422
        %v1424 = vmul.f32 %v1395, 1.442695
        %v1425 = vpow.pop %v1424
        %v1426 = vmul.f32 %v1396, 1.442695
        %v1427 = vpow.pop %v1426
        %v1428 = vmul.f32 %v1397, 1.442695
        %v1429 = vpow.pop %v1428
        %1430 = vadd.xlane.f32.xlu0 %v1399
        %v1431 = vpop.xlane.xlu0 %1430
        %1432 = vadd.xlane.f32.xlu0 %v1401
        %v1433 = vpop.xlane.xlu0 %1432
        %1434 = vadd.xlane.f32.xlu0 %v1403
        %v1435 = vpop.xlane.xlu0 %1434
        %1436 = vadd.xlane.f32.xlu0 %v1405
        %v1437 = vpop.xlane.xlu0 %1436
        %1438 = vadd.xlane.f32.xlu0 %v1407
        %v1439 = vpop.xlane.xlu0 %1438
        %1440 = vadd.xlane.f32.xlu0 %v1409
        %v1441 = vpop.xlane.xlu0 %1440
        %1442 = vadd.xlane.f32.xlu0 %v1411
        %v1443 = vpop.xlane.xlu0 %1442
        %1444 = vadd.xlane.f32.xlu0 %v1413
        %v1445 = vpop.xlane.xlu0 %1444
        %1446 = vadd.xlane.f32.xlu0 %v1415
        %v1447 = vpop.xlane.xlu0 %1446
        %1448 = vadd.xlane.f32.xlu0 %v1417
        %v1449 = vpop.xlane.xlu0 %1448
        %1450 = vadd.xlane.f32.xlu0 %v1419
        %v1451 = vpop.xlane.xlu0 %1450
        %1452 = vadd.xlane.f32.xlu0 %v1421
        %v1453 = vpop.xlane.xlu0 %1452
        %1454 = vadd.xlane.f32.xlu0 %v1423
        %v1455 = vpop.xlane.xlu0 %1454
        %1456 = vadd.xlane.f32.xlu0 %v1425
        %v1457 = vpop.xlane.xlu0 %1456
        %1458 = vadd.xlane.f32.xlu0 %v1427
        %v1459 = vpop.xlane.xlu0 %1458
        %1460 = vadd.xlane.f32.xlu0 %v1429
        %v1461 = vpop.xlane.xlu0 %1460
        %v1462 = vpack.c.bf16 %v1401, %v1399
        %v1463 = vpack.c.bf16 %v1405, %v1403
        %v1464 = vpack.c.bf16 %v1409, %v1407
        %v1465 = vpack.c.bf16 %v1413, %v1411
        %v1466 = vpack.c.bf16 %v1417, %v1415
        %v1467 = vpack.c.bf16 %v1421, %v1419
        %v1468 = vpack.c.bf16 %v1425, %v1423
        %v1469 = vpack.c.bf16 %v1429, %v1427
        %1478 = vrot.lane.b32.xlu0 %v723, 124
        %v1479 = vpop.permute.xlu0 %1478
        %1480 = vrot.lane.b32.xlu0 %v726, 124
        %v1481 = vpop.permute.xlu0 %1480
        %1482 = vrot.lane.b32.xlu0 %v729, 124
        %v1483 = vpop.permute.xlu0 %1482
        %1484 = vrot.lane.b32.xlu0 %v732, 124
        %v1485 = vpop.permute.xlu0 %1484
        %1486 = vrot.lane.b32.xlu0 %v735, 124
        %v1487 = vpop.permute.xlu0 %1486
        %1488 = vrot.lane.b32.xlu0 %v738, 124
        %v1489 = vpop.permute.xlu0 %1488
        %1490 = vrot.lane.b32.xlu0 %v741, 124
        %v1491 = vpop.permute.xlu0 %1490
        %1492 = vrot.lane.b32.xlu0 %v744, 124
        %v1493 = vpop.permute.xlu0 %1492
        %1502 = vmatprep.subr.bf16.mxu0 0
        %1503 = vmatpush1.bf16.msra.mxu0 %v1479
        %1504 = vmatprep.subr.bf16.mxu0 0
        %1505 = vmatpush1.bf16.msra.mxu0 %v1481
        %1506 = vmatprep.subr.bf16.mxu0 0
        %1507 = vmatpush1.bf16.msra.mxu0 %v1483
        %1508 = vmatprep.subr.bf16.mxu0 0
        %1509 = vmatpush1.bf16.msra.mxu0 %v1485
        %1510 = vmatprep.subr.bf16.mxu0 0
        %1511 = vmatpush1.bf16.msra.mxu0 %v1487
        %1512 = vmatprep.subr.bf16.mxu0 0
        %1513 = vmatpush1.bf16.msra.mxu0 %v1489
        %1514 = vmatprep.subr.bf16.mxu0 0
        %1515 = vmatpush1.bf16.msra.mxu0 %v1491
        %1516 = vmatprep.subr.bf16.mxu0 0
        %1517 = vmatpush1.bf16.msra.mxu0 %v1493
        %1518 = vmatprep.subr.bf16.mxu0 0
        %1519 = vmatpush1.bf16.msra.mxu0 0
        %1520 = vmatprep.subr.bf16.mxu0 0
        %1521 = vmatpush1.bf16.msra.mxu0 0
        %1522 = vmatprep.subr.bf16.mxu0 0
        %1523 = vmatpush1.bf16.msra.mxu0 0
        %1524 = vmatprep.subr.bf16.mxu0 0
        %1525 = vmatpush1.bf16.msra.mxu0 0
        %1526 = vmatprep.subr.bf16.mxu0 0
        %1527 = vmatpush1.bf16.msra.mxu0 0
        %1528 = vmatprep.subr.bf16.mxu0 0
        %1529 = vmatpush1.bf16.msra.mxu0 0
        %1530 = vmatprep.subr.bf16.mxu0 0
        %1531 = vmatpush1.bf16.msra.mxu0 0
        %1532 = vmatprep.subr.bf16.mxu0 0
        %1533 = vmatpush1.bf16.msra.mxu0 0
        %1534 = vmatprep.mubr.bf16.mxu0 0
        %1535 = vmatmul.mubr.bf16.gmra.mrb[0].mxu0 %v1462
        %v1536 = vpop.f32.mrb[0].mxu0
        %v1537 = vadd.f32 0.0, %v1536
        %v1538 = vpop.f32.mrb[0].mxu0
        %v1539 = vpop.f32.mrb[0].mxu0
        %v1540 = vadd.f32 0.0, %v1539
        %v1541 = vpop.f32.mrb[0].mxu0
        %1542 = vmatprep.mubr.bf16.mxu0 0
        %1543 = vmatmul.mubr.bf16.gmra.mrb[0].mxu0 %v1463
        %v1544 = vpop.f32.mrb[0].mxu0
        %v1545 = vadd.f32 0.0, %v1544
        %v1546 = vpop.f32.mrb[0].mxu0
        %v1547 = vpop.f32.mrb[0].mxu0
        %v1548 = vadd.f32 0.0, %v1547
        %v1549 = vpop.f32.mrb[0].mxu0
        %1550 = vmatprep.mubr.bf16.mxu0 0
        %1551 = vmatmul.mubr.bf16.gmra.mrb[0].mxu0 %v1464
        %v1552 = vpop.f32.mrb[0].mxu0
        %v1553 = vadd.f32 0.0, %v1552
        %v1554 = vpop.f32.mrb[0].mxu0
        %v1555 = vpop.f32.mrb[0].mxu0
        %v1556 = vadd.f32 0.0, %v1555
        %v1557 = vpop.f32.mrb[0].mxu0
        %1558 = vmatprep.mubr.bf16.mxu0 0
        %1559 = vmatmul.mubr.bf16.gmra.mrb[0].mxu0 %v1465
        %v1560 = vpop.f32.mrb[0].mxu0
        %v1561 = vadd.f32 0.0, %v1560
        %v1562 = vpop.f32.mrb[0].mxu0
        %v1563 = vpop.f32.mrb[0].mxu0
        %v1564 = vadd.f32 0.0, %v1563
        %v1565 = vpop.f32.mrb[0].mxu0
        %1566 = vmatprep.mubr.bf16.mxu0 0
        %1567 = vmatmul.mubr.bf16.gmra.mrb[0].mxu0 %v1466
        %v1568 = vpop.f32.mrb[0].mxu0
        %v1569 = vadd.f32 0.0, %v1568
        %v1570 = vpop.f32.mrb[0].mxu0
        %v1571 = vpop.f32.mrb[0].mxu0
        %v1572 = vadd.f32 0.0, %v1571
        %v1573 = vpop.f32.mrb[0].mxu0
        %1574 = vmatprep.mubr.bf16.mxu0 0
        %1575 = vmatmul.mubr.bf16.gmra.mrb[0].mxu0 %v1467
        %v1576 = vpop.f32.mrb[0].mxu0
        %v1577 = vadd.f32 0.0, %v1576
        %v1578 = vpop.f32.mrb[0].mxu0
        %v1579 = vpop.f32.mrb[0].mxu0
        %v1580 = vadd.f32 0.0, %v1579
        %v1581 = vpop.f32.mrb[0].mxu0
        %1582 = vmatprep.mubr.bf16.mxu0 0
        %1583 = vmatmul.mubr.bf16.gmra.mrb[0].mxu0 %v1468
        %v1584 = vpop.f32.mrb[0].mxu0
        %v1585 = vadd.f32 0.0, %v1584
        %v1586 = vpop.f32.mrb[0].mxu0
        %v1587 = vpop.f32.mrb[0].mxu0
        %v1588 = vadd.f32 0.0, %v1587
        %v1589 = vpop.f32.mrb[0].mxu0
        %1590 = vmatprep.mubr.bf16.mxu0 0
        %1591 = vmatmul.mubr.bf16.gmra.mrb[0].mxu0 %v1469
        %v1592 = vpop.f32.mrb[0].mxu0
        %v1593 = vadd.f32 0.0, %v1592
        %v1594 = vpop.f32.mrb[0].mxu0
        %v1595 = vpop.f32.mrb[0].mxu0
        %v1596 = vadd.f32 0.0, %v1595
        %v1597 = vpop.f32.mrb[0].mxu0
        %1598 = vdwg.mxu0
        %v1599 = vrcp.pop %v1431
        %v1600 = vrcp.pop %v1433
        %v1601 = vrcp.pop %v1435
        %v1602 = vrcp.pop %v1437
        %v1603 = vrcp.pop %v1439
        %v1604 = vrcp.pop %v1441
        %v1605 = vrcp.pop %v1443
        %v1606 = vrcp.pop %v1445
        %v1607 = vrcp.pop %v1447
        %v1608 = vrcp.pop %v1449
        %v1609 = vrcp.pop %v1451
        %v1610 = vrcp.pop %v1453
        %v1611 = vrcp.pop %v1455
        %v1612 = vrcp.pop %v1457
        %v1613 = vrcp.pop %v1459
        %v1614 = vrcp.pop %v1461
        %v1615 = vmul.f32 %v1537, %v1599
        %v1616 = vmul.f32 %v1540, %v1600
        %v1617 = vmul.f32 %v1545, %v1601
        %v1618 = vmul.f32 %v1548, %v1602
        %v1619 = vmul.f32 %v1553, %v1603
        %v1620 = vmul.f32 %v1556, %v1604
        %v1621 = vmul.f32 %v1561, %v1605
        %v1622 = vmul.f32 %v1564, %v1606
        %v1623 = vmul.f32 %v1569, %v1607
        %v1624 = vmul.f32 %v1572, %v1608
        %v1625 = vmul.f32 %v1577, %v1609
        %v1626 = vmul.f32 %v1580, %v1610
        %v1627 = vmul.f32 %v1585, %v1611
        %v1628 = vmul.f32 %v1588, %v1612
        %v1629 = vmul.f32 %v1593, %v1613
        %v1630 = vmul.f32 %v1596, %v1614
        %v1631 = vpack.c.bf16 %v1616, %v1615
        %v1632 = vpack.c.bf16 %v1618, %v1617
        %v1633 = vpack.c.bf16 %v1620, %v1619
        %v1634 = vpack.c.bf16 %v1622, %v1621
        %v1635 = vpack.c.bf16 %v1624, %v1623
        %v1636 = vpack.c.bf16 %v1626, %v1625
        %v1637 = vpack.c.bf16 %v1628, %v1627
        %v1638 = vpack.c.bf16 %v1630, %v1629
        %1639 = vrot.lane.b32.xlu0 %v721, 120
        %v1640 = vpop.permute.xlu0 %1639
        %1641 = vrot.lane.b32.xlu0 %v724, 120
        %v1642 = vpop.permute.xlu0 %1641
        %1643 = vrot.lane.b32.xlu0 %v727, 120
        %v1644 = vpop.permute.xlu0 %1643
        %1645 = vrot.lane.b32.xlu0 %v730, 120
        %v1646 = vpop.permute.xlu0 %1645
        %1647 = vrot.lane.b32.xlu0 %v733, 120
        %v1648 = vpop.permute.xlu0 %1647
        %1649 = vrot.lane.b32.xlu0 %v736, 120
        %v1650 = vpop.permute.xlu0 %1649
        %1651 = vrot.lane.b32.xlu0 %v739, 120
        %v1652 = vpop.permute.xlu0 %1651
        %1653 = vrot.lane.b32.xlu0 %v742, 120
        %v1654 = vpop.permute.xlu0 %1653
        %1655 = vrot.lane.b32.xlu0 %v722, 120
        %v1656 = vpop.permute.xlu0 %1655
        %1657 = vrot.lane.b32.xlu0 %v725, 120
        %v1658 = vpop.permute.xlu0 %1657
        %1659 = vrot.lane.b32.xlu0 %v728, 120
        %v1660 = vpop.permute.xlu0 %1659
        %1661 = vrot.lane.b32.xlu0 %v731, 120
        %v1662 = vpop.permute.xlu0 %1661
        %1663 = vrot.lane.b32.xlu0 %v734, 120
        %v1664 = vpop.permute.xlu0 %1663
        %1665 = vrot.lane.b32.xlu0 %v737, 120
        %v1666 = vpop.permute.xlu0 %1665
        %1667 = vrot.lane.b32.xlu0 %v740, 120
        %v1668 = vpop.permute.xlu0 %1667
        %1669 = vrot.lane.b32.xlu0 %v743, 120
        %v1670 = vpop.permute.xlu0 %1669
        %v1672 = vsel %vm754, %v1640, 0
        %v1675 = vsel %vm754, %v1642, 0
        %v1678 = vsel %vm754, %v1644, 0
        %v1681 = vsel %vm754, %v1646, 0
        %v1684 = vsel %vm754, %v1648, 0
        %v1687 = vsel %vm754, %v1650, 0
        %v1690 = vsel %vm754, %v1652, 0
        %v1693 = vsel %vm754, %v1654, 0
        %v1696 = vsel %vm754, %v1656, 0
        %v1699 = vsel %vm754, %v1658, 0
        %v1702 = vsel %vm754, %v1660, 0
        %v1705 = vsel %vm754, %v1662, 0
        %v1708 = vsel %vm754, %v1664, 0
        %v1711 = vsel %vm754, %v1666, 0
        %v1714 = vsel %vm754, %v1668, 0
        %v1717 = vsel %vm754, %v1670, 0
        %1719 = vmatprep.subr.bf16.mxu0 0
        %1720 = vmatpush1.bf16.xpose.msra.mxu0 %v1696
        %1721 = vmatprep.subr.bf16.mxu0 0
        %1722 = vmatpush1.bf16.xpose.msra.mxu0 %v1699
        %1723 = vmatprep.subr.bf16.mxu0 0
        %1724 = vmatpush1.bf16.xpose.msra.mxu0 %v1702
        %1725 = vmatprep.subr.bf16.mxu0 0
        %1726 = vmatpush1.bf16.xpose.msra.mxu0 %v1705
        %1727 = vmatprep.subr.bf16.mxu0 0
        %1728 = vmatpush1.bf16.xpose.msra.mxu0 %v1708
        %1729 = vmatprep.subr.bf16.mxu0 0
        %1730 = vmatpush1.bf16.xpose.msra.mxu0 %v1711
        %1731 = vmatprep.subr.bf16.mxu0 0
        %1732 = vmatpush1.bf16.xpose.msra.mxu0 %v1714
        %1733 = vmatprep.subr.bf16.mxu0 0
        %1734 = vmatpush1.bf16.xpose.msra.mxu0 %v1717
        %1735 = vmatprep.subr.bf16.mxu0 0
        %1736 = vmatpush1.bf16.xpose.msra.mxu0 0
        %1737 = vmatprep.subr.bf16.mxu0 0
        %1738 = vmatpush1.bf16.xpose.msra.mxu0 0
        %1739 = vmatprep.subr.bf16.mxu0 0
        %1740 = vmatpush1.bf16.xpose.msra.mxu0 0
        %1741 = vmatprep.subr.bf16.mxu0 0
        %1742 = vmatpush1.bf16.xpose.msra.mxu0 0
        %1743 = vmatprep.subr.bf16.mxu0 0
        %1744 = vmatpush1.bf16.xpose.msra.mxu0 0
        %1745 = vmatprep.subr.bf16.mxu0 0
        %1746 = vmatpush1.bf16.xpose.msra.mxu0 0
        %1747 = vmatprep.subr.bf16.mxu0 0
        %1748 = vmatpush1.bf16.xpose.msra.mxu0 0
        %1749 = vmatprep.subr.bf16.mxu0 0
        %1750 = vmatpush1.bf16.xpose.msra.mxu0 0
        %1751 = vmatprep.mubr.bf16.mxu0 0
        %1752 = vmatmul.mubr.bf16.gmra.mrb[0].mxu0 %v1672
        %v1753 = vpop.f32.mrb[0].mxu0
        %v1754 = vadd.f32 %v752, %v1753
        %v1755 = vpop.f32.mrb[0].mxu0
        %v1756 = vpop.f32.mrb[0].mxu0
        %v1757 = vadd.f32 %v752, %v1756
        %v1758 = vpop.f32.mrb[0].mxu0
        %1759 = vmatprep.mubr.bf16.mxu0 0
        %1760 = vmatmul.mubr.bf16.gmra.mrb[0].mxu0 %v1675
        %v1761 = vpop.f32.mrb[0].mxu0
        %v1762 = vadd.f32 %v752, %v1761
        %v1763 = vpop.f32.mrb[0].mxu0
        %v1764 = vpop.f32.mrb[0].mxu0
        %v1765 = vadd.f32 %v752, %v1764
        %v1766 = vpop.f32.mrb[0].mxu0
        %1767 = vmatprep.mubr.bf16.mxu0 0
        %1768 = vmatmul.mubr.bf16.gmra.mrb[0].mxu0 %v1678
        %v1769 = vpop.f32.mrb[0].mxu0
        %v1770 = vadd.f32 %v752, %v1769
        %v1771 = vpop.f32.mrb[0].mxu0
        %v1772 = vpop.f32.mrb[0].mxu0
        %v1773 = vadd.f32 %v752, %v1772
        %v1774 = vpop.f32.mrb[0].mxu0
        %1775 = vmatprep.mubr.bf16.mxu0 0
        %1776 = vmatmul.mubr.bf16.gmra.mrb[0].mxu0 %v1681
        %v1777 = vpop.f32.mrb[0].mxu0
        %v1778 = vadd.f32 %v752, %v1777
        %v1779 = vpop.f32.mrb[0].mxu0
        %v1780 = vpop.f32.mrb[0].mxu0
        %v1781 = vadd.f32 %v752, %v1780
        %v1782 = vpop.f32.mrb[0].mxu0
        %1783 = vmatprep.mubr.bf16.mxu0 0
        %1784 = vmatmul.mubr.bf16.gmra.mrb[0].mxu0 %v1684
        %v1785 = vpop.f32.mrb[0].mxu0
        %v1786 = vadd.f32 %v752, %v1785
        %v1787 = vpop.f32.mrb[0].mxu0
        %v1788 = vpop.f32.mrb[0].mxu0
        %v1789 = vadd.f32 %v752, %v1788
        %v1790 = vpop.f32.mrb[0].mxu0
        %1791 = vmatprep.mubr.bf16.mxu0 0
        %1792 = vmatmul.mubr.bf16.gmra.mrb[0].mxu0 %v1687
        %v1793 = vpop.f32.mrb[0].mxu0
        %v1794 = vadd.f32 %v752, %v1793
        %v1795 = vpop.f32.mrb[0].mxu0
        %v1796 = vpop.f32.mrb[0].mxu0
        %v1797 = vadd.f32 %v752, %v1796
        %v1798 = vpop.f32.mrb[0].mxu0
        %1799 = vmatprep.mubr.bf16.mxu0 0
        %1800 = vmatmul.mubr.bf16.gmra.mrb[0].mxu0 %v1690
        %v1801 = vpop.f32.mrb[0].mxu0
        %v1802 = vadd.f32 %v752, %v1801
        %v1803 = vpop.f32.mrb[0].mxu0
        %v1804 = vpop.f32.mrb[0].mxu0
        %v1805 = vadd.f32 %v752, %v1804
        %v1806 = vpop.f32.mrb[0].mxu0
        %1807 = vmatprep.mubr.bf16.mxu0 0
        %1808 = vmatmul.mubr.bf16.gmra.mrb[0].mxu0 %v1693
        %v1809 = vpop.f32.mrb[0].mxu0
        %v1810 = vadd.f32 %v752, %v1809
        %v1811 = vpop.f32.mrb[0].mxu0
        %v1812 = vpop.f32.mrb[0].mxu0
        %v1813 = vadd.f32 %v752, %v1812
        %v1814 = vpop.f32.mrb[0].mxu0
        %1815 = vdwg.mxu0
        %1816 = vmax.xlane.f32.xlu0 %v1754
        %v1817 = vpop.xlane.xlu0 %1816
        %1818 = vmax.xlane.f32.xlu0 %v1757
        %v1819 = vpop.xlane.xlu0 %1818
        %1820 = vmax.xlane.f32.xlu0 %v1762
        %v1821 = vpop.xlane.xlu0 %1820
        %1822 = vmax.xlane.f32.xlu0 %v1765
        %v1823 = vpop.xlane.xlu0 %1822
        %1824 = vmax.xlane.f32.xlu0 %v1770
        %v1825 = vpop.xlane.xlu0 %1824
        %1826 = vmax.xlane.f32.xlu0 %v1773
        %v1827 = vpop.xlane.xlu0 %1826
        %1828 = vmax.xlane.f32.xlu0 %v1778
        %v1829 = vpop.xlane.xlu0 %1828
        %1830 = vmax.xlane.f32.xlu0 %v1781
        %v1831 = vpop.xlane.xlu0 %1830
        %1832 = vmax.xlane.f32.xlu0 %v1786
        %v1833 = vpop.xlane.xlu0 %1832
        %1834 = vmax.xlane.f32.xlu0 %v1789
        %v1835 = vpop.xlane.xlu0 %1834
        %1836 = vmax.xlane.f32.xlu0 %v1794
        %v1837 = vpop.xlane.xlu0 %1836
        %1838 = vmax.xlane.f32.xlu0 %v1797
        %v1839 = vpop.xlane.xlu0 %1838
        %1840 = vmax.xlane.f32.xlu0 %v1802
        %v1841 = vpop.xlane.xlu0 %1840
        %1842 = vmax.xlane.f32.xlu0 %v1805
        %v1843 = vpop.xlane.xlu0 %1842
        %1844 = vmax.xlane.f32.xlu0 %v1810
        %v1845 = vpop.xlane.xlu0 %1844
        %1846 = vmax.xlane.f32.xlu0 %v1813
        %v1847 = vpop.xlane.xlu0 %1846
        %v1848 = vsub.f32 %v1754, %v1817
        %v1849 = vsub.f32 %v1757, %v1819
        %v1850 = vsub.f32 %v1762, %v1821
        %v1851 = vsub.f32 %v1765, %v1823
        %v1852 = vsub.f32 %v1770, %v1825
        %v1853 = vsub.f32 %v1773, %v1827
        %v1854 = vsub.f32 %v1778, %v1829
        %v1855 = vsub.f32 %v1781, %v1831
        %v1856 = vsub.f32 %v1786, %v1833
        %v1857 = vsub.f32 %v1789, %v1835
        %v1858 = vsub.f32 %v1794, %v1837
        %v1859 = vsub.f32 %v1797, %v1839
        %v1860 = vsub.f32 %v1802, %v1841
        %v1861 = vsub.f32 %v1805, %v1843
        %v1862 = vsub.f32 %v1810, %v1845
        %v1863 = vsub.f32 %v1813, %v1847
        %v1864 = vmul.f32 %v1848, 1.442695
        %v1865 = vpow.pop %v1864
        %v1866 = vmul.f32 %v1849, 1.442695
        %v1867 = vpow.pop %v1866
        %v1868 = vmul.f32 %v1850, 1.442695
        %v1869 = vpow.pop %v1868
        %v1870 = vmul.f32 %v1851, 1.442695
        %v1871 = vpow.pop %v1870
        %v1872 = vmul.f32 %v1852, 1.442695
        %v1873 = vpow.pop %v1872
        %v1874 = vmul.f32 %v1853, 1.442695
        %v1875 = vpow.pop %v1874
        %v1876 = vmul.f32 %v1854, 1.442695
        %v1877 = vpow.pop %v1876
        %v1878 = vmul.f32 %v1855, 1.442695
        %v1879 = vpow.pop %v1878
        %v1880 = vmul.f32 %v1856, 1.442695
        %v1881 = vpow.pop %v1880
        %v1882 = vmul.f32 %v1857, 1.442695
        %v1883 = vpow.pop %v1882
        %v1884 = vmul.f32 %v1858, 1.442695
        %v1885 = vpow.pop %v1884
        %v1886 = vmul.f32 %v1859, 1.442695
        %v1887 = vpow.pop %v1886
        %v1888 = vmul.f32 %v1860, 1.442695
        %v1889 = vpow.pop %v1888
        %v1890 = vmul.f32 %v1861, 1.442695
        %v1891 = vpow.pop %v1890
        %v1892 = vmul.f32 %v1862, 1.442695
        %v1893 = vpow.pop %v1892
        %v1894 = vmul.f32 %v1863, 1.442695
        %v1895 = vpow.pop %v1894
        %1896 = vadd.xlane.f32.xlu0 %v1865
        %v1897 = vpop.xlane.xlu0 %1896
        %1898 = vadd.xlane.f32.xlu0 %v1867
        %v1899 = vpop.xlane.xlu0 %1898
        %1900 = vadd.xlane.f32.xlu0 %v1869
        %v1901 = vpop.xlane.xlu0 %1900
        %1902 = vadd.xlane.f32.xlu0 %v1871
        %v1903 = vpop.xlane.xlu0 %1902
        %1904 = vadd.xlane.f32.xlu0 %v1873
        %v1905 = vpop.xlane.xlu0 %1904
        %1906 = vadd.xlane.f32.xlu0 %v1875
        %v1907 = vpop.xlane.xlu0 %1906
        %1908 = vadd.xlane.f32.xlu0 %v1877
        %v1909 = vpop.xlane.xlu0 %1908
        %1910 = vadd.xlane.f32.xlu0 %v1879
        %v1911 = vpop.xlane.xlu0 %1910
        %1912 = vadd.xlane.f32.xlu0 %v1881
        %v1913 = vpop.xlane.xlu0 %1912
        %1914 = vadd.xlane.f32.xlu0 %v1883
        %v1915 = vpop.xlane.xlu0 %1914
        %1916 = vadd.xlane.f32.xlu0 %v1885
        %v1917 = vpop.xlane.xlu0 %1916
        %1918 = vadd.xlane.f32.xlu0 %v1887
        %v1919 = vpop.xlane.xlu0 %1918
        %1920 = vadd.xlane.f32.xlu0 %v1889
        %v1921 = vpop.xlane.xlu0 %1920
        %1922 = vadd.xlane.f32.xlu0 %v1891
        %v1923 = vpop.xlane.xlu0 %1922
        %1924 = vadd.xlane.f32.xlu0 %v1893
        %v1925 = vpop.xlane.xlu0 %1924
        %1926 = vadd.xlane.f32.xlu0 %v1895
        %v1927 = vpop.xlane.xlu0 %1926
        %v1928 = vpack.c.bf16 %v1867, %v1865
        %v1929 = vpack.c.bf16 %v1871, %v1869
        %v1930 = vpack.c.bf16 %v1875, %v1873
        %v1931 = vpack.c.bf16 %v1879, %v1877
        %v1932 = vpack.c.bf16 %v1883, %v1881
        %v1933 = vpack.c.bf16 %v1887, %v1885
        %v1934 = vpack.c.bf16 %v1891, %v1889
        %v1935 = vpack.c.bf16 %v1895, %v1893
        %1936 = vrot.lane.b32.xlu0 %v723, 120
        %v1937 = vpop.permute.xlu0 %1936
        %1938 = vrot.lane.b32.xlu0 %v726, 120
        %v1939 = vpop.permute.xlu0 %1938
        %1940 = vrot.lane.b32.xlu0 %v729, 120
        %v1941 = vpop.permute.xlu0 %1940
        %1942 = vrot.lane.b32.xlu0 %v732, 120
        %v1943 = vpop.permute.xlu0 %1942
        %1944 = vrot.lane.b32.xlu0 %v735, 120
        %v1945 = vpop.permute.xlu0 %1944
        %1946 = vrot.lane.b32.xlu0 %v738, 120
        %v1947 = vpop.permute.xlu0 %1946
        %1948 = vrot.lane.b32.xlu0 %v741, 120
        %v1949 = vpop.permute.xlu0 %1948
        %1950 = vrot.lane.b32.xlu0 %v744, 120
        %v1951 = vpop.permute.xlu0 %1950
        %1960 = vmatprep.subr.bf16.mxu0 0
        %1961 = vmatpush1.bf16.msra.mxu0 %v1937
        %1962 = vmatprep.subr.bf16.mxu0 0
        %1963 = vmatpush1.bf16.msra.mxu0 %v1939
        %1964 = vmatprep.subr.bf16.mxu0 0
        %1965 = vmatpush1.bf16.msra.mxu0 %v1941
        %1966 = vmatprep.subr.bf16.mxu0 0
        %1967 = vmatpush1.bf16.msra.mxu0 %v1943
        %1968 = vmatprep.subr.bf16.mxu0 0
        %1969 = vmatpush1.bf16.msra.mxu0 %v1945
        %1970 = vmatprep.subr.bf16.mxu0 0
        %1971 = vmatpush1.bf16.msra.mxu0 %v1947
        %1972 = vmatprep.subr.bf16.mxu0 0
        %1973 = vmatpush1.bf16.msra.mxu0 %v1949
        %1974 = vmatprep.subr.bf16.mxu0 0
        %1975 = vmatpush1.bf16.msra.mxu0 %v1951
        %1976 = vmatprep.subr.bf16.mxu0 0
        %1977 = vmatpush1.bf16.msra.mxu0 0
        %1978 = vmatprep.subr.bf16.mxu0 0
        %1979 = vmatpush1.bf16.msra.mxu0 0
        %1980 = vmatprep.subr.bf16.mxu0 0
        %1981 = vmatpush1.bf16.msra.mxu0 0
        %1982 = vmatprep.subr.bf16.mxu0 0
        %1983 = vmatpush1.bf16.msra.mxu0 0
        %1984 = vmatprep.subr.bf16.mxu0 0
        %1985 = vmatpush1.bf16.msra.mxu0 0
        %1986 = vmatprep.subr.bf16.mxu0 0
        %1987 = vmatpush1.bf16.msra.mxu0 0
        %1988 = vmatprep.subr.bf16.mxu0 0
        %1989 = vmatpush1.bf16.msra.mxu0 0
        %1990 = vmatprep.subr.bf16.mxu0 0
        %1991 = vmatpush1.bf16.msra.mxu0 0
        %1992 = vmatprep.mubr.bf16.mxu0 0
        %1993 = vmatmul.mubr.bf16.gmra.mrb[0].mxu0 %v1928
        %v1994 = vpop.f32.mrb[0].mxu0
        %v1995 = vadd.f32 0.0, %v1994
        %v1996 = vpop.f32.mrb[0].mxu0
        %v1997 = vpop.f32.mrb[0].mxu0
        %v1998 = vadd.f32 0.0, %v1997
        %v1999 = vpop.f32.mrb[0].mxu0
        %2000 = vmatprep.mubr.bf16.mxu0 0
        %2001 = vmatmul.mubr.bf16.gmra.mrb[0].mxu0 %v1929
        %v2002 = vpop.f32.mrb[0].mxu0
        %v2003 = vadd.f32 0.0, %v2002
        %v2004 = vpop.f32.mrb[0].mxu0
        %v2005 = vpop.f32.mrb[0].mxu0
        %v2006 = vadd.f32 0.0, %v2005
        %v2007 = vpop.f32.mrb[0].mxu0
        %2008 = vmatprep.mubr.bf16.mxu0 0
        %2009 = vmatmul.mubr.bf16.gmra.mrb[0].mxu0 %v1930
        %v2010 = vpop.f32.mrb[0].mxu0
        %v2011 = vadd.f32 0.0, %v2010
        %v2012 = vpop.f32.mrb[0].mxu0
        %v2013 = vpop.f32.mrb[0].mxu0
        %v2014 = vadd.f32 0.0, %v2013
        %v2015 = vpop.f32.mrb[0].mxu0
        %2016 = vmatprep.mubr.bf16.mxu0 0
        %2017 = vmatmul.mubr.bf16.gmra.mrb[0].mxu0 %v1931
        %v2018 = vpop.f32.mrb[0].mxu0
        %v2019 = vadd.f32 0.0, %v2018
        %v2020 = vpop.f32.mrb[0].mxu0
        %v2021 = vpop.f32.mrb[0].mxu0
        %v2022 = vadd.f32 0.0, %v2021
        %v2023 = vpop.f32.mrb[0].mxu0
        %2024 = vmatprep.mubr.bf16.mxu0 0
        %2025 = vmatmul.mubr.bf16.gmra.mrb[0].mxu0 %v1932
        %v2026 = vpop.f32.mrb[0].mxu0
        %v2027 = vadd.f32 0.0, %v2026
        %v2028 = vpop.f32.mrb[0].mxu0
        %v2029 = vpop.f32.mrb[0].mxu0
        %v2030 = vadd.f32 0.0, %v2029
        %v2031 = vpop.f32.mrb[0].mxu0
        %2032 = vmatprep.mubr.bf16.mxu0 0
        %2033 = vmatmul.mubr.bf16.gmra.mrb[0].mxu0 %v1933
        %v2034 = vpop.f32.mrb[0].mxu0
        %v2035 = vadd.f32 0.0, %v2034
        %v2036 = vpop.f32.mrb[0].mxu0
        %v2037 = vpop.f32.mrb[0].mxu0
        %v2038 = vadd.f32 0.0, %v2037
        %v2039 = vpop.f32.mrb[0].mxu0
        %2040 = vmatprep.mubr.bf16.mxu0 0
        %2041 = vmatmul.mubr.bf16.gmra.mrb[0].mxu0 %v1934
        %v2042 = vpop.f32.mrb[0].mxu0
        %v2043 = vadd.f32 0.0, %v2042
        %v2044 = vpop.f32.mrb[0].mxu0
        %v2045 = vpop.f32.mrb[0].mxu0
        %v2046 = vadd.f32 0.0, %v2045
        %v2047 = vpop.f32.mrb[0].mxu0
        %2048 = vmatprep.mubr.bf16.mxu0 0
        %2049 = vmatmul.mubr.bf16.gmra.mrb[0].mxu0 %v1935
        %v2050 = vpop.f32.mrb[0].mxu0
        %v2051 = vadd.f32 0.0, %v2050
        %v2052 = vpop.f32.mrb[0].mxu0
        %v2053 = vpop.f32.mrb[0].mxu0
        %v2054 = vadd.f32 0.0, %v2053
        %v2055 = vpop.f32.mrb[0].mxu0
        %2056 = vdwg.mxu0
        %v2057 = vrcp.pop %v1897
        %v2058 = vrcp.pop %v1899
        %v2059 = vrcp.pop %v1901
        %v2060 = vrcp.pop %v1903
        %v2061 = vrcp.pop %v1905
        %v2062 = vrcp.pop %v1907
        %v2063 = vrcp.pop %v1909
        %v2064 = vrcp.pop %v1911
        %v2065 = vrcp.pop %v1913
        %v2066 = vrcp.pop %v1915
        %v2067 = vrcp.pop %v1917
        %v2068 = vrcp.pop %v1919
        %v2069 = vrcp.pop %v1921
        %v2070 = vrcp.pop %v1923
        %v2071 = vrcp.pop %v1925
        %v2072 = vrcp.pop %v1927
        %v2073 = vmul.f32 %v1995, %v2057
        %v2074 = vmul.f32 %v1998, %v2058
        %v2075 = vmul.f32 %v2003, %v2059
        %v2076 = vmul.f32 %v2006, %v2060
        %v2077 = vmul.f32 %v2011, %v2061
        %v2078 = vmul.f32 %v2014, %v2062
        %v2079 = vmul.f32 %v2019, %v2063
        %v2080 = vmul.f32 %v2022, %v2064
        %v2081 = vmul.f32 %v2027, %v2065
        %v2082 = vmul.f32 %v2030, %v2066
        %v2083 = vmul.f32 %v2035, %v2067
        %v2084 = vmul.f32 %v2038, %v2068
        %v2085 = vmul.f32 %v2043, %v2069
        %v2086 = vmul.f32 %v2046, %v2070
        %v2087 = vmul.f32 %v2051, %v2071
        %v2088 = vmul.f32 %v2054, %v2072
        %v2089 = vpack.c.bf16 %v2074, %v2073
        %v2090 = vpack.c.bf16 %v2076, %v2075
        %v2091 = vpack.c.bf16 %v2078, %v2077
        %v2092 = vpack.c.bf16 %v2080, %v2079
        %v2093 = vpack.c.bf16 %v2082, %v2081
        %v2094 = vpack.c.bf16 %v2084, %v2083
        %v2095 = vpack.c.bf16 %v2086, %v2085
        %v2096 = vpack.c.bf16 %v2088, %v2087
        %2097 = vrot.lane.b32.xlu0 %v721, 116
        %v2098 = vpop.permute.xlu0 %2097
        %2099 = vrot.lane.b32.xlu0 %v724, 116
        %v2100 = vpop.permute.xlu0 %2099
        %2101 = vrot.lane.b32.xlu0 %v727, 116
        %v2102 = vpop.permute.xlu0 %2101
        %2103 = vrot.lane.b32.xlu0 %v730, 116
        %v2104 = vpop.permute.xlu0 %2103
        %2105 = vrot.lane.b32.xlu0 %v733, 116
        %v2106 = vpop.permute.xlu0 %2105
        %2107 = vrot.lane.b32.xlu0 %v736, 116
        %v2108 = vpop.permute.xlu0 %2107
        %2109 = vrot.lane.b32.xlu0 %v739, 116
        %v2110 = vpop.permute.xlu0 %2109
        %2111 = vrot.lane.b32.xlu0 %v742, 116
        %v2112 = vpop.permute.xlu0 %2111
        %2113 = vrot.lane.b32.xlu0 %v722, 116
        %v2114 = vpop.permute.xlu0 %2113
        %2115 = vrot.lane.b32.xlu0 %v725, 116
        %v2116 = vpop.permute.xlu0 %2115
        %2117 = vrot.lane.b32.xlu0 %v728, 116
        %v2118 = vpop.permute.xlu0 %2117
        %2119 = vrot.lane.b32.xlu0 %v731, 116
        %v2120 = vpop.permute.xlu0 %2119
        %2121 = vrot.lane.b32.xlu0 %v734, 116
        %v2122 = vpop.permute.xlu0 %2121
        %2123 = vrot.lane.b32.xlu0 %v737, 116
        %v2124 = vpop.permute.xlu0 %2123
        %2125 = vrot.lane.b32.xlu0 %v740, 116
        %v2126 = vpop.permute.xlu0 %2125
        %2127 = vrot.lane.b32.xlu0 %v743, 116
        %v2128 = vpop.permute.xlu0 %2127
        %v2130 = vsel %vm754, %v2098, 0
        %v2133 = vsel %vm754, %v2100, 0
        %v2136 = vsel %vm754, %v2102, 0
        %v2139 = vsel %vm754, %v2104, 0
        %v2142 = vsel %vm754, %v2106, 0
        %v2145 = vsel %vm754, %v2108, 0
        %v2148 = vsel %vm754, %v2110, 0
        %v2151 = vsel %vm754, %v2112, 0
        %v2154 = vsel %vm754, %v2114, 0
        %v2157 = vsel %vm754, %v2116, 0
        %v2160 = vsel %vm754, %v2118, 0
        %v2163 = vsel %vm754, %v2120, 0
        %v2166 = vsel %vm754, %v2122, 0
        %v2169 = vsel %vm754, %v2124, 0
        %v2172 = vsel %vm754, %v2126, 0
        %v2175 = vsel %vm754, %v2128, 0
        %2177 = vmatprep.subr.bf16.mxu0 0
        %2178 = vmatpush1.bf16.xpose.msra.mxu0 %v2154
        %2179 = vmatprep.subr.bf16.mxu0 0
        %2180 = vmatpush1.bf16.xpose.msra.mxu0 %v2157
        %2181 = vmatprep.subr.bf16.mxu0 0
        %2182 = vmatpush1.bf16.xpose.msra.mxu0 %v2160
        %2183 = vmatprep.subr.bf16.mxu0 0
        %2184 = vmatpush1.bf16.xpose.msra.mxu0 %v2163
        %2185 = vmatprep.subr.bf16.mxu0 0
        %2186 = vmatpush1.bf16.xpose.msra.mxu0 %v2166
        %2187 = vmatprep.subr.bf16.mxu0 0
        %2188 = vmatpush1.bf16.xpose.msra.mxu0 %v2169
        %2189 = vmatprep.subr.bf16.mxu0 0
        %2190 = vmatpush1.bf16.xpose.msra.mxu0 %v2172
        %2191 = vmatprep.subr.bf16.mxu0 0
        %2192 = vmatpush1.bf16.xpose.msra.mxu0 %v2175
        %2193 = vmatprep.subr.bf16.mxu0 0
        %2194 = vmatpush1.bf16.xpose.msra.mxu0 0
        %2195 = vmatprep.subr.bf16.mxu0 0
        %2196 = vmatpush1.bf16.xpose.msra.mxu0 0
        %2197 = vmatprep.subr.bf16.mxu0 0
        %2198 = vmatpush1.bf16.xpose.msra.mxu0 0
        %2199 = vmatprep.subr.bf16.mxu0 0
        %2200 = vmatpush1.bf16.xpose.msra.mxu0 0
        %2201 = vmatprep.subr.bf16.mxu0 0
        %2202 = vmatpush1.bf16.xpose.msra.mxu0 0
        %2203 = vmatprep.subr.bf16.mxu0 0
        %2204 = vmatpush1.bf16.xpose.msra.mxu0 0
        %2205 = vmatprep.subr.bf16.mxu0 0
        %2206 = vmatpush1.bf16.xpose.msra.mxu0 0
        %2207 = vmatprep.subr.bf16.mxu0 0
        %2208 = vmatpush1.bf16.xpose.msra.mxu0 0
        %2209 = vmatprep.mubr.bf16.mxu0 0
        %2210 = vmatmul.mubr.bf16.gmra.mrb[0].mxu0 %v2130
        %v2211 = vpop.f32.mrb[0].mxu0
        %v2212 = vadd.f32 %v752, %v2211
        %v2213 = vpop.f32.mrb[0].mxu0
        %v2214 = vpop.f32.mrb[0].mxu0
        %v2215 = vadd.f32 %v752, %v2214
        %v2216 = vpop.f32.mrb[0].mxu0
        %2217 = vmatprep.mubr.bf16.mxu0 0
        %2218 = vmatmul.mubr.bf16.gmra.mrb[0].mxu0 %v2133
        %v2219 = vpop.f32.mrb[0].mxu0
        %v2220 = vadd.f32 %v752, %v2219
        %v2221 = vpop.f32.mrb[0].mxu0
        %v2222 = vpop.f32.mrb[0].mxu0
        %v2223 = vadd.f32 %v752, %v2222
        %v2224 = vpop.f32.mrb[0].mxu0
        %2225 = vmatprep.mubr.bf16.mxu0 0
        %2226 = vmatmul.mubr.bf16.gmra.mrb[0].mxu0 %v2136
        %v2227 = vpop.f32.mrb[0].mxu0
        %v2228 = vadd.f32 %v752, %v2227
        %v2229 = vpop.f32.mrb[0].mxu0
        %v2230 = vpop.f32.mrb[0].mxu0
        %v2231 = vadd.f32 %v752, %v2230
        %v2232 = vpop.f32.mrb[0].mxu0
        %2233 = vmatprep.mubr.bf16.mxu0 0
        %2234 = vmatmul.mubr.bf16.gmra.mrb[0].mxu0 %v2139
        %v2235 = vpop.f32.mrb[0].mxu0
        %v2236 = vadd.f32 %v752, %v2235
        %v2237 = vpop.f32.mrb[0].mxu0
        %v2238 = vpop.f32.mrb[0].mxu0
        %v2239 = vadd.f32 %v752, %v2238
        %v2240 = vpop.f32.mrb[0].mxu0
        %2241 = vmatprep.mubr.bf16.mxu0 0
        %2242 = vmatmul.mubr.bf16.gmra.mrb[0].mxu0 %v2142
        %v2243 = vpop.f32.mrb[0].mxu0
        %v2244 = vadd.f32 %v752, %v2243
        %v2245 = vpop.f32.mrb[0].mxu0
        %v2246 = vpop.f32.mrb[0].mxu0
        %v2247 = vadd.f32 %v752, %v2246
        %v2248 = vpop.f32.mrb[0].mxu0
        %2249 = vmatprep.mubr.bf16.mxu0 0
        %2250 = vmatmul.mubr.bf16.gmra.mrb[0].mxu0 %v2145
        %v2251 = vpop.f32.mrb[0].mxu0
        %v2252 = vadd.f32 %v752, %v2251
        %v2253 = vpop.f32.mrb[0].mxu0
        %v2254 = vpop.f32.mrb[0].mxu0
        %v2255 = vadd.f32 %v752, %v2254
        %v2256 = vpop.f32.mrb[0].mxu0
        %2257 = vmatprep.mubr.bf16.mxu0 0
        %2258 = vmatmul.mubr.bf16.gmra.mrb[0].mxu0 %v2148
        %v2259 = vpop.f32.mrb[0].mxu0
        %v2260 = vadd.f32 %v752, %v2259
        %v2261 = vpop.f32.mrb[0].mxu0
        %v2262 = vpop.f32.mrb[0].mxu0
        %v2263 = vadd.f32 %v752, %v2262
        %v2264 = vpop.f32.mrb[0].mxu0
        %2265 = vmatprep.mubr.bf16.mxu0 0
        %2266 = vmatmul.mubr.bf16.gmra.mrb[0].mxu0 %v2151
        %v2267 = vpop.f32.mrb[0].mxu0
        %v2268 = vadd.f32 %v752, %v2267
        %v2269 = vpop.f32.mrb[0].mxu0
        %v2270 = vpop.f32.mrb[0].mxu0
        %v2271 = vadd.f32 %v752, %v2270
        %v2272 = vpop.f32.mrb[0].mxu0
        %2273 = vdwg.mxu0
        %2274 = vmax.xlane.f32.xlu0 %v2212
        %v2275 = vpop.xlane.xlu0 %2274
        %2276 = vmax.xlane.f32.xlu0 %v2215
        %v2277 = vpop.xlane.xlu0 %2276
        %2278 = vmax.xlane.f32.xlu0 %v2220
        %v2279 = vpop.xlane.xlu0 %2278
        %2280 = vmax.xlane.f32.xlu0 %v2223
        %v2281 = vpop.xlane.xlu0 %2280
        %2282 = vmax.xlane.f32.xlu0 %v2228
        %v2283 = vpop.xlane.xlu0 %2282
        %2284 = vmax.xlane.f32.xlu0 %v2231
        %v2285 = vpop.xlane.xlu0 %2284
        %2286 = vmax.xlane.f32.xlu0 %v2236
        %v2287 = vpop.xlane.xlu0 %2286
        %2288 = vmax.xlane.f32.xlu0 %v2239
        %v2289 = vpop.xlane.xlu0 %2288
        %2290 = vmax.xlane.f32.xlu0 %v2244
        %v2291 = vpop.xlane.xlu0 %2290
        %2292 = vmax.xlane.f32.xlu0 %v2247
        %v2293 = vpop.xlane.xlu0 %2292
        %2294 = vmax.xlane.f32.xlu0 %v2252
        %v2295 = vpop.xlane.xlu0 %2294
        %2296 = vmax.xlane.f32.xlu0 %v2255
        %v2297 = vpop.xlane.xlu0 %2296
        %2298 = vmax.xlane.f32.xlu0 %v2260
        %v2299 = vpop.xlane.xlu0 %2298
        %2300 = vmax.xlane.f32.xlu0 %v2263
        %v2301 = vpop.xlane.xlu0 %2300
        %2302 = vmax.xlane.f32.xlu0 %v2268
        %v2303 = vpop.xlane.xlu0 %2302
        %2304 = vmax.xlane.f32.xlu0 %v2271
        %v2305 = vpop.xlane.xlu0 %2304
        %v2306 = vsub.f32 %v2212, %v2275
        %v2307 = vsub.f32 %v2215, %v2277
        %v2308 = vsub.f32 %v2220, %v2279
        %v2309 = vsub.f32 %v2223, %v2281
        %v2310 = vsub.f32 %v2228, %v2283
        %v2311 = vsub.f32 %v2231, %v2285
        %v2312 = vsub.f32 %v2236, %v2287
        %v2313 = vsub.f32 %v2239, %v2289
        %v2314 = vsub.f32 %v2244, %v2291
        %v2315 = vsub.f32 %v2247, %v2293
        %v2316 = vsub.f32 %v2252, %v2295
        %v2317 = vsub.f32 %v2255, %v2297
        %v2318 = vsub.f32 %v2260, %v2299
        %v2319 = vsub.f32 %v2263, %v2301
        %v2320 = vsub.f32 %v2268, %v2303
        %v2321 = vsub.f32 %v2271, %v2305
        %v2322 = vmul.f32 %v2306, 1.442695
        %v2323 = vpow.pop %v2322
        %v2324 = vmul.f32 %v2307, 1.442695
        %v2325 = vpow.pop %v2324
        %v2326 = vmul.f32 %v2308, 1.442695
        %v2327 = vpow.pop %v2326
        %v2328 = vmul.f32 %v2309, 1.442695
        %v2329 = vpow.pop %v2328
        %v2330 = vmul.f32 %v2310, 1.442695
        %v2331 = vpow.pop %v2330
        %v2332 = vmul.f32 %v2311, 1.442695
        %v2333 = vpow.pop %v2332
        %v2334 = vmul.f32 %v2312, 1.442695
        %v2335 = vpow.pop %v2334
        %v2336 = vmul.f32 %v2313, 1.442695
        %v2337 = vpow.pop %v2336
        %v2338 = vmul.f32 %v2314, 1.442695
        %v2339 = vpow.pop %v2338
        %v2340 = vmul.f32 %v2315, 1.442695
        %v2341 = vpow.pop %v2340
        %v2342 = vmul.f32 %v2316, 1.442695
        %v2343 = vpow.pop %v2342
        %v2344 = vmul.f32 %v2317, 1.442695
        %v2345 = vpow.pop %v2344
        %v2346 = vmul.f32 %v2318, 1.442695
        %v2347 = vpow.pop %v2346
        %v2348 = vmul.f32 %v2319, 1.442695
        %v2349 = vpow.pop %v2348
        %v2350 = vmul.f32 %v2320, 1.442695
        %v2351 = vpow.pop %v2350
        %v2352 = vmul.f32 %v2321, 1.442695
        %v2353 = vpow.pop %v2352
        %2354 = vadd.xlane.f32.xlu0 %v2323
        %v2355 = vpop.xlane.xlu0 %2354
        %2356 = vadd.xlane.f32.xlu0 %v2325
        %v2357 = vpop.xlane.xlu0 %2356
        %2358 = vadd.xlane.f32.xlu0 %v2327
        %v2359 = vpop.xlane.xlu0 %2358
        %2360 = vadd.xlane.f32.xlu0 %v2329
        %v2361 = vpop.xlane.xlu0 %2360
        %2362 = vadd.xlane.f32.xlu0 %v2331
        %v2363 = vpop.xlane.xlu0 %2362
        %2364 = vadd.xlane.f32.xlu0 %v2333
        %v2365 = vpop.xlane.xlu0 %2364
        %2366 = vadd.xlane.f32.xlu0 %v2335
        %v2367 = vpop.xlane.xlu0 %2366
        %2368 = vadd.xlane.f32.xlu0 %v2337
        %v2369 = vpop.xlane.xlu0 %2368
        %2370 = vadd.xlane.f32.xlu0 %v2339
        %v2371 = vpop.xlane.xlu0 %2370
        %2372 = vadd.xlane.f32.xlu0 %v2341
        %v2373 = vpop.xlane.xlu0 %2372
        %2374 = vadd.xlane.f32.xlu0 %v2343
        %v2375 = vpop.xlane.xlu0 %2374
        %2376 = vadd.xlane.f32.xlu0 %v2345
        %v2377 = vpop.xlane.xlu0 %2376
        %2378 = vadd.xlane.f32.xlu0 %v2347
        %v2379 = vpop.xlane.xlu0 %2378
        %2380 = vadd.xlane.f32.xlu0 %v2349
        %v2381 = vpop.xlane.xlu0 %2380
        %2382 = vadd.xlane.f32.xlu0 %v2351
        %v2383 = vpop.xlane.xlu0 %2382
        %2384 = vadd.xlane.f32.xlu0 %v2353
        %v2385 = vpop.xlane.xlu0 %2384
        %v2386 = vpack.c.bf16 %v2325, %v2323
        %v2387 = vpack.c.bf16 %v2329, %v2327
        %v2388 = vpack.c.bf16 %v2333, %v2331
        %v2389 = vpack.c.bf16 %v2337, %v2335
        %v2390 = vpack.c.bf16 %v2341, %v2339
        %v2391 = vpack.c.bf16 %v2345, %v2343
        %v2392 = vpack.c.bf16 %v2349, %v2347
        %v2393 = vpack.c.bf16 %v2353, %v2351
        %2394 = vrot.lane.b32.xlu0 %v723, 116
        %v2395 = vpop.permute.xlu0 %2394
        %2396 = vrot.lane.b32.xlu0 %v726, 116
        %v2397 = vpop.permute.xlu0 %2396
        %2398 = vrot.lane.b32.xlu0 %v729, 116
        %v2399 = vpop.permute.xlu0 %2398
        %2400 = vrot.lane.b32.xlu0 %v732, 116
        %v2401 = vpop.permute.xlu0 %2400
        %2402 = vrot.lane.b32.xlu0 %v735, 116
        %v2403 = vpop.permute.xlu0 %2402
        %2404 = vrot.lane.b32.xlu0 %v738, 116
        %v2405 = vpop.permute.xlu0 %2404
        %2406 = vrot.lane.b32.xlu0 %v741, 116
        %v2407 = vpop.permute.xlu0 %2406
        %2408 = vrot.lane.b32.xlu0 %v744, 116
        %v2409 = vpop.permute.xlu0 %2408
        %2418 = vmatprep.subr.bf16.mxu0 0
        %2419 = vmatpush1.bf16.msra.mxu0 %v2395
        %2420 = vmatprep.subr.bf16.mxu0 0
        %2421 = vmatpush1.bf16.msra.mxu0 %v2397
        %2422 = vmatprep.subr.bf16.mxu0 0
        %2423 = vmatpush1.bf16.msra.mxu0 %v2399
        %2424 = vmatprep.subr.bf16.mxu0 0
        %2425 = vmatpush1.bf16.msra.mxu0 %v2401
        %2426 = vmatprep.subr.bf16.mxu0 0
        %2427 = vmatpush1.bf16.msra.mxu0 %v2403
        %2428 = vmatprep.subr.bf16.mxu0 0
        %2429 = vmatpush1.bf16.msra.mxu0 %v2405
        %2430 = vmatprep.subr.bf16.mxu0 0
        %2431 = vmatpush1.bf16.msra.mxu0 %v2407
        %2432 = vmatprep.subr.bf16.mxu0 0
        %2433 = vmatpush1.bf16.msra.mxu0 %v2409
        %2434 = vmatprep.subr.bf16.mxu0 0
        %2435 = vmatpush1.bf16.msra.mxu0 0
        %2436 = vmatprep.subr.bf16.mxu0 0
        %2437 = vmatpush1.bf16.msra.mxu0 0
        %2438 = vmatprep.subr.bf16.mxu0 0
        %2439 = vmatpush1.bf16.msra.mxu0 0
        %2440 = vmatprep.subr.bf16.mxu0 0
        %2441 = vmatpush1.bf16.msra.mxu0 0
        %2442 = vmatprep.subr.bf16.mxu0 0
        %2443 = vmatpush1.bf16.msra.mxu0 0
        %2444 = vmatprep.subr.bf16.mxu0 0
        %2445 = vmatpush1.bf16.msra.mxu0 0
        %2446 = vmatprep.subr.bf16.mxu0 0
        %2447 = vmatpush1.bf16.msra.mxu0 0
        %2448 = vmatprep.subr.bf16.mxu0 0
        %2449 = vmatpush1.bf16.msra.mxu0 0
        %2450 = vmatprep.mubr.bf16.mxu0 0
        %2451 = vmatmul.mubr.bf16.gmra.mrb[0].mxu0 %v2386
        %v2452 = vpop.f32.mrb[0].mxu0
        %v2453 = vadd.f32 0.0, %v2452
        %v2454 = vpop.f32.mrb[0].mxu0
        %v2455 = vpop.f32.mrb[0].mxu0
        %v2456 = vadd.f32 0.0, %v2455
        %v2457 = vpop.f32.mrb[0].mxu0
        %2458 = vmatprep.mubr.bf16.mxu0 0
        %2459 = vmatmul.mubr.bf16.gmra.mrb[0].mxu0 %v2387
        %v2460 = vpop.f32.mrb[0].mxu0
        %v2461 = vadd.f32 0.0, %v2460
        %v2462 = vpop.f32.mrb[0].mxu0
        %v2463 = vpop.f32.mrb[0].mxu0
        %v2464 = vadd.f32 0.0, %v2463
        %v2465 = vpop.f32.mrb[0].mxu0
        %2466 = vmatprep.mubr.bf16.mxu0 0
        %2467 = vmatmul.mubr.bf16.gmra.mrb[0].mxu0 %v2388
        %v2468 = vpop.f32.mrb[0].mxu0
        %v2469 = vadd.f32 0.0, %v2468
        %v2470 = vpop.f32.mrb[0].mxu0
        %v2471 = vpop.f32.mrb[0].mxu0
        %v2472 = vadd.f32 0.0, %v2471
        %v2473 = vpop.f32.mrb[0].mxu0
        %2474 = vmatprep.mubr.bf16.mxu0 0
        %2475 = vmatmul.mubr.bf16.gmra.mrb[0].mxu0 %v2389
        %v2476 = vpop.f32.mrb[0].mxu0
        %v2477 = vadd.f32 0.0, %v2476
        %v2478 = vpop.f32.mrb[0].mxu0
        %v2479 = vpop.f32.mrb[0].mxu0
        %v2480 = vadd.f32 0.0, %v2479
        %v2481 = vpop.f32.mrb[0].mxu0
        %2482 = vmatprep.mubr.bf16.mxu0 0
        %2483 = vmatmul.mubr.bf16.gmra.mrb[0].mxu0 %v2390
        %v2484 = vpop.f32.mrb[0].mxu0
        %v2485 = vadd.f32 0.0, %v2484
        %v2486 = vpop.f32.mrb[0].mxu0
        %v2487 = vpop.f32.mrb[0].mxu0
        %v2488 = vadd.f32 0.0, %v2487
        %v2489 = vpop.f32.mrb[0].mxu0
        %2490 = vmatprep.mubr.bf16.mxu0 0
        %2491 = vmatmul.mubr.bf16.gmra.mrb[0].mxu0 %v2391
        %v2492 = vpop.f32.mrb[0].mxu0
        %v2493 = vadd.f32 0.0, %v2492
        %v2494 = vpop.f32.mrb[0].mxu0
        %v2495 = vpop.f32.mrb[0].mxu0
        %v2496 = vadd.f32 0.0, %v2495
        %v2497 = vpop.f32.mrb[0].mxu0
        %2498 = vmatprep.mubr.bf16.mxu0 0
        %2499 = vmatmul.mubr.bf16.gmra.mrb[0].mxu0 %v2392
        %v2500 = vpop.f32.mrb[0].mxu0
        %v2501 = vadd.f32 0.0, %v2500
        %v2502 = vpop.f32.mrb[0].mxu0
        %v2503 = vpop.f32.mrb[0].mxu0
        %v2504 = vadd.f32 0.0, %v2503
        %v2505 = vpop.f32.mrb[0].mxu0
        %2506 = vmatprep.mubr.bf16.mxu0 0
        %2507 = vmatmul.mubr.bf16.gmra.mrb[0].mxu0 %v2393
        %v2508 = vpop.f32.mrb[0].mxu0
        %v2509 = vadd.f32 0.0, %v2508
        %v2510 = vpop.f32.mrb[0].mxu0
        %v2511 = vpop.f32.mrb[0].mxu0
        %v2512 = vadd.f32 0.0, %v2511
        %v2513 = vpop.f32.mrb[0].mxu0
        %2514 = vdwg.mxu0
        %v2515 = vrcp.pop %v2355
        %v2516 = vrcp.pop %v2357
        %v2517 = vrcp.pop %v2359
        %v2518 = vrcp.pop %v2361
        %v2519 = vrcp.pop %v2363
        %v2520 = vrcp.pop %v2365
        %v2521 = vrcp.pop %v2367
        %v2522 = vrcp.pop %v2369
        %v2523 = vrcp.pop %v2371
        %v2524 = vrcp.pop %v2373
        %v2525 = vrcp.pop %v2375
        %v2526 = vrcp.pop %v2377
        %v2527 = vrcp.pop %v2379
        %v2528 = vrcp.pop %v2381
        %v2529 = vrcp.pop %v2383
        %v2530 = vrcp.pop %v2385
        %v2531 = vmul.f32 %v2453, %v2515
        %v2532 = vmul.f32 %v2456, %v2516
        %v2533 = vmul.f32 %v2461, %v2517
        %v2534 = vmul.f32 %v2464, %v2518
        %v2535 = vmul.f32 %v2469, %v2519
        %v2536 = vmul.f32 %v2472, %v2520
        %v2537 = vmul.f32 %v2477, %v2521
        %v2538 = vmul.f32 %v2480, %v2522
        %v2539 = vmul.f32 %v2485, %v2523
        %v2540 = vmul.f32 %v2488, %v2524
        %v2541 = vmul.f32 %v2493, %v2525
        %v2542 = vmul.f32 %v2496, %v2526
        %v2543 = vmul.f32 %v2501, %v2527
        %v2544 = vmul.f32 %v2504, %v2528
        %v2545 = vmul.f32 %v2509, %v2529
        %v2546 = vmul.f32 %v2512, %v2530
        %v2547 = vpack.c.bf16 %v2532, %v2531
        %v2548 = vpack.c.bf16 %v2534, %v2533
        %v2549 = vpack.c.bf16 %v2536, %v2535
        %v2550 = vpack.c.bf16 %v2538, %v2537
        %v2551 = vpack.c.bf16 %v2540, %v2539
        %v2552 = vpack.c.bf16 %v2542, %v2541
        %v2553 = vpack.c.bf16 %v2544, %v2543
        %v2554 = vpack.c.bf16 %v2546, %v2545
        %2555 = vrot.lane.b32.xlu0 %v721, 112
        %v2556 = vpop.permute.xlu0 %2555
        %2557 = vrot.lane.b32.xlu0 %v724, 112
        %v2558 = vpop.permute.xlu0 %2557
        %2559 = vrot.lane.b32.xlu0 %v727, 112
        %v2560 = vpop.permute.xlu0 %2559
        %2561 = vrot.lane.b32.xlu0 %v730, 112
        %v2562 = vpop.permute.xlu0 %2561
        %2563 = vrot.lane.b32.xlu0 %v733, 112
        %v2564 = vpop.permute.xlu0 %2563
        %2565 = vrot.lane.b32.xlu0 %v736, 112
        %v2566 = vpop.permute.xlu0 %2565
        %2567 = vrot.lane.b32.xlu0 %v739, 112
        %v2568 = vpop.permute.xlu0 %2567
        %2569 = vrot.lane.b32.xlu0 %v742, 112
        %v2570 = vpop.permute.xlu0 %2569
        %2571 = vrot.lane.b32.xlu0 %v722, 112
        %v2572 = vpop.permute.xlu0 %2571
        %2573 = vrot.lane.b32.xlu0 %v725, 112
        %v2574 = vpop.permute.xlu0 %2573
        %2575 = vrot.lane.b32.xlu0 %v728, 112
        %v2576 = vpop.permute.xlu0 %2575
        %2577 = vrot.lane.b32.xlu0 %v731, 112
        %v2578 = vpop.permute.xlu0 %2577
        %2579 = vrot.lane.b32.xlu0 %v734, 112
        %v2580 = vpop.permute.xlu0 %2579
        %2581 = vrot.lane.b32.xlu0 %v737, 112
        %v2582 = vpop.permute.xlu0 %2581
        %2583 = vrot.lane.b32.xlu0 %v740, 112
        %v2584 = vpop.permute.xlu0 %2583
        %2585 = vrot.lane.b32.xlu0 %v743, 112
        %v2586 = vpop.permute.xlu0 %2585
        %v2588 = vsel %vm754, %v2556, 0
        %v2591 = vsel %vm754, %v2558, 0
        %v2594 = vsel %vm754, %v2560, 0
        %v2597 = vsel %vm754, %v2562, 0
        %v2600 = vsel %vm754, %v2564, 0
        %v2603 = vsel %vm754, %v2566, 0
        %v2606 = vsel %vm754, %v2568, 0
        %v2609 = vsel %vm754, %v2570, 0
        %v2612 = vsel %vm754, %v2572, 0
        %v2615 = vsel %vm754, %v2574, 0
        %v2618 = vsel %vm754, %v2576, 0
        %v2621 = vsel %vm754, %v2578, 0
        %v2624 = vsel %vm754, %v2580, 0
        %v2627 = vsel %vm754, %v2582, 0
        %v2630 = vsel %vm754, %v2584, 0
        %v2633 = vsel %vm754, %v2586, 0
        %2635 = vmatprep.subr.bf16.mxu0 0
        %2636 = vmatpush1.bf16.xpose.msra.mxu0 %v2612
        %2637 = vmatprep.subr.bf16.mxu0 0
        %2638 = vmatpush1.bf16.xpose.msra.mxu0 %v2615
        %2639 = vmatprep.subr.bf16.mxu0 0
        %2640 = vmatpush1.bf16.xpose.msra.mxu0 %v2618
        %2641 = vmatprep.subr.bf16.mxu0 0
        %2642 = vmatpush1.bf16.xpose.msra.mxu0 %v2621
        %2643 = vmatprep.subr.bf16.mxu0 0
        %2644 = vmatpush1.bf16.xpose.msra.mxu0 %v2624
        %2645 = vmatprep.subr.bf16.mxu0 0
        %2646 = vmatpush1.bf16.xpose.msra.mxu0 %v2627
        %2647 = vmatprep.subr.bf16.mxu0 0
        %2648 = vmatpush1.bf16.xpose.msra.mxu0 %v2630
        %2649 = vmatprep.subr.bf16.mxu0 0
        %2650 = vmatpush1.bf16.xpose.msra.mxu0 %v2633
        %2651 = vmatprep.subr.bf16.mxu0 0
        %2652 = vmatpush1.bf16.xpose.msra.mxu0 0
        %2653 = vmatprep.subr.bf16.mxu0 0
        %2654 = vmatpush1.bf16.xpose.msra.mxu0 0
        %2655 = vmatprep.subr.bf16.mxu0 0
        %2656 = vmatpush1.bf16.xpose.msra.mxu0 0
        %2657 = vmatprep.subr.bf16.mxu0 0
        %2658 = vmatpush1.bf16.xpose.msra.mxu0 0
        %2659 = vmatprep.subr.bf16.mxu0 0
        %2660 = vmatpush1.bf16.xpose.msra.mxu0 0
        %2661 = vmatprep.subr.bf16.mxu0 0
        %2662 = vmatpush1.bf16.xpose.msra.mxu0 0
        %2663 = vmatprep.subr.bf16.mxu0 0
        %2664 = vmatpush1.bf16.xpose.msra.mxu0 0
        %2665 = vmatprep.subr.bf16.mxu0 0
        %2666 = vmatpush1.bf16.xpose.msra.mxu0 0
        %2667 = vmatprep.mubr.bf16.mxu0 0
        %2668 = vmatmul.mubr.bf16.gmra.mrb[0].mxu0 %v2588
        %v2669 = vpop.f32.mrb[0].mxu0
        %v2670 = vadd.f32 %v752, %v2669
        %v2671 = vpop.f32.mrb[0].mxu0
        %v2672 = vpop.f32.mrb[0].mxu0
        %v2673 = vadd.f32 %v752, %v2672
        %v2674 = vpop.f32.mrb[0].mxu0
        %2675 = vmatprep.mubr.bf16.mxu0 0
        %2676 = vmatmul.mubr.bf16.gmra.mrb[0].mxu0 %v2591
        %v2677 = vpop.f32.mrb[0].mxu0
        %v2678 = vadd.f32 %v752, %v2677
        %v2679 = vpop.f32.mrb[0].mxu0
        %v2680 = vpop.f32.mrb[0].mxu0
        %v2681 = vadd.f32 %v752, %v2680
        %v2682 = vpop.f32.mrb[0].mxu0
        %2683 = vmatprep.mubr.bf16.mxu0 0
        %2684 = vmatmul.mubr.bf16.gmra.mrb[0].mxu0 %v2594
        %v2685 = vpop.f32.mrb[0].mxu0
        %v2686 = vadd.f32 %v752, %v2685
        %v2687 = vpop.f32.mrb[0].mxu0
        %v2688 = vpop.f32.mrb[0].mxu0
        %v2689 = vadd.f32 %v752, %v2688
        %v2690 = vpop.f32.mrb[0].mxu0
        %2691 = vmatprep.mubr.bf16.mxu0 0
        %2692 = vmatmul.mubr.bf16.gmra.mrb[0].mxu0 %v2597
        %v2693 = vpop.f32.mrb[0].mxu0
        %v2694 = vadd.f32 %v752, %v2693
        %v2695 = vpop.f32.mrb[0].mxu0
        %v2696 = vpop.f32.mrb[0].mxu0
        %v2697 = vadd.f32 %v752, %v2696
        %v2698 = vpop.f32.mrb[0].mxu0
        %2699 = vmatprep.mubr.bf16.mxu0 0
        %2700 = vmatmul.mubr.bf16.gmra.mrb[0].mxu0 %v2600
        %v2701 = vpop.f32.mrb[0].mxu0
        %v2702 = vadd.f32 %v752, %v2701
        %v2703 = vpop.f32.mrb[0].mxu0
        %v2704 = vpop.f32.mrb[0].mxu0
        %v2705 = vadd.f32 %v752, %v2704
        %v2706 = vpop.f32.mrb[0].mxu0
        %2707 = vmatprep.mubr.bf16.mxu0 0
        %2708 = vmatmul.mubr.bf16.gmra.mrb[0].mxu0 %v2603
        %v2709 = vpop.f32.mrb[0].mxu0
        %v2710 = vadd.f32 %v752, %v2709
        %v2711 = vpop.f32.mrb[0].mxu0
        %v2712 = vpop.f32.mrb[0].mxu0
        %v2713 = vadd.f32 %v752, %v2712
        %v2714 = vpop.f32.mrb[0].mxu0
        %2715 = vmatprep.mubr.bf16.mxu0 0
        %2716 = vmatmul.mubr.bf16.gmra.mrb[0].mxu0 %v2606
        %v2717 = vpop.f32.mrb[0].mxu0
        %v2718 = vadd.f32 %v752, %v2717
        %v2719 = vpop.f32.mrb[0].mxu0
        %v2720 = vpop.f32.mrb[0].mxu0
        %v2721 = vadd.f32 %v752, %v2720
        %v2722 = vpop.f32.mrb[0].mxu0
        %2723 = vmatprep.mubr.bf16.mxu0 0
        %2724 = vmatmul.mubr.bf16.gmra.mrb[0].mxu0 %v2609
        %v2725 = vpop.f32.mrb[0].mxu0
        %v2726 = vadd.f32 %v752, %v2725
        %v2727 = vpop.f32.mrb[0].mxu0
        %v2728 = vpop.f32.mrb[0].mxu0
        %v2729 = vadd.f32 %v752, %v2728
        %v2730 = vpop.f32.mrb[0].mxu0
        %2731 = vdwg.mxu0
        %2732 = vmax.xlane.f32.xlu0 %v2670
        %v2733 = vpop.xlane.xlu0 %2732
        %2734 = vmax.xlane.f32.xlu0 %v2673
        %v2735 = vpop.xlane.xlu0 %2734
        %2736 = vmax.xlane.f32.xlu0 %v2678
        %v2737 = vpop.xlane.xlu0 %2736
        %2738 = vmax.xlane.f32.xlu0 %v2681
        %v2739 = vpop.xlane.xlu0 %2738
        %2740 = vmax.xlane.f32.xlu0 %v2686
        %v2741 = vpop.xlane.xlu0 %2740
        %2742 = vmax.xlane.f32.xlu0 %v2689
        %v2743 = vpop.xlane.xlu0 %2742
        %2744 = vmax.xlane.f32.xlu0 %v2694
        %v2745 = vpop.xlane.xlu0 %2744
        %2746 = vmax.xlane.f32.xlu0 %v2697
        %v2747 = vpop.xlane.xlu0 %2746
        %2748 = vmax.xlane.f32.xlu0 %v2702
        %v2749 = vpop.xlane.xlu0 %2748
        %2750 = vmax.xlane.f32.xlu0 %v2705
        %v2751 = vpop.xlane.xlu0 %2750
        %2752 = vmax.xlane.f32.xlu0 %v2710
        %v2753 = vpop.xlane.xlu0 %2752
        %2754 = vmax.xlane.f32.xlu0 %v2713
        %v2755 = vpop.xlane.xlu0 %2754
        %2756 = vmax.xlane.f32.xlu0 %v2718
        %v2757 = vpop.xlane.xlu0 %2756
        %2758 = vmax.xlane.f32.xlu0 %v2721
        %v2759 = vpop.xlane.xlu0 %2758
        %2760 = vmax.xlane.f32.xlu0 %v2726
        %v2761 = vpop.xlane.xlu0 %2760
        %2762 = vmax.xlane.f32.xlu0 %v2729
        %v2763 = vpop.xlane.xlu0 %2762
        %v2764 = vsub.f32 %v2670, %v2733
        %v2765 = vsub.f32 %v2673, %v2735
        %v2766 = vsub.f32 %v2678, %v2737
        %v2767 = vsub.f32 %v2681, %v2739
        %v2768 = vsub.f32 %v2686, %v2741
        %v2769 = vsub.f32 %v2689, %v2743
        %v2770 = vsub.f32 %v2694, %v2745
        %v2771 = vsub.f32 %v2697, %v2747
        %v2772 = vsub.f32 %v2702, %v2749
        %v2773 = vsub.f32 %v2705, %v2751
        %v2774 = vsub.f32 %v2710, %v2753
        %v2775 = vsub.f32 %v2713, %v2755
        %v2776 = vsub.f32 %v2718, %v2757
        %v2777 = vsub.f32 %v2721, %v2759
        %v2778 = vsub.f32 %v2726, %v2761
        %v2779 = vsub.f32 %v2729, %v2763
        %v2780 = vmul.f32 %v2764, 1.442695
        %v2781 = vpow.pop %v2780
        %v2782 = vmul.f32 %v2765, 1.442695
        %v2783 = vpow.pop %v2782
        %v2784 = vmul.f32 %v2766, 1.442695
        %v2785 = vpow.pop %v2784
        %v2786 = vmul.f32 %v2767, 1.442695
        %v2787 = vpow.pop %v2786
        %v2788 = vmul.f32 %v2768, 1.442695
        %v2789 = vpow.pop %v2788
        %v2790 = vmul.f32 %v2769, 1.442695
        %v2791 = vpow.pop %v2790
        %v2792 = vmul.f32 %v2770, 1.442695
        %v2793 = vpow.pop %v2792
        %v2794 = vmul.f32 %v2771, 1.442695
        %v2795 = vpow.pop %v2794
        %v2796 = vmul.f32 %v2772, 1.442695
        %v2797 = vpow.pop %v2796
        %v2798 = vmul.f32 %v2773, 1.442695
        %v2799 = vpow.pop %v2798
        %v2800 = vmul.f32 %v2774, 1.442695
        %v2801 = vpow.pop %v2800
        %v2802 = vmul.f32 %v2775, 1.442695
        %v2803 = vpow.pop %v2802
        %v2804 = vmul.f32 %v2776, 1.442695
        %v2805 = vpow.pop %v2804
        %v2806 = vmul.f32 %v2777, 1.442695
        %v2807 = vpow.pop %v2806
        %v2808 = vmul.f32 %v2778, 1.442695
        %v2809 = vpow.pop %v2808
        %v2810 = vmul.f32 %v2779, 1.442695
        %v2811 = vpow.pop %v2810
        %2812 = vadd.xlane.f32.xlu0 %v2781
        %v2813 = vpop.xlane.xlu0 %2812
        %2814 = vadd.xlane.f32.xlu0 %v2783
        %v2815 = vpop.xlane.xlu0 %2814
        %2816 = vadd.xlane.f32.xlu0 %v2785
        %v2817 = vpop.xlane.xlu0 %2816
        %2818 = vadd.xlane.f32.xlu0 %v2787
        %v2819 = vpop.xlane.xlu0 %2818
        %2820 = vadd.xlane.f32.xlu0 %v2789
        %v2821 = vpop.xlane.xlu0 %2820
        %2822 = vadd.xlane.f32.xlu0 %v2791
        %v2823 = vpop.xlane.xlu0 %2822
        %2824 = vadd.xlane.f32.xlu0 %v2793
        %v2825 = vpop.xlane.xlu0 %2824
        %2826 = vadd.xlane.f32.xlu0 %v2795
        %v2827 = vpop.xlane.xlu0 %2826
        %2828 = vadd.xlane.f32.xlu0 %v2797
        %v2829 = vpop.xlane.xlu0 %2828
        %2830 = vadd.xlane.f32.xlu0 %v2799
        %v2831 = vpop.xlane.xlu0 %2830
        %2832 = vadd.xlane.f32.xlu0 %v2801
        %v2833 = vpop.xlane.xlu0 %2832
        %2834 = vadd.xlane.f32.xlu0 %v2803
        %v2835 = vpop.xlane.xlu0 %2834
        %2836 = vadd.xlane.f32.xlu0 %v2805
        %v2837 = vpop.xlane.xlu0 %2836
        %2838 = vadd.xlane.f32.xlu0 %v2807
        %v2839 = vpop.xlane.xlu0 %2838
        %2840 = vadd.xlane.f32.xlu0 %v2809
        %v2841 = vpop.xlane.xlu0 %2840
        %2842 = vadd.xlane.f32.xlu0 %v2811
        %v2843 = vpop.xlane.xlu0 %2842
        %v2844 = vpack.c.bf16 %v2783, %v2781
        %v2845 = vpack.c.bf16 %v2787, %v2785
        %v2846 = vpack.c.bf16 %v2791, %v2789
        %v2847 = vpack.c.bf16 %v2795, %v2793
        %v2848 = vpack.c.bf16 %v2799, %v2797
        %v2849 = vpack.c.bf16 %v2803, %v2801
        %v2850 = vpack.c.bf16 %v2807, %v2805
        %v2851 = vpack.c.bf16 %v2811, %v2809
        %2852 = vrot.lane.b32.xlu0 %v723, 112
        %v2853 = vpop.permute.xlu0 %2852
        %2854 = vrot.lane.b32.xlu0 %v726, 112
        %v2855 = vpop.permute.xlu0 %2854
        %2856 = vrot.lane.b32.xlu0 %v729, 112
        %v2857 = vpop.permute.xlu0 %2856
        %2858 = vrot.lane.b32.xlu0 %v732, 112
        %v2859 = vpop.permute.xlu0 %2858
        %2860 = vrot.lane.b32.xlu0 %v735, 112
        %v2861 = vpop.permute.xlu0 %2860
        %2862 = vrot.lane.b32.xlu0 %v738, 112
        %v2863 = vpop.permute.xlu0 %2862
        %2864 = vrot.lane.b32.xlu0 %v741, 112
        %v2865 = vpop.permute.xlu0 %2864
        %2866 = vrot.lane.b32.xlu0 %v744, 112
        %v2867 = vpop.permute.xlu0 %2866
        %2876 = vmatprep.subr.bf16.mxu0 0
        %2877 = vmatpush1.bf16.msra.mxu0 %v2853
        %2878 = vmatprep.subr.bf16.mxu0 0
        %2879 = vmatpush1.bf16.msra.mxu0 %v2855
        %2880 = vmatprep.subr.bf16.mxu0 0
        %2881 = vmatpush1.bf16.msra.mxu0 %v2857
        %2882 = vmatprep.subr.bf16.mxu0 0
        %2883 = vmatpush1.bf16.msra.mxu0 %v2859
        %2884 = vmatprep.subr.bf16.mxu0 0
        %2885 = vmatpush1.bf16.msra.mxu0 %v2861
        %2886 = vmatprep.subr.bf16.mxu0 0
        %2887 = vmatpush1.bf16.msra.mxu0 %v2863
        %2888 = vmatprep.subr.bf16.mxu0 0
        %2889 = vmatpush1.bf16.msra.mxu0 %v2865
        %2890 = vmatprep.subr.bf16.mxu0 0
        %2891 = vmatpush1.bf16.msra.mxu0 %v2867
        %2892 = vmatprep.subr.bf16.mxu0 0
        %2893 = vmatpush1.bf16.msra.mxu0 0
        %2894 = vmatprep.subr.bf16.mxu0 0
        %2895 = vmatpush1.bf16.msra.mxu0 0
        %2896 = vmatprep.subr.bf16.mxu0 0
        %2897 = vmatpush1.bf16.msra.mxu0 0
        %2898 = vmatprep.subr.bf16.mxu0 0
        %2899 = vmatpush1.bf16.msra.mxu0 0
        %2900 = vmatprep.subr.bf16.mxu0 0
        %2901 = vmatpush1.bf16.msra.mxu0 0
        %2902 = vmatprep.subr.bf16.mxu0 0
        %2903 = vmatpush1.bf16.msra.mxu0 0
        %2904 = vmatprep.subr.bf16.mxu0 0
        %2905 = vmatpush1.bf16.msra.mxu0 0
        %2906 = vmatprep.subr.bf16.mxu0 0
        %2907 = vmatpush1.bf16.msra.mxu0 0
        %2908 = vmatprep.mubr.bf16.mxu0 0
        %2909 = vmatmul.mubr.bf16.gmra.mrb[0].mxu0 %v2844
        %v2910 = vpop.f32.mrb[0].mxu0
        %v2911 = vadd.f32 0.0, %v2910
        %v2912 = vpop.f32.mrb[0].mxu0
        %v2913 = vpop.f32.mrb[0].mxu0
        %v2914 = vadd.f32 0.0, %v2913
        %v2915 = vpop.f32.mrb[0].mxu0
        %2916 = vmatprep.mubr.bf16.mxu0 0
        %2917 = vmatmul.mubr.bf16.gmra.mrb[0].mxu0 %v2845
        %v2918 = vpop.f32.mrb[0].mxu0
        %v2919 = vadd.f32 0.0, %v2918
        %v2920 = vpop.f32.mrb[0].mxu0
        %v2921 = vpop.f32.mrb[0].mxu0
        %v2922 = vadd.f32 0.0, %v2921
        %v2923 = vpop.f32.mrb[0].mxu0
        %2924 = vmatprep.mubr.bf16.mxu0 0
        %2925 = vmatmul.mubr.bf16.gmra.mrb[0].mxu0 %v2846
        %v2926 = vpop.f32.mrb[0].mxu0
        %v2927 = vadd.f32 0.0, %v2926
        %v2928 = vpop.f32.mrb[0].mxu0
        %v2929 = vpop.f32.mrb[0].mxu0
        %v2930 = vadd.f32 0.0, %v2929
        %v2931 = vpop.f32.mrb[0].mxu0
        %2932 = vmatprep.mubr.bf16.mxu0 0
        %2933 = vmatmul.mubr.bf16.gmra.mrb[0].mxu0 %v2847
        %v2934 = vpop.f32.mrb[0].mxu0
        %v2935 = vadd.f32 0.0, %v2934
        %v2936 = vpop.f32.mrb[0].mxu0
        %v2937 = vpop.f32.mrb[0].mxu0
        %v2938 = vadd.f32 0.0, %v2937
        %v2939 = vpop.f32.mrb[0].mxu0
        %2940 = vmatprep.mubr.bf16.mxu0 0
        %2941 = vmatmul.mubr.bf16.gmra.mrb[0].mxu0 %v2848
        %v2942 = vpop.f32.mrb[0].mxu0
        %v2943 = vadd.f32 0.0, %v2942
        %v2944 = vpop.f32.mrb[0].mxu0
        %v2945 = vpop.f32.mrb[0].mxu0
        %v2946 = vadd.f32 0.0, %v2945
        %v2947 = vpop.f32.mrb[0].mxu0
        %2948 = vmatprep.mubr.bf16.mxu0 0
        %2949 = vmatmul.mubr.bf16.gmra.mrb[0].mxu0 %v2849
        %v2950 = vpop.f32.mrb[0].mxu0
        %v2951 = vadd.f32 0.0, %v2950
        %v2952 = vpop.f32.mrb[0].mxu0
        %v2953 = vpop.f32.mrb[0].mxu0
        %v2954 = vadd.f32 0.0, %v2953
        %v2955 = vpop.f32.mrb[0].mxu0
        %2956 = vmatprep.mubr.bf16.mxu0 0
        %2957 = vmatmul.mubr.bf16.gmra.mrb[0].mxu0 %v2850
        %v2958 = vpop.f32.mrb[0].mxu0
        %v2959 = vadd.f32 0.0, %v2958
        %v2960 = vpop.f32.mrb[0].mxu0
        %v2961 = vpop.f32.mrb[0].mxu0
        %v2962 = vadd.f32 0.0, %v2961
        %v2963 = vpop.f32.mrb[0].mxu0
        %2964 = vmatprep.mubr.bf16.mxu0 0
        %2965 = vmatmul.mubr.bf16.gmra.mrb[0].mxu0 %v2851
        %v2966 = vpop.f32.mrb[0].mxu0
        %v2967 = vadd.f32 0.0, %v2966
        %v2968 = vpop.f32.mrb[0].mxu0
        %v2969 = vpop.f32.mrb[0].mxu0
        %v2970 = vadd.f32 0.0, %v2969
        %v2971 = vpop.f32.mrb[0].mxu0
        %2972 = vdwg.mxu0
        %v2973 = vrcp.pop %v2813
        %v2974 = vrcp.pop %v2815
        %v2975 = vrcp.pop %v2817
        %v2976 = vrcp.pop %v2819
        %v2977 = vrcp.pop %v2821
        %v2978 = vrcp.pop %v2823
        %v2979 = vrcp.pop %v2825
        %v2980 = vrcp.pop %v2827
        %v2981 = vrcp.pop %v2829
        %v2982 = vrcp.pop %v2831
        %v2983 = vrcp.pop %v2833
        %v2984 = vrcp.pop %v2835
        %v2985 = vrcp.pop %v2837
        %v2986 = vrcp.pop %v2839
        %v2987 = vrcp.pop %v2841
        %v2988 = vrcp.pop %v2843
        %v2989 = vmul.f32 %v2911, %v2973
        %v2990 = vmul.f32 %v2914, %v2974
        %v2991 = vmul.f32 %v2919, %v2975
        %v2992 = vmul.f32 %v2922, %v2976
        %v2993 = vmul.f32 %v2927, %v2977
        %v2994 = vmul.f32 %v2930, %v2978
        %v2995 = vmul.f32 %v2935, %v2979
        %v2996 = vmul.f32 %v2938, %v2980
        %v2997 = vmul.f32 %v2943, %v2981
        %v2998 = vmul.f32 %v2946, %v2982
        %v2999 = vmul.f32 %v2951, %v2983
        %v3000 = vmul.f32 %v2954, %v2984
        %v3001 = vmul.f32 %v2959, %v2985
        %v3002 = vmul.f32 %v2962, %v2986
        %v3003 = vmul.f32 %v2967, %v2987
        %v3004 = vmul.f32 %v2970, %v2988
        %v3005 = vpack.c.bf16 %v2990, %v2989
        %v3006 = vpack.c.bf16 %v2992, %v2991
        %v3007 = vpack.c.bf16 %v2994, %v2993
        %v3008 = vpack.c.bf16 %v2996, %v2995
        %v3009 = vpack.c.bf16 %v2998, %v2997
        %v3010 = vpack.c.bf16 %v3000, %v2999
        %v3011 = vpack.c.bf16 %v3002, %v3001
        %v3012 = vpack.c.bf16 %v3004, %v3003
        %3013 = vrot.lane.b32.xlu0 %v721, 108
        %v3014 = vpop.permute.xlu0 %3013
        %3015 = vrot.lane.b32.xlu0 %v724, 108
        %v3016 = vpop.permute.xlu0 %3015
        %3017 = vrot.lane.b32.xlu0 %v727, 108
        %v3018 = vpop.permute.xlu0 %3017
        %3019 = vrot.lane.b32.xlu0 %v730, 108
        %v3020 = vpop.permute.xlu0 %3019
        %3021 = vrot.lane.b32.xlu0 %v733, 108
        %v3022 = vpop.permute.xlu0 %3021
        %3023 = vrot.lane.b32.xlu0 %v736, 108
        %v3024 = vpop.permute.xlu0 %3023
        %3025 = vrot.lane.b32.xlu0 %v739, 108
        %v3026 = vpop.permute.xlu0 %3025
        %3027 = vrot.lane.b32.xlu0 %v742, 108
        %v3028 = vpop.permute.xlu0 %3027
        %3029 = vrot.lane.b32.xlu0 %v722, 108
        %v3030 = vpop.permute.xlu0 %3029
        %3031 = vrot.lane.b32.xlu0 %v725, 108
        %v3032 = vpop.permute.xlu0 %3031
        %3033 = vrot.lane.b32.xlu0 %v728, 108
        %v3034 = vpop.permute.xlu0 %3033
        %3035 = vrot.lane.b32.xlu0 %v731, 108
        %v3036 = vpop.permute.xlu0 %3035
        %3037 = vrot.lane.b32.xlu0 %v734, 108
        %v3038 = vpop.permute.xlu0 %3037
        %3039 = vrot.lane.b32.xlu0 %v737, 108
        %v3040 = vpop.permute.xlu0 %3039
        %3041 = vrot.lane.b32.xlu0 %v740, 108
        %v3042 = vpop.permute.xlu0 %3041
        %3043 = vrot.lane.b32.xlu0 %v743, 108
        %v3044 = vpop.permute.xlu0 %3043
        %v3046 = vsel %vm754, %v3014, 0
        %v3049 = vsel %vm754, %v3016, 0
        %v3052 = vsel %vm754, %v3018, 0
        %v3055 = vsel %vm754, %v3020, 0
        %v3058 = vsel %vm754, %v3022, 0
        %v3061 = vsel %vm754, %v3024, 0
        %v3064 = vsel %vm754, %v3026, 0
        %v3067 = vsel %vm754, %v3028, 0
        %v3070 = vsel %vm754, %v3030, 0
        %v3073 = vsel %vm754, %v3032, 0
        %v3076 = vsel %vm754, %v3034, 0
        %v3079 = vsel %vm754, %v3036, 0
        %v3082 = vsel %vm754, %v3038, 0
        %v3085 = vsel %vm754, %v3040, 0
        %v3088 = vsel %vm754, %v3042, 0
        %v3091 = vsel %vm754, %v3044, 0
        %3093 = vmatprep.subr.bf16.mxu0 0
        %3094 = vmatpush1.bf16.xpose.msra.mxu0 %v3070
        %3095 = vmatprep.subr.bf16.mxu0 0
        %3096 = vmatpush1.bf16.xpose.msra.mxu0 %v3073
        %3097 = vmatprep.subr.bf16.mxu0 0
        %3098 = vmatpush1.bf16.xpose.msra.mxu0 %v3076
        %3099 = vmatprep.subr.bf16.mxu0 0
        %3100 = vmatpush1.bf16.xpose.msra.mxu0 %v3079
        %3101 = vmatprep.subr.bf16.mxu0 0
        %3102 = vmatpush1.bf16.xpose.msra.mxu0 %v3082
        %3103 = vmatprep.subr.bf16.mxu0 0
        %3104 = vmatpush1.bf16.xpose.msra.mxu0 %v3085
        %3105 = vmatprep.subr.bf16.mxu0 0
        %3106 = vmatpush1.bf16.xpose.msra.mxu0 %v3088
        %3107 = vmatprep.subr.bf16.mxu0 0
        %3108 = vmatpush1.bf16.xpose.msra.mxu0 %v3091
        %3109 = vmatprep.subr.bf16.mxu0 0
        %3110 = vmatpush1.bf16.xpose.msra.mxu0 0
        %3111 = vmatprep.subr.bf16.mxu0 0
        %3112 = vmatpush1.bf16.xpose.msra.mxu0 0
        %3113 = vmatprep.subr.bf16.mxu0 0
        %3114 = vmatpush1.bf16.xpose.msra.mxu0 0
        %3115 = vmatprep.subr.bf16.mxu0 0
        %3116 = vmatpush1.bf16.xpose.msra.mxu0 0
        %3117 = vmatprep.subr.bf16.mxu0 0
        %3118 = vmatpush1.bf16.xpose.msra.mxu0 0
        %3119 = vmatprep.subr.bf16.mxu0 0
        %3120 = vmatpush1.bf16.xpose.msra.mxu0 0
        %3121 = vmatprep.subr.bf16.mxu0 0
        %3122 = vmatpush1.bf16.xpose.msra.mxu0 0
        %3123 = vmatprep.subr.bf16.mxu0 0
        %3124 = vmatpush1.bf16.xpose.msra.mxu0 0
        %3125 = vmatprep.mubr.bf16.mxu0 0
        %3126 = vmatmul.mubr.bf16.gmra.mrb[0].mxu0 %v3046
        %v3127 = vpop.f32.mrb[0].mxu0
        %v3128 = vadd.f32 %v752, %v3127
        %v3129 = vpop.f32.mrb[0].mxu0
        %v3130 = vpop.f32.mrb[0].mxu0
        %v3131 = vadd.f32 %v752, %v3130
        %v3132 = vpop.f32.mrb[0].mxu0
        %3133 = vmatprep.mubr.bf16.mxu0 0
        %3134 = vmatmul.mubr.bf16.gmra.mrb[0].mxu0 %v3049
        %v3135 = vpop.f32.mrb[0].mxu0
        %v3136 = vadd.f32 %v752, %v3135
        %v3137 = vpop.f32.mrb[0].mxu0
        %v3138 = vpop.f32.mrb[0].mxu0
        %v3139 = vadd.f32 %v752, %v3138
        %v3140 = vpop.f32.mrb[0].mxu0
        %3141 = vmatprep.mubr.bf16.mxu0 0
        %3142 = vmatmul.mubr.bf16.gmra.mrb[0].mxu0 %v3052
        %v3143 = vpop.f32.mrb[0].mxu0
        %v3144 = vadd.f32 %v752, %v3143
        %v3145 = vpop.f32.mrb[0].mxu0
        %v3146 = vpop.f32.mrb[0].mxu0
        %v3147 = vadd.f32 %v752, %v3146
        %v3148 = vpop.f32.mrb[0].mxu0
        %3149 = vmatprep.mubr.bf16.mxu0 0
        %3150 = vmatmul.mubr.bf16.gmra.mrb[0].mxu0 %v3055
        %v3151 = vpop.f32.mrb[0].mxu0
        %v3152 = vadd.f32 %v752, %v3151
        %v3153 = vpop.f32.mrb[0].mxu0
        %v3154 = vpop.f32.mrb[0].mxu0
        %v3155 = vadd.f32 %v752, %v3154
        %v3156 = vpop.f32.mrb[0].mxu0
        %3157 = vmatprep.mubr.bf16.mxu0 0
        %3158 = vmatmul.mubr.bf16.gmra.mrb[0].mxu0 %v3058
        %v3159 = vpop.f32.mrb[0].mxu0
        %v3160 = vadd.f32 %v752, %v3159
        %v3161 = vpop.f32.mrb[0].mxu0
        %v3162 = vpop.f32.mrb[0].mxu0
        %v3163 = vadd.f32 %v752, %v3162
        %v3164 = vpop.f32.mrb[0].mxu0
        %3165 = vmatprep.mubr.bf16.mxu0 0
        %3166 = vmatmul.mubr.bf16.gmra.mrb[0].mxu0 %v3061
        %v3167 = vpop.f32.mrb[0].mxu0
        %v3168 = vadd.f32 %v752, %v3167
        %v3169 = vpop.f32.mrb[0].mxu0
        %v3170 = vpop.f32.mrb[0].mxu0
        %v3171 = vadd.f32 %v752, %v3170
        %v3172 = vpop.f32.mrb[0].mxu0
        %3173 = vmatprep.mubr.bf16.mxu0 0
        %3174 = vmatmul.mubr.bf16.gmra.mrb[0].mxu0 %v3064
        %v3175 = vpop.f32.mrb[0].mxu0
        %v3176 = vadd.f32 %v752, %v3175
        %v3177 = vpop.f32.mrb[0].mxu0
        %v3178 = vpop.f32.mrb[0].mxu0
        %v3179 = vadd.f32 %v752, %v3178
        %v3180 = vpop.f32.mrb[0].mxu0
        %3181 = vmatprep.mubr.bf16.mxu0 0
        %3182 = vmatmul.mubr.bf16.gmra.mrb[0].mxu0 %v3067
        %v3183 = vpop.f32.mrb[0].mxu0
        %v3184 = vadd.f32 %v752, %v3183
        %v3185 = vpop.f32.mrb[0].mxu0
        %v3186 = vpop.f32.mrb[0].mxu0
        %v3187 = vadd.f32 %v752, %v3186
        %v3188 = vpop.f32.mrb[0].mxu0
        %3189 = vdwg.mxu0
        %3190 = vmax.xlane.f32.xlu0 %v3128
        %v3191 = vpop.xlane.xlu0 %3190
        %3192 = vmax.xlane.f32.xlu0 %v3131
        %v3193 = vpop.xlane.xlu0 %3192
        %3194 = vmax.xlane.f32.xlu0 %v3136
        %v3195 = vpop.xlane.xlu0 %3194
        %3196 = vmax.xlane.f32.xlu0 %v3139
        %v3197 = vpop.xlane.xlu0 %3196
        %3198 = vmax.xlane.f32.xlu0 %v3144
        %v3199 = vpop.xlane.xlu0 %3198
        %3200 = vmax.xlane.f32.xlu0 %v3147
        %v3201 = vpop.xlane.xlu0 %3200
        %3202 = vmax.xlane.f32.xlu0 %v3152
        %v3203 = vpop.xlane.xlu0 %3202
        %3204 = vmax.xlane.f32.xlu0 %v3155
        %v3205 = vpop.xlane.xlu0 %3204
        %3206 = vmax.xlane.f32.xlu0 %v3160
        %v3207 = vpop.xlane.xlu0 %3206
        %3208 = vmax.xlane.f32.xlu0 %v3163
        %v3209 = vpop.xlane.xlu0 %3208
        %3210 = vmax.xlane.f32.xlu0 %v3168
        %v3211 = vpop.xlane.xlu0 %3210
        %3212 = vmax.xlane.f32.xlu0 %v3171
        %v3213 = vpop.xlane.xlu0 %3212
        %3214 = vmax.xlane.f32.xlu0 %v3176
        %v3215 = vpop.xlane.xlu0 %3214
        %3216 = vmax.xlane.f32.xlu0 %v3179
        %v3217 = vpop.xlane.xlu0 %3216
        %3218 = vmax.xlane.f32.xlu0 %v3184
        %v3219 = vpop.xlane.xlu0 %3218
        %3220 = vmax.xlane.f32.xlu0 %v3187
        %v3221 = vpop.xlane.xlu0 %3220
        %v3222 = vsub.f32 %v3128, %v3191
        %v3223 = vsub.f32 %v3131, %v3193
        %v3224 = vsub.f32 %v3136, %v3195
        %v3225 = vsub.f32 %v3139, %v3197
        %v3226 = vsub.f32 %v3144, %v3199
        %v3227 = vsub.f32 %v3147, %v3201
        %v3228 = vsub.f32 %v3152, %v3203
        %v3229 = vsub.f32 %v3155, %v3205
        %v3230 = vsub.f32 %v3160, %v3207
        %v3231 = vsub.f32 %v3163, %v3209
        %v3232 = vsub.f32 %v3168, %v3211
        %v3233 = vsub.f32 %v3171, %v3213
        %v3234 = vsub.f32 %v3176, %v3215
        %v3235 = vsub.f32 %v3179, %v3217
        %v3236 = vsub.f32 %v3184, %v3219
        %v3237 = vsub.f32 %v3187, %v3221
        %v3238 = vmul.f32 %v3222, 1.442695
        %v3239 = vpow.pop %v3238
        %v3240 = vmul.f32 %v3223, 1.442695
        %v3241 = vpow.pop %v3240
        %v3242 = vmul.f32 %v3224, 1.442695
        %v3243 = vpow.pop %v3242
        %v3244 = vmul.f32 %v3225, 1.442695
        %v3245 = vpow.pop %v3244
        %v3246 = vmul.f32 %v3226, 1.442695
        %v3247 = vpow.pop %v3246
        %v3248 = vmul.f32 %v3227, 1.442695
        %v3249 = vpow.pop %v3248
        %v3250 = vmul.f32 %v3228, 1.442695
        %v3251 = vpow.pop %v3250
        %v3252 = vmul.f32 %v3229, 1.442695
        %v3253 = vpow.pop %v3252
        %v3254 = vmul.f32 %v3230, 1.442695
        %v3255 = vpow.pop %v3254
        %v3256 = vmul.f32 %v3231, 1.442695
        %v3257 = vpow.pop %v3256
        %v3258 = vmul.f32 %v3232, 1.442695
        %v3259 = vpow.pop %v3258
        %v3260 = vmul.f32 %v3233, 1.442695
        %v3261 = vpow.pop %v3260
        %v3262 = vmul.f32 %v3234, 1.442695
        %v3263 = vpow.pop %v3262
        %v3264 = vmul.f32 %v3235, 1.442695
        %v3265 = vpow.pop %v3264
        %v3266 = vmul.f32 %v3236, 1.442695
        %v3267 = vpow.pop %v3266
        %v3268 = vmul.f32 %v3237, 1.442695
        %v3269 = vpow.pop %v3268
        %3270 = vadd.xlane.f32.xlu0 %v3239
        %v3271 = vpop.xlane.xlu0 %3270
        %3272 = vadd.xlane.f32.xlu0 %v3241
        %v3273 = vpop.xlane.xlu0 %3272
        %3274 = vadd.xlane.f32.xlu0 %v3243
        %v3275 = vpop.xlane.xlu0 %3274
        %3276 = vadd.xlane.f32.xlu0 %v3245
        %v3277 = vpop.xlane.xlu0 %3276
        %3278 = vadd.xlane.f32.xlu0 %v3247
        %v3279 = vpop.xlane.xlu0 %3278
        %3280 = vadd.xlane.f32.xlu0 %v3249
        %v3281 = vpop.xlane.xlu0 %3280
        %3282 = vadd.xlane.f32.xlu0 %v3251
        %v3283 = vpop.xlane.xlu0 %3282
        %3284 = vadd.xlane.f32.xlu0 %v3253
        %v3285 = vpop.xlane.xlu0 %3284
        %3286 = vadd.xlane.f32.xlu0 %v3255
        %v3287 = vpop.xlane.xlu0 %3286
        %3288 = vadd.xlane.f32.xlu0 %v3257
        %v3289 = vpop.xlane.xlu0 %3288
        %3290 = vadd.xlane.f32.xlu0 %v3259
        %v3291 = vpop.xlane.xlu0 %3290
        %3292 = vadd.xlane.f32.xlu0 %v3261
        %v3293 = vpop.xlane.xlu0 %3292
        %3294 = vadd.xlane.f32.xlu0 %v3263
        %v3295 = vpop.xlane.xlu0 %3294
        %3296 = vadd.xlane.f32.xlu0 %v3265
        %v3297 = vpop.xlane.xlu0 %3296
        %3298 = vadd.xlane.f32.xlu0 %v3267
        %v3299 = vpop.xlane.xlu0 %3298
        %3300 = vadd.xlane.f32.xlu0 %v3269
        %v3301 = vpop.xlane.xlu0 %3300
        %v3302 = vpack.c.bf16 %v3241, %v3239
        %v3303 = vpack.c.bf16 %v3245, %v3243
        %v3304 = vpack.c.bf16 %v3249, %v3247
        %v3305 = vpack.c.bf16 %v3253, %v3251
        %v3306 = vpack.c.bf16 %v3257, %v3255
        %v3307 = vpack.c.bf16 %v3261, %v3259
        %v3308 = vpack.c.bf16 %v3265, %v3263
        %v3309 = vpack.c.bf16 %v3269, %v3267
        %3310 = vrot.lane.b32.xlu0 %v723, 108
        %v3311 = vpop.permute.xlu0 %3310
        %3312 = vrot.lane.b32.xlu0 %v726, 108
        %v3313 = vpop.permute.xlu0 %3312
        %3314 = vrot.lane.b32.xlu0 %v729, 108
        %v3315 = vpop.permute.xlu0 %3314
        %3316 = vrot.lane.b32.xlu0 %v732, 108
        %v3317 = vpop.permute.xlu0 %3316
        %3318 = vrot.lane.b32.xlu0 %v735, 108
        %v3319 = vpop.permute.xlu0 %3318
        %3320 = vrot.lane.b32.xlu0 %v738, 108
        %v3321 = vpop.permute.xlu0 %3320
        %3322 = vrot.lane.b32.xlu0 %v741, 108
        %v3323 = vpop.permute.xlu0 %3322
        %3324 = vrot.lane.b32.xlu0 %v744, 108
        %v3325 = vpop.permute.xlu0 %3324
        %3334 = vmatprep.subr.bf16.mxu0 0
        %3335 = vmatpush1.bf16.msra.mxu0 %v3311
        %3336 = vmatprep.subr.bf16.mxu0 0
        %3337 = vmatpush1.bf16.msra.mxu0 %v3313
        %3338 = vmatprep.subr.bf16.mxu0 0
        %3339 = vmatpush1.bf16.msra.mxu0 %v3315
        %3340 = vmatprep.subr.bf16.mxu0 0
        %3341 = vmatpush1.bf16.msra.mxu0 %v3317
        %3342 = vmatprep.subr.bf16.mxu0 0
        %3343 = vmatpush1.bf16.msra.mxu0 %v3319
        %3344 = vmatprep.subr.bf16.mxu0 0
        %3345 = vmatpush1.bf16.msra.mxu0 %v3321
        %3346 = vmatprep.subr.bf16.mxu0 0
        %3347 = vmatpush1.bf16.msra.mxu0 %v3323
        %3348 = vmatprep.subr.bf16.mxu0 0
        %3349 = vmatpush1.bf16.msra.mxu0 %v3325
        %3350 = vmatprep.subr.bf16.mxu0 0
        %3351 = vmatpush1.bf16.msra.mxu0 0
        %3352 = vmatprep.subr.bf16.mxu0 0
        %3353 = vmatpush1.bf16.msra.mxu0 0
        %3354 = vmatprep.subr.bf16.mxu0 0
        %3355 = vmatpush1.bf16.msra.mxu0 0
        %3356 = vmatprep.subr.bf16.mxu0 0
        %3357 = vmatpush1.bf16.msra.mxu0 0
        %3358 = vmatprep.subr.bf16.mxu0 0
        %3359 = vmatpush1.bf16.msra.mxu0 0
        %3360 = vmatprep.subr.bf16.mxu0 0
        %3361 = vmatpush1.bf16.msra.mxu0 0
        %3362 = vmatprep.subr.bf16.mxu0 0
        %3363 = vmatpush1.bf16.msra.mxu0 0
        %3364 = vmatprep.subr.bf16.mxu0 0
        %3365 = vmatpush1.bf16.msra.mxu0 0
        %3366 = vmatprep.mubr.bf16.mxu0 0
        %3367 = vmatmul.mubr.bf16.gmra.mrb[0].mxu0 %v3302
        %v3368 = vpop.f32.mrb[0].mxu0
        %v3369 = vadd.f32 0.0, %v3368
        %v3370 = vpop.f32.mrb[0].mxu0
        %v3371 = vpop.f32.mrb[0].mxu0
        %v3372 = vadd.f32 0.0, %v3371
        %v3373 = vpop.f32.mrb[0].mxu0
        %3374 = vmatprep.mubr.bf16.mxu0 0
        %3375 = vmatmul.mubr.bf16.gmra.mrb[0].mxu0 %v3303
        %v3376 = vpop.f32.mrb[0].mxu0
        %v3377 = vadd.f32 0.0, %v3376
        %v3378 = vpop.f32.mrb[0].mxu0
        %v3379 = vpop.f32.mrb[0].mxu0
        %v3380 = vadd.f32 0.0, %v3379
        %v3381 = vpop.f32.mrb[0].mxu0
        %3382 = vmatprep.mubr.bf16.mxu0 0
        %3383 = vmatmul.mubr.bf16.gmra.mrb[0].mxu0 %v3304
        %v3384 = vpop.f32.mrb[0].mxu0
        %v3385 = vadd.f32 0.0, %v3384
        %v3386 = vpop.f32.mrb[0].mxu0
        %v3387 = vpop.f32.mrb[0].mxu0
        %v3388 = vadd.f32 0.0, %v3387
        %v3389 = vpop.f32.mrb[0].mxu0
        %3390 = vmatprep.mubr.bf16.mxu0 0
        %3391 = vmatmul.mubr.bf16.gmra.mrb[0].mxu0 %v3305
        %v3392 = vpop.f32.mrb[0].mxu0
        %v3393 = vadd.f32 0.0, %v3392
        %v3394 = vpop.f32.mrb[0].mxu0
        %v3395 = vpop.f32.mrb[0].mxu0
        %v3396 = vadd.f32 0.0, %v3395
        %v3397 = vpop.f32.mrb[0].mxu0
        %3398 = vmatprep.mubr.bf16.mxu0 0
        %3399 = vmatmul.mubr.bf16.gmra.mrb[0].mxu0 %v3306
        %v3400 = vpop.f32.mrb[0].mxu0
        %v3401 = vadd.f32 0.0, %v3400
        %v3402 = vpop.f32.mrb[0].mxu0
        %v3403 = vpop.f32.mrb[0].mxu0
        %v3404 = vadd.f32 0.0, %v3403
        %v3405 = vpop.f32.mrb[0].mxu0
        %3406 = vmatprep.mubr.bf16.mxu0 0
        %3407 = vmatmul.mubr.bf16.gmra.mrb[0].mxu0 %v3307
        %v3408 = vpop.f32.mrb[0].mxu0
        %v3409 = vadd.f32 0.0, %v3408
        %v3410 = vpop.f32.mrb[0].mxu0
        %v3411 = vpop.f32.mrb[0].mxu0
        %v3412 = vadd.f32 0.0, %v3411
        %v3413 = vpop.f32.mrb[0].mxu0
        %3414 = vmatprep.mubr.bf16.mxu0 0
        %3415 = vmatmul.mubr.bf16.gmra.mrb[0].mxu0 %v3308
        %v3416 = vpop.f32.mrb[0].mxu0
        %v3417 = vadd.f32 0.0, %v3416
        %v3418 = vpop.f32.mrb[0].mxu0
        %v3419 = vpop.f32.mrb[0].mxu0
        %v3420 = vadd.f32 0.0, %v3419
        %v3421 = vpop.f32.mrb[0].mxu0
        %3422 = vmatprep.mubr.bf16.mxu0 0
        %3423 = vmatmul.mubr.bf16.gmra.mrb[0].mxu0 %v3309
        %v3424 = vpop.f32.mrb[0].mxu0
        %v3425 = vadd.f32 0.0, %v3424
        %v3426 = vpop.f32.mrb[0].mxu0
        %v3427 = vpop.f32.mrb[0].mxu0
        %v3428 = vadd.f32 0.0, %v3427
        %v3429 = vpop.f32.mrb[0].mxu0
        %3430 = vdwg.mxu0
        %v3431 = vrcp.pop %v3271
        %v3432 = vrcp.pop %v3273
        %v3433 = vrcp.pop %v3275
        %v3434 = vrcp.pop %v3277
        %v3435 = vrcp.pop %v3279
        %v3436 = vrcp.pop %v3281
        %v3437 = vrcp.pop %v3283
        %v3438 = vrcp.pop %v3285
        %v3439 = vrcp.pop %v3287
        %v3440 = vrcp.pop %v3289
        %v3441 = vrcp.pop %v3291
        %v3442 = vrcp.pop %v3293
        %v3443 = vrcp.pop %v3295
        %v3444 = vrcp.pop %v3297
        %v3445 = vrcp.pop %v3299
        %v3446 = vrcp.pop %v3301
        %v3447 = vmul.f32 %v3369, %v3431
        %v3448 = vmul.f32 %v3372, %v3432
        %v3449 = vmul.f32 %v3377, %v3433
        %v3450 = vmul.f32 %v3380, %v3434
        %v3451 = vmul.f32 %v3385, %v3435
        %v3452 = vmul.f32 %v3388, %v3436
        %v3453 = vmul.f32 %v3393, %v3437
        %v3454 = vmul.f32 %v3396, %v3438
        %v3455 = vmul.f32 %v3401, %v3439
        %v3456 = vmul.f32 %v3404, %v3440
        %v3457 = vmul.f32 %v3409, %v3441
        %v3458 = vmul.f32 %v3412, %v3442
        %v3459 = vmul.f32 %v3417, %v3443
        %v3460 = vmul.f32 %v3420, %v3444
        %v3461 = vmul.f32 %v3425, %v3445
        %v3462 = vmul.f32 %v3428, %v3446
        %v3463 = vpack.c.bf16 %v3448, %v3447
        %v3464 = vpack.c.bf16 %v3450, %v3449
        %v3465 = vpack.c.bf16 %v3452, %v3451
        %v3466 = vpack.c.bf16 %v3454, %v3453
        %v3467 = vpack.c.bf16 %v3456, %v3455
        %v3468 = vpack.c.bf16 %v3458, %v3457
        %v3469 = vpack.c.bf16 %v3460, %v3459
        %v3470 = vpack.c.bf16 %v3462, %v3461
        %3471 = vrot.lane.b32.xlu0 %v721, 104
        %v3472 = vpop.permute.xlu0 %3471
        %3473 = vrot.lane.b32.xlu0 %v724, 104
        %v3474 = vpop.permute.xlu0 %3473
        %3475 = vrot.lane.b32.xlu0 %v727, 104
        %v3476 = vpop.permute.xlu0 %3475
        %3477 = vrot.lane.b32.xlu0 %v730, 104
        %v3478 = vpop.permute.xlu0 %3477
        %3479 = vrot.lane.b32.xlu0 %v733, 104
        %v3480 = vpop.permute.xlu0 %3479
        %3481 = vrot.lane.b32.xlu0 %v736, 104
        %v3482 = vpop.permute.xlu0 %3481
        %3483 = vrot.lane.b32.xlu0 %v739, 104
        %v3484 = vpop.permute.xlu0 %3483
        %3485 = vrot.lane.b32.xlu0 %v742, 104
        %v3486 = vpop.permute.xlu0 %3485
        %3487 = vrot.lane.b32.xlu0 %v722, 104
        %v3488 = vpop.permute.xlu0 %3487
        %3489 = vrot.lane.b32.xlu0 %v725, 104
        %v3490 = vpop.permute.xlu0 %3489
        %3491 = vrot.lane.b32.xlu0 %v728, 104
        %v3492 = vpop.permute.xlu0 %3491
        %3493 = vrot.lane.b32.xlu0 %v731, 104
        %v3494 = vpop.permute.xlu0 %3493
        %3495 = vrot.lane.b32.xlu0 %v734, 104
        %v3496 = vpop.permute.xlu0 %3495
        %3497 = vrot.lane.b32.xlu0 %v737, 104
        %v3498 = vpop.permute.xlu0 %3497
        %3499 = vrot.lane.b32.xlu0 %v740, 104
        %v3500 = vpop.permute.xlu0 %3499
        %3501 = vrot.lane.b32.xlu0 %v743, 104
        %v3502 = vpop.permute.xlu0 %3501
        %v3504 = vsel %vm754, %v3472, 0
        %v3507 = vsel %vm754, %v3474, 0
        %v3510 = vsel %vm754, %v3476, 0
        %v3513 = vsel %vm754, %v3478, 0
        %v3516 = vsel %vm754, %v3480, 0
        %v3519 = vsel %vm754, %v3482, 0
        %v3522 = vsel %vm754, %v3484, 0
        %v3525 = vsel %vm754, %v3486, 0
        %v3528 = vsel %vm754, %v3488, 0
        %v3531 = vsel %vm754, %v3490, 0
        %v3534 = vsel %vm754, %v3492, 0
        %v3537 = vsel %vm754, %v3494, 0
        %v3540 = vsel %vm754, %v3496, 0
        %v3543 = vsel %vm754, %v3498, 0
        %v3546 = vsel %vm754, %v3500, 0
        %v3549 = vsel %vm754, %v3502, 0
        %3551 = vmatprep.subr.bf16.mxu0 0
        %3552 = vmatpush1.bf16.xpose.msra.mxu0 %v3528
        %3553 = vmatprep.subr.bf16.mxu0 0
        %3554 = vmatpush1.bf16.xpose.msra.mxu0 %v3531
        %3555 = vmatprep.subr.bf16.mxu0 0
        %3556 = vmatpush1.bf16.xpose.msra.mxu0 %v3534
        %3557 = vmatprep.subr.bf16.mxu0 0
        %3558 = vmatpush1.bf16.xpose.msra.mxu0 %v3537
        %3559 = vmatprep.subr.bf16.mxu0 0
        %3560 = vmatpush1.bf16.xpose.msra.mxu0 %v3540
        %3561 = vmatprep.subr.bf16.mxu0 0
        %3562 = vmatpush1.bf16.xpose.msra.mxu0 %v3543
        %3563 = vmatprep.subr.bf16.mxu0 0
        %3564 = vmatpush1.bf16.xpose.msra.mxu0 %v3546
        %3565 = vmatprep.subr.bf16.mxu0 0
        %3566 = vmatpush1.bf16.xpose.msra.mxu0 %v3549
        %3567 = vmatprep.subr.bf16.mxu0 0
        %3568 = vmatpush1.bf16.xpose.msra.mxu0 0
        %3569 = vmatprep.subr.bf16.mxu0 0
        %3570 = vmatpush1.bf16.xpose.msra.mxu0 0
        %3571 = vmatprep.subr.bf16.mxu0 0
        %3572 = vmatpush1.bf16.xpose.msra.mxu0 0
        %3573 = vmatprep.subr.bf16.mxu0 0
        %3574 = vmatpush1.bf16.xpose.msra.mxu0 0
        %3575 = vmatprep.subr.bf16.mxu0 0
        %3576 = vmatpush1.bf16.xpose.msra.mxu0 0
        %3577 = vmatprep.subr.bf16.mxu0 0
        %3578 = vmatpush1.bf16.xpose.msra.mxu0 0
        %3579 = vmatprep.subr.bf16.mxu0 0
        %3580 = vmatpush1.bf16.xpose.msra.mxu0 0
        %3581 = vmatprep.subr.bf16.mxu0 0
        %3582 = vmatpush1.bf16.xpose.msra.mxu0 0
        %3583 = vmatprep.mubr.bf16.mxu0 0
        %3584 = vmatmul.mubr.bf16.gmra.mrb[0].mxu0 %v3504
        %v3585 = vpop.f32.mrb[0].mxu0
        %v3586 = vadd.f32 %v752, %v3585
        %v3587 = vpop.f32.mrb[0].mxu0
        %v3588 = vpop.f32.mrb[0].mxu0
        %v3589 = vadd.f32 %v752, %v3588
        %v3590 = vpop.f32.mrb[0].mxu0
        %3591 = vmatprep.mubr.bf16.mxu0 0
        %3592 = vmatmul.mubr.bf16.gmra.mrb[0].mxu0 %v3507
        %v3593 = vpop.f32.mrb[0].mxu0
        %v3594 = vadd.f32 %v752, %v3593
        %v3595 = vpop.f32.mrb[0].mxu0
        %v3596 = vpop.f32.mrb[0].mxu0
        %v3597 = vadd.f32 %v752, %v3596
        %v3598 = vpop.f32.mrb[0].mxu0
        %3599 = vmatprep.mubr.bf16.mxu0 0
        %3600 = vmatmul.mubr.bf16.gmra.mrb[0].mxu0 %v3510
        %v3601 = vpop.f32.mrb[0].mxu0
        %v3602 = vadd.f32 %v752, %v3601
        %v3603 = vpop.f32.mrb[0].mxu0
        %v3604 = vpop.f32.mrb[0].mxu0
        %v3605 = vadd.f32 %v752, %v3604
        %v3606 = vpop.f32.mrb[0].mxu0
        %3607 = vmatprep.mubr.bf16.mxu0 0
        %3608 = vmatmul.mubr.bf16.gmra.mrb[0].mxu0 %v3513
        %v3609 = vpop.f32.mrb[0].mxu0
        %v3610 = vadd.f32 %v752, %v3609
        %v3611 = vpop.f32.mrb[0].mxu0
        %v3612 = vpop.f32.mrb[0].mxu0
        %v3613 = vadd.f32 %v752, %v3612
        %v3614 = vpop.f32.mrb[0].mxu0
        %3615 = vmatprep.mubr.bf16.mxu0 0
        %3616 = vmatmul.mubr.bf16.gmra.mrb[0].mxu0 %v3516
        %v3617 = vpop.f32.mrb[0].mxu0
        %v3618 = vadd.f32 %v752, %v3617
        %v3619 = vpop.f32.mrb[0].mxu0
        %v3620 = vpop.f32.mrb[0].mxu0
        %v3621 = vadd.f32 %v752, %v3620
        %v3622 = vpop.f32.mrb[0].mxu0
        %3623 = vmatprep.mubr.bf16.mxu0 0
        %3624 = vmatmul.mubr.bf16.gmra.mrb[0].mxu0 %v3519
        %v3625 = vpop.f32.mrb[0].mxu0
        %v3626 = vadd.f32 %v752, %v3625
        %v3627 = vpop.f32.mrb[0].mxu0
        %v3628 = vpop.f32.mrb[0].mxu0
        %v3629 = vadd.f32 %v752, %v3628
        %v3630 = vpop.f32.mrb[0].mxu0
        %3631 = vmatprep.mubr.bf16.mxu0 0
        %3632 = vmatmul.mubr.bf16.gmra.mrb[0].mxu0 %v3522
        %v3633 = vpop.f32.mrb[0].mxu0
        %v3634 = vadd.f32 %v752, %v3633
        %v3635 = vpop.f32.mrb[0].mxu0
        %v3636 = vpop.f32.mrb[0].mxu0
        %v3637 = vadd.f32 %v752, %v3636
        %v3638 = vpop.f32.mrb[0].mxu0
        %3639 = vmatprep.mubr.bf16.mxu0 0
        %3640 = vmatmul.mubr.bf16.gmra.mrb[0].mxu0 %v3525
        %v3641 = vpop.f32.mrb[0].mxu0
        %v3642 = vadd.f32 %v752, %v3641
        %v3643 = vpop.f32.mrb[0].mxu0
        %v3644 = vpop.f32.mrb[0].mxu0
        %v3645 = vadd.f32 %v752, %v3644
        %v3646 = vpop.f32.mrb[0].mxu0
        %3647 = vdwg.mxu0
        %3648 = vmax.xlane.f32.xlu0 %v3586
        %v3649 = vpop.xlane.xlu0 %3648
        %3650 = vmax.xlane.f32.xlu0 %v3589
        %v3651 = vpop.xlane.xlu0 %3650
        %3652 = vmax.xlane.f32.xlu0 %v3594
        %v3653 = vpop.xlane.xlu0 %3652
        %3654 = vmax.xlane.f32.xlu0 %v3597
        %v3655 = vpop.xlane.xlu0 %3654
        %3656 = vmax.xlane.f32.xlu0 %v3602
        %v3657 = vpop.xlane.xlu0 %3656
        %3658 = vmax.xlane.f32.xlu0 %v3605
        %v3659 = vpop.xlane.xlu0 %3658
        %3660 = vmax.xlane.f32.xlu0 %v3610
        %v3661 = vpop.xlane.xlu0 %3660
        %3662 = vmax.xlane.f32.xlu0 %v3613
        %v3663 = vpop.xlane.xlu0 %3662
        %3664 = vmax.xlane.f32.xlu0 %v3618
        %v3665 = vpop.xlane.xlu0 %3664
        %3666 = vmax.xlane.f32.xlu0 %v3621
        %v3667 = vpop.xlane.xlu0 %3666
        %3668 = vmax.xlane.f32.xlu0 %v3626
        %v3669 = vpop.xlane.xlu0 %3668
        %3670 = vmax.xlane.f32.xlu0 %v3629
        %v3671 = vpop.xlane.xlu0 %3670
        %3672 = vmax.xlane.f32.xlu0 %v3634
        %v3673 = vpop.xlane.xlu0 %3672
        %3674 = vmax.xlane.f32.xlu0 %v3637
        %v3675 = vpop.xlane.xlu0 %3674
        %3676 = vmax.xlane.f32.xlu0 %v3642
        %v3677 = vpop.xlane.xlu0 %3676
        %3678 = vmax.xlane.f32.xlu0 %v3645
        %v3679 = vpop.xlane.xlu0 %3678
        %v3680 = vsub.f32 %v3586, %v3649
        %v3681 = vsub.f32 %v3589, %v3651
        %v3682 = vsub.f32 %v3594, %v3653
        %v3683 = vsub.f32 %v3597, %v3655
        %v3684 = vsub.f32 %v3602, %v3657
        %v3685 = vsub.f32 %v3605, %v3659
        %v3686 = vsub.f32 %v3610, %v3661
        %v3687 = vsub.f32 %v3613, %v3663
        %v3688 = vsub.f32 %v3618, %v3665
        %v3689 = vsub.f32 %v3621, %v3667
        %v3690 = vsub.f32 %v3626, %v3669
        %v3691 = vsub.f32 %v3629, %v3671
        %v3692 = vsub.f32 %v3634, %v3673
        %v3693 = vsub.f32 %v3637, %v3675
        %v3694 = vsub.f32 %v3642, %v3677
        %v3695 = vsub.f32 %v3645, %v3679
        %v3696 = vmul.f32 %v3680, 1.442695
        %v3697 = vpow.pop %v3696
        %v3698 = vmul.f32 %v3681, 1.442695
        %v3699 = vpow.pop %v3698
        %v3700 = vmul.f32 %v3682, 1.442695
        %v3701 = vpow.pop %v3700
        %v3702 = vmul.f32 %v3683, 1.442695
        %v3703 = vpow.pop %v3702
        %v3704 = vmul.f32 %v3684, 1.442695
        %v3705 = vpow.pop %v3704
        %v3706 = vmul.f32 %v3685, 1.442695
        %v3707 = vpow.pop %v3706
        %v3708 = vmul.f32 %v3686, 1.442695
        %v3709 = vpow.pop %v3708
        %v3710 = vmul.f32 %v3687, 1.442695
        %v3711 = vpow.pop %v3710
        %v3712 = vmul.f32 %v3688, 1.442695
        %v3713 = vpow.pop %v3712
        %v3714 = vmul.f32 %v3689, 1.442695
        %v3715 = vpow.pop %v3714
        %v3716 = vmul.f32 %v3690, 1.442695
        %v3717 = vpow.pop %v3716
        %v3718 = vmul.f32 %v3691, 1.442695
        %v3719 = vpow.pop %v3718
        %v3720 = vmul.f32 %v3692, 1.442695
        %v3721 = vpow.pop %v3720
        %v3722 = vmul.f32 %v3693, 1.442695
        %v3723 = vpow.pop %v3722
        %v3724 = vmul.f32 %v3694, 1.442695
        %v3725 = vpow.pop %v3724
        %v3726 = vmul.f32 %v3695, 1.442695
        %v3727 = vpow.pop %v3726
        %3728 = vadd.xlane.f32.xlu0 %v3697
        %v3729 = vpop.xlane.xlu0 %3728
        %3730 = vadd.xlane.f32.xlu0 %v3699
        %v3731 = vpop.xlane.xlu0 %3730
        %3732 = vadd.xlane.f32.xlu0 %v3701
        %v3733 = vpop.xlane.xlu0 %3732
        %3734 = vadd.xlane.f32.xlu0 %v3703
        %v3735 = vpop.xlane.xlu0 %3734
        %3736 = vadd.xlane.f32.xlu0 %v3705
        %v3737 = vpop.xlane.xlu0 %3736
        %3738 = vadd.xlane.f32.xlu0 %v3707
        %v3739 = vpop.xlane.xlu0 %3738
        %3740 = vadd.xlane.f32.xlu0 %v3709
        %v3741 = vpop.xlane.xlu0 %3740
        %3742 = vadd.xlane.f32.xlu0 %v3711
        %v3743 = vpop.xlane.xlu0 %3742
        %3744 = vadd.xlane.f32.xlu0 %v3713
        %v3745 = vpop.xlane.xlu0 %3744
        %3746 = vadd.xlane.f32.xlu0 %v3715
        %v3747 = vpop.xlane.xlu0 %3746
        %3748 = vadd.xlane.f32.xlu0 %v3717
        %v3749 = vpop.xlane.xlu0 %3748
        %3750 = vadd.xlane.f32.xlu0 %v3719
        %v3751 = vpop.xlane.xlu0 %3750
        %3752 = vadd.xlane.f32.xlu0 %v3721
        %v3753 = vpop.xlane.xlu0 %3752
        %3754 = vadd.xlane.f32.xlu0 %v3723
        %v3755 = vpop.xlane.xlu0 %3754
        %3756 = vadd.xlane.f32.xlu0 %v3725
        %v3757 = vpop.xlane.xlu0 %3756
        %3758 = vadd.xlane.f32.xlu0 %v3727
        %v3759 = vpop.xlane.xlu0 %3758
        %v3760 = vpack.c.bf16 %v3699, %v3697
        %v3761 = vpack.c.bf16 %v3703, %v3701
        %v3762 = vpack.c.bf16 %v3707, %v3705
        %v3763 = vpack.c.bf16 %v3711, %v3709
        %v3764 = vpack.c.bf16 %v3715, %v3713
        %v3765 = vpack.c.bf16 %v3719, %v3717
        %v3766 = vpack.c.bf16 %v3723, %v3721
        %v3767 = vpack.c.bf16 %v3727, %v3725
        %3768 = vrot.lane.b32.xlu0 %v723, 104
        %v3769 = vpop.permute.xlu0 %3768
        %3770 = vrot.lane.b32.xlu0 %v726, 104
        %v3771 = vpop.permute.xlu0 %3770
        %3772 = vrot.lane.b32.xlu0 %v729, 104
        %v3773 = vpop.permute.xlu0 %3772
        %3774 = vrot.lane.b32.xlu0 %v732, 104
        %v3775 = vpop.permute.xlu0 %3774
        %3776 = vrot.lane.b32.xlu0 %v735, 104
        %v3777 = vpop.permute.xlu0 %3776
        %3778 = vrot.lane.b32.xlu0 %v738, 104
        %v3779 = vpop.permute.xlu0 %3778
        %3780 = vrot.lane.b32.xlu0 %v741, 104
        %v3781 = vpop.permute.xlu0 %3780
        %3782 = vrot.lane.b32.xlu0 %v744, 104
        %v3783 = vpop.permute.xlu0 %3782
        %3792 = vmatprep.subr.bf16.mxu0 0
        %3793 = vmatpush1.bf16.msra.mxu0 %v3769
        %3794 = vmatprep.subr.bf16.mxu0 0
        %3795 = vmatpush1.bf16.msra.mxu0 %v3771
        %3796 = vmatprep.subr.bf16.mxu0 0
        %3797 = vmatpush1.bf16.msra.mxu0 %v3773
        %3798 = vmatprep.subr.bf16.mxu0 0
        %3799 = vmatpush1.bf16.msra.mxu0 %v3775
        %3800 = vmatprep.subr.bf16.mxu0 0
        %3801 = vmatpush1.bf16.msra.mxu0 %v3777
        %3802 = vmatprep.subr.bf16.mxu0 0
        %3803 = vmatpush1.bf16.msra.mxu0 %v3779
        %3804 = vmatprep.subr.bf16.mxu0 0
        %3805 = vmatpush1.bf16.msra.mxu0 %v3781
        %3806 = vmatprep.subr.bf16.mxu0 0
        %3807 = vmatpush1.bf16.msra.mxu0 %v3783
        %3808 = vmatprep.subr.bf16.mxu0 0
        %3809 = vmatpush1.bf16.msra.mxu0 0
        %3810 = vmatprep.subr.bf16.mxu0 0
        %3811 = vmatpush1.bf16.msra.mxu0 0
        %3812 = vmatprep.subr.bf16.mxu0 0
        %3813 = vmatpush1.bf16.msra.mxu0 0
        %3814 = vmatprep.subr.bf16.mxu0 0
        %3815 = vmatpush1.bf16.msra.mxu0 0
        %3816 = vmatprep.subr.bf16.mxu0 0
        %3817 = vmatpush1.bf16.msra.mxu0 0
        %3818 = vmatprep.subr.bf16.mxu0 0
        %3819 = vmatpush1.bf16.msra.mxu0 0
        %3820 = vmatprep.subr.bf16.mxu0 0
        %3821 = vmatpush1.bf16.msra.mxu0 0
        %3822 = vmatprep.subr.bf16.mxu0 0
        %3823 = vmatpush1.bf16.msra.mxu0 0
        %3824 = vmatprep.mubr.bf16.mxu0 0
        %3825 = vmatmul.mubr.bf16.gmra.mrb[0].mxu0 %v3760
        %v3826 = vpop.f32.mrb[0].mxu0
        %v3827 = vadd.f32 0.0, %v3826
        %v3828 = vpop.f32.mrb[0].mxu0
        %v3829 = vpop.f32.mrb[0].mxu0
        %v3830 = vadd.f32 0.0, %v3829
        %v3831 = vpop.f32.mrb[0].mxu0
        %3832 = vmatprep.mubr.bf16.mxu0 0
        %3833 = vmatmul.mubr.bf16.gmra.mrb[0].mxu0 %v3761
        %v3834 = vpop.f32.mrb[0].mxu0
        %v3835 = vadd.f32 0.0, %v3834
        %v3836 = vpop.f32.mrb[0].mxu0
        %v3837 = vpop.f32.mrb[0].mxu0
        %v3838 = vadd.f32 0.0, %v3837
        %v3839 = vpop.f32.mrb[0].mxu0
        %3840 = vmatprep.mubr.bf16.mxu0 0
        %3841 = vmatmul.mubr.bf16.gmra.mrb[0].mxu0 %v3762
        %v3842 = vpop.f32.mrb[0].mxu0
        %v3843 = vadd.f32 0.0, %v3842
        %v3844 = vpop.f32.mrb[0].mxu0
        %v3845 = vpop.f32.mrb[0].mxu0
        %v3846 = vadd.f32 0.0, %v3845
        %v3847 = vpop.f32.mrb[0].mxu0
        %3848 = vmatprep.mubr.bf16.mxu0 0
        %3849 = vmatmul.mubr.bf16.gmra.mrb[0].mxu0 %v3763
        %v3850 = vpop.f32.mrb[0].mxu0
        %v3851 = vadd.f32 0.0, %v3850
        %v3852 = vpop.f32.mrb[0].mxu0
        %v3853 = vpop.f32.mrb[0].mxu0
        %v3854 = vadd.f32 0.0, %v3853
        %v3855 = vpop.f32.mrb[0].mxu0
        %3856 = vmatprep.mubr.bf16.mxu0 0
        %3857 = vmatmul.mubr.bf16.gmra.mrb[0].mxu0 %v3764
        %v3858 = vpop.f32.mrb[0].mxu0
        %v3859 = vadd.f32 0.0, %v3858
        %v3860 = vpop.f32.mrb[0].mxu0
        %v3861 = vpop.f32.mrb[0].mxu0
        %v3862 = vadd.f32 0.0, %v3861
        %v3863 = vpop.f32.mrb[0].mxu0
        %3864 = vmatprep.mubr.bf16.mxu0 0
        %3865 = vmatmul.mubr.bf16.gmra.mrb[0].mxu0 %v3765
        %v3866 = vpop.f32.mrb[0].mxu0
        %v3867 = vadd.f32 0.0, %v3866
        %v3868 = vpop.f32.mrb[0].mxu0
        %v3869 = vpop.f32.mrb[0].mxu0
        %v3870 = vadd.f32 0.0, %v3869
        %v3871 = vpop.f32.mrb[0].mxu0
        %3872 = vmatprep.mubr.bf16.mxu0 0
        %3873 = vmatmul.mubr.bf16.gmra.mrb[0].mxu0 %v3766
        %v3874 = vpop.f32.mrb[0].mxu0
        %v3875 = vadd.f32 0.0, %v3874
        %v3876 = vpop.f32.mrb[0].mxu0
        %v3877 = vpop.f32.mrb[0].mxu0
        %v3878 = vadd.f32 0.0, %v3877
        %v3879 = vpop.f32.mrb[0].mxu0
        %3880 = vmatprep.mubr.bf16.mxu0 0
        %3881 = vmatmul.mubr.bf16.gmra.mrb[0].mxu0 %v3767
        %v3882 = vpop.f32.mrb[0].mxu0
        %v3883 = vadd.f32 0.0, %v3882
        %v3884 = vpop.f32.mrb[0].mxu0
        %v3885 = vpop.f32.mrb[0].mxu0
        %v3886 = vadd.f32 0.0, %v3885
        %v3887 = vpop.f32.mrb[0].mxu0
        %3888 = vdwg.mxu0
        %v3889 = vrcp.pop %v3729
        %v3890 = vrcp.pop %v3731
        %v3891 = vrcp.pop %v3733
        %v3892 = vrcp.pop %v3735
        %v3893 = vrcp.pop %v3737
        %v3894 = vrcp.pop %v3739
        %v3895 = vrcp.pop %v3741
        %v3896 = vrcp.pop %v3743
        %v3897 = vrcp.pop %v3745
        %v3898 = vrcp.pop %v3747
        %v3899 = vrcp.pop %v3749
        %v3900 = vrcp.pop %v3751
        %v3901 = vrcp.pop %v3753
        %v3902 = vrcp.pop %v3755
        %v3903 = vrcp.pop %v3757
        %v3904 = vrcp.pop %v3759
        %v3905 = vmul.f32 %v3827, %v3889
        %v3906 = vmul.f32 %v3830, %v3890
        %v3907 = vmul.f32 %v3835, %v3891
        %v3908 = vmul.f32 %v3838, %v3892
        %v3909 = vmul.f32 %v3843, %v3893
        %v3910 = vmul.f32 %v3846, %v3894
        %v3911 = vmul.f32 %v3851, %v3895
        %v3912 = vmul.f32 %v3854, %v3896
        %v3913 = vmul.f32 %v3859, %v3897
        %v3914 = vmul.f32 %v3862, %v3898
        %v3915 = vmul.f32 %v3867, %v3899
        %v3916 = vmul.f32 %v3870, %v3900
        %v3917 = vmul.f32 %v3875, %v3901
        %v3918 = vmul.f32 %v3878, %v3902
        %v3919 = vmul.f32 %v3883, %v3903
        %v3920 = vmul.f32 %v3886, %v3904
        %v3921 = vpack.c.bf16 %v3906, %v3905
        %v3922 = vpack.c.bf16 %v3908, %v3907
        %v3923 = vpack.c.bf16 %v3910, %v3909
        %v3924 = vpack.c.bf16 %v3912, %v3911
        %v3925 = vpack.c.bf16 %v3914, %v3913
        %v3926 = vpack.c.bf16 %v3916, %v3915
        %v3927 = vpack.c.bf16 %v3918, %v3917
        %v3928 = vpack.c.bf16 %v3920, %v3919
        %3929 = vrot.lane.b32.xlu0 %v721, 100
        %v3930 = vpop.permute.xlu0 %3929
        %3931 = vrot.lane.b32.xlu0 %v724, 100
        %v3932 = vpop.permute.xlu0 %3931
        %3933 = vrot.lane.b32.xlu0 %v727, 100
        %v3934 = vpop.permute.xlu0 %3933
        %3935 = vrot.lane.b32.xlu0 %v730, 100
        %v3936 = vpop.permute.xlu0 %3935
        %3937 = vrot.lane.b32.xlu0 %v733, 100
        %v3938 = vpop.permute.xlu0 %3937
        %3939 = vrot.lane.b32.xlu0 %v736, 100
        %v3940 = vpop.permute.xlu0 %3939
        %3941 = vrot.lane.b32.xlu0 %v739, 100
        %v3942 = vpop.permute.xlu0 %3941
        %3943 = vrot.lane.b32.xlu0 %v742, 100
        %v3944 = vpop.permute.xlu0 %3943
        %3945 = vrot.lane.b32.xlu0 %v722, 100
        %v3946 = vpop.permute.xlu0 %3945
        %3947 = vrot.lane.b32.xlu0 %v725, 100
        %v3948 = vpop.permute.xlu0 %3947
        %3949 = vrot.lane.b32.xlu0 %v728, 100
        %v3950 = vpop.permute.xlu0 %3949
        %3951 = vrot.lane.b32.xlu0 %v731, 100
        %v3952 = vpop.permute.xlu0 %3951
        %3953 = vrot.lane.b32.xlu0 %v734, 100
        %v3954 = vpop.permute.xlu0 %3953
        %3955 = vrot.lane.b32.xlu0 %v737, 100
        %v3956 = vpop.permute.xlu0 %3955
        %3957 = vrot.lane.b32.xlu0 %v740, 100
        %v3958 = vpop.permute.xlu0 %3957
        %3959 = vrot.lane.b32.xlu0 %v743, 100
        %v3960 = vpop.permute.xlu0 %3959
        %v3962 = vsel %vm754, %v3930, 0
        %v3965 = vsel %vm754, %v3932, 0
        %v3968 = vsel %vm754, %v3934, 0
        %v3971 = vsel %vm754, %v3936, 0
        %v3974 = vsel %vm754, %v3938, 0
        %v3977 = vsel %vm754, %v3940, 0
        %v3980 = vsel %vm754, %v3942, 0
        %v3983 = vsel %vm754, %v3944, 0
        %v3986 = vsel %vm754, %v3946, 0
        %v3989 = vsel %vm754, %v3948, 0
        %v3992 = vsel %vm754, %v3950, 0
        %v3995 = vsel %vm754, %v3952, 0
        %v3998 = vsel %vm754, %v3954, 0
        %v4001 = vsel %vm754, %v3956, 0
        %v4004 = vsel %vm754, %v3958, 0
        %v4007 = vsel %vm754, %v3960, 0
        %4009 = vmatprep.subr.bf16.mxu0 0
        %4010 = vmatpush1.bf16.xpose.msra.mxu0 %v3986
        %4011 = vmatprep.subr.bf16.mxu0 0
        %4012 = vmatpush1.bf16.xpose.msra.mxu0 %v3989
        %4013 = vmatprep.subr.bf16.mxu0 0
        %4014 = vmatpush1.bf16.xpose.msra.mxu0 %v3992
        %4015 = vmatprep.subr.bf16.mxu0 0
        %4016 = vmatpush1.bf16.xpose.msra.mxu0 %v3995
        %4017 = vmatprep.subr.bf16.mxu0 0
        %4018 = vmatpush1.bf16.xpose.msra.mxu0 %v3998
        %4019 = vmatprep.subr.bf16.mxu0 0
        %4020 = vmatpush1.bf16.xpose.msra.mxu0 %v4001
        %4021 = vmatprep.subr.bf16.mxu0 0
        %4022 = vmatpush1.bf16.xpose.msra.mxu0 %v4004
        %4023 = vmatprep.subr.bf16.mxu0 0
        %4024 = vmatpush1.bf16.xpose.msra.mxu0 %v4007
        %4025 = vmatprep.subr.bf16.mxu0 0
        %4026 = vmatpush1.bf16.xpose.msra.mxu0 0
        %4027 = vmatprep.subr.bf16.mxu0 0
        %4028 = vmatpush1.bf16.xpose.msra.mxu0 0
        %4029 = vmatprep.subr.bf16.mxu0 0
        %4030 = vmatpush1.bf16.xpose.msra.mxu0 0
        %4031 = vmatprep.subr.bf16.mxu0 0
        %4032 = vmatpush1.bf16.xpose.msra.mxu0 0
        %4033 = vmatprep.subr.bf16.mxu0 0
        %4034 = vmatpush1.bf16.xpose.msra.mxu0 0
        %4035 = vmatprep.subr.bf16.mxu0 0
        %4036 = vmatpush1.bf16.xpose.msra.mxu0 0
        %4037 = vmatprep.subr.bf16.mxu0 0
        %4038 = vmatpush1.bf16.xpose.msra.mxu0 0
        %4039 = vmatprep.subr.bf16.mxu0 0
        %4040 = vmatpush1.bf16.xpose.msra.mxu0 0
        %4041 = vmatprep.mubr.bf16.mxu0 0
        %4042 = vmatmul.mubr.bf16.gmra.mrb[0].mxu0 %v3962
        %v4043 = vpop.f32.mrb[0].mxu0
        %v4044 = vadd.f32 %v752, %v4043
        %v4045 = vpop.f32.mrb[0].mxu0
        %v4046 = vpop.f32.mrb[0].mxu0
        %v4047 = vadd.f32 %v752, %v4046
        %v4048 = vpop.f32.mrb[0].mxu0
        %4049 = vmatprep.mubr.bf16.mxu0 0
        %4050 = vmatmul.mubr.bf16.gmra.mrb[0].mxu0 %v3965
        %v4051 = vpop.f32.mrb[0].mxu0
        %v4052 = vadd.f32 %v752, %v4051
        %v4053 = vpop.f32.mrb[0].mxu0
        %v4054 = vpop.f32.mrb[0].mxu0
        %v4055 = vadd.f32 %v752, %v4054
        %v4056 = vpop.f32.mrb[0].mxu0
        %4057 = vmatprep.mubr.bf16.mxu0 0
        %4058 = vmatmul.mubr.bf16.gmra.mrb[0].mxu0 %v3968
        %v4059 = vpop.f32.mrb[0].mxu0
        %v4060 = vadd.f32 %v752, %v4059
        %v4061 = vpop.f32.mrb[0].mxu0
        %v4062 = vpop.f32.mrb[0].mxu0
        %v4063 = vadd.f32 %v752, %v4062
        %v4064 = vpop.f32.mrb[0].mxu0
        %4065 = vmatprep.mubr.bf16.mxu0 0
        %4066 = vmatmul.mubr.bf16.gmra.mrb[0].mxu0 %v3971
        %v4067 = vpop.f32.mrb[0].mxu0
        %v4068 = vadd.f32 %v752, %v4067
        %v4069 = vpop.f32.mrb[0].mxu0
        %v4070 = vpop.f32.mrb[0].mxu0
        %v4071 = vadd.f32 %v752, %v4070
        %v4072 = vpop.f32.mrb[0].mxu0
        %4073 = vmatprep.mubr.bf16.mxu0 0
        %4074 = vmatmul.mubr.bf16.gmra.mrb[0].mxu0 %v3974
        %v4075 = vpop.f32.mrb[0].mxu0
        %v4076 = vadd.f32 %v752, %v4075
        %v4077 = vpop.f32.mrb[0].mxu0
        %v4078 = vpop.f32.mrb[0].mxu0
        %v4079 = vadd.f32 %v752, %v4078
        %v4080 = vpop.f32.mrb[0].mxu0
        %4081 = vmatprep.mubr.bf16.mxu0 0
        %4082 = vmatmul.mubr.bf16.gmra.mrb[0].mxu0 %v3977
        %v4083 = vpop.f32.mrb[0].mxu0
        %v4084 = vadd.f32 %v752, %v4083
        %v4085 = vpop.f32.mrb[0].mxu0
        %v4086 = vpop.f32.mrb[0].mxu0
        %v4087 = vadd.f32 %v752, %v4086
        %v4088 = vpop.f32.mrb[0].mxu0
        %4089 = vmatprep.mubr.bf16.mxu0 0
        %4090 = vmatmul.mubr.bf16.gmra.mrb[0].mxu0 %v3980
        %v4091 = vpop.f32.mrb[0].mxu0
        %v4092 = vadd.f32 %v752, %v4091
        %v4093 = vpop.f32.mrb[0].mxu0
        %v4094 = vpop.f32.mrb[0].mxu0
        %v4095 = vadd.f32 %v752, %v4094
        %v4096 = vpop.f32.mrb[0].mxu0
        %4097 = vmatprep.mubr.bf16.mxu0 0
        %4098 = vmatmul.mubr.bf16.gmra.mrb[0].mxu0 %v3983
        %v4099 = vpop.f32.mrb[0].mxu0
        %v4100 = vadd.f32 %v752, %v4099
        %v4101 = vpop.f32.mrb[0].mxu0
        %v4102 = vpop.f32.mrb[0].mxu0
        %v4103 = vadd.f32 %v752, %v4102
        %v4104 = vpop.f32.mrb[0].mxu0
        %4105 = vdwg.mxu0
        %4106 = vmax.xlane.f32.xlu0 %v4044
        %v4107 = vpop.xlane.xlu0 %4106
        %4108 = vmax.xlane.f32.xlu0 %v4047
        %v4109 = vpop.xlane.xlu0 %4108
        %4110 = vmax.xlane.f32.xlu0 %v4052
        %v4111 = vpop.xlane.xlu0 %4110
        %4112 = vmax.xlane.f32.xlu0 %v4055
        %v4113 = vpop.xlane.xlu0 %4112
        %4114 = vmax.xlane.f32.xlu0 %v4060
        %v4115 = vpop.xlane.xlu0 %4114
        %4116 = vmax.xlane.f32.xlu0 %v4063
        %v4117 = vpop.xlane.xlu0 %4116
        %4118 = vmax.xlane.f32.xlu0 %v4068
        %v4119 = vpop.xlane.xlu0 %4118
        %4120 = vmax.xlane.f32.xlu0 %v4071
        %v4121 = vpop.xlane.xlu0 %4120
        %4122 = vmax.xlane.f32.xlu0 %v4076
        %v4123 = vpop.xlane.xlu0 %4122
        %4124 = vmax.xlane.f32.xlu0 %v4079
        %v4125 = vpop.xlane.xlu0 %4124
        %4126 = vmax.xlane.f32.xlu0 %v4084
        %v4127 = vpop.xlane.xlu0 %4126
        %4128 = vmax.xlane.f32.xlu0 %v4087
        %v4129 = vpop.xlane.xlu0 %4128
        %4130 = vmax.xlane.f32.xlu0 %v4092
        %v4131 = vpop.xlane.xlu0 %4130
        %4132 = vmax.xlane.f32.xlu0 %v4095
        %v4133 = vpop.xlane.xlu0 %4132
        %4134 = vmax.xlane.f32.xlu0 %v4100
        %v4135 = vpop.xlane.xlu0 %4134
        %4136 = vmax.xlane.f32.xlu0 %v4103
        %v4137 = vpop.xlane.xlu0 %4136
        %v4138 = vsub.f32 %v4044, %v4107
        %v4139 = vsub.f32 %v4047, %v4109
        %v4140 = vsub.f32 %v4052, %v4111
        %v4141 = vsub.f32 %v4055, %v4113
        %v4142 = vsub.f32 %v4060, %v4115
        %v4143 = vsub.f32 %v4063, %v4117
        %v4144 = vsub.f32 %v4068, %v4119
        %v4145 = vsub.f32 %v4071, %v4121
        %v4146 = vsub.f32 %v4076, %v4123
        %v4147 = vsub.f32 %v4079, %v4125
        %v4148 = vsub.f32 %v4084, %v4127
        %v4149 = vsub.f32 %v4087, %v4129
        %v4150 = vsub.f32 %v4092, %v4131
        %v4151 = vsub.f32 %v4095, %v4133
        %v4152 = vsub.f32 %v4100, %v4135
        %v4153 = vsub.f32 %v4103, %v4137
        %v4154 = vmul.f32 %v4138, 1.442695
        %v4155 = vpow.pop %v4154
        %v4156 = vmul.f32 %v4139, 1.442695
        %v4157 = vpow.pop %v4156
        %v4158 = vmul.f32 %v4140, 1.442695
        %v4159 = vpow.pop %v4158
        %v4160 = vmul.f32 %v4141, 1.442695
        %v4161 = vpow.pop %v4160
        %v4162 = vmul.f32 %v4142, 1.442695
        %v4163 = vpow.pop %v4162
        %v4164 = vmul.f32 %v4143, 1.442695
        %v4165 = vpow.pop %v4164
        %v4166 = vmul.f32 %v4144, 1.442695
        %v4167 = vpow.pop %v4166
        %v4168 = vmul.f32 %v4145, 1.442695
        %v4169 = vpow.pop %v4168
        %v4170 = vmul.f32 %v4146, 1.442695
        %v4171 = vpow.pop %v4170
        %v4172 = vmul.f32 %v4147, 1.442695
        %v4173 = vpow.pop %v4172
        %v4174 = vmul.f32 %v4148, 1.442695
        %v4175 = vpow.pop %v4174
        %v4176 = vmul.f32 %v4149, 1.442695
        %v4177 = vpow.pop %v4176
        %v4178 = vmul.f32 %v4150, 1.442695
        %v4179 = vpow.pop %v4178
        %v4180 = vmul.f32 %v4151, 1.442695
        %v4181 = vpow.pop %v4180
        %v4182 = vmul.f32 %v4152, 1.442695
        %v4183 = vpow.pop %v4182
        %v4184 = vmul.f32 %v4153, 1.442695
        %v4185 = vpow.pop %v4184
        %4186 = vadd.xlane.f32.xlu0 %v4155
        %v4187 = vpop.xlane.xlu0 %4186
        %4188 = vadd.xlane.f32.xlu0 %v4157
        %v4189 = vpop.xlane.xlu0 %4188
        %4190 = vadd.xlane.f32.xlu0 %v4159
        %v4191 = vpop.xlane.xlu0 %4190
        %4192 = vadd.xlane.f32.xlu0 %v4161
        %v4193 = vpop.xlane.xlu0 %4192
        %4194 = vadd.xlane.f32.xlu0 %v4163
        %v4195 = vpop.xlane.xlu0 %4194
        %4196 = vadd.xlane.f32.xlu0 %v4165
        %v4197 = vpop.xlane.xlu0 %4196
        %4198 = vadd.xlane.f32.xlu0 %v4167
        %v4199 = vpop.xlane.xlu0 %4198
        %4200 = vadd.xlane.f32.xlu0 %v4169
        %v4201 = vpop.xlane.xlu0 %4200
        %4202 = vadd.xlane.f32.xlu0 %v4171
        %v4203 = vpop.xlane.xlu0 %4202
        %4204 = vadd.xlane.f32.xlu0 %v4173
        %v4205 = vpop.xlane.xlu0 %4204
        %4206 = vadd.xlane.f32.xlu0 %v4175
        %v4207 = vpop.xlane.xlu0 %4206
        %4208 = vadd.xlane.f32.xlu0 %v4177
        %v4209 = vpop.xlane.xlu0 %4208
        %4210 = vadd.xlane.f32.xlu0 %v4179
        %v4211 = vpop.xlane.xlu0 %4210
        %4212 = vadd.xlane.f32.xlu0 %v4181
        %v4213 = vpop.xlane.xlu0 %4212
        %4214 = vadd.xlane.f32.xlu0 %v4183
        %v4215 = vpop.xlane.xlu0 %4214
        %4216 = vadd.xlane.f32.xlu0 %v4185
        %v4217 = vpop.xlane.xlu0 %4216
        %v4218 = vpack.c.bf16 %v4157, %v4155
        %v4219 = vpack.c.bf16 %v4161, %v4159
        %v4220 = vpack.c.bf16 %v4165, %v4163
        %v4221 = vpack.c.bf16 %v4169, %v4167
        %v4222 = vpack.c.bf16 %v4173, %v4171
        %v4223 = vpack.c.bf16 %v4177, %v4175
        %v4224 = vpack.c.bf16 %v4181, %v4179
        %v4225 = vpack.c.bf16 %v4185, %v4183
        %4226 = vrot.lane.b32.xlu0 %v723, 100
        %v4227 = vpop.permute.xlu0 %4226
        %4228 = vrot.lane.b32.xlu0 %v726, 100
        %v4229 = vpop.permute.xlu0 %4228
        %4230 = vrot.lane.b32.xlu0 %v729, 100
        %v4231 = vpop.permute.xlu0 %4230
        %4232 = vrot.lane.b32.xlu0 %v732, 100
        %v4233 = vpop.permute.xlu0 %4232
        %4234 = vrot.lane.b32.xlu0 %v735, 100
        %v4235 = vpop.permute.xlu0 %4234
        %4236 = vrot.lane.b32.xlu0 %v738, 100
        %v4237 = vpop.permute.xlu0 %4236
        %4238 = vrot.lane.b32.xlu0 %v741, 100
        %v4239 = vpop.permute.xlu0 %4238
        %4240 = vrot.lane.b32.xlu0 %v744, 100
        %v4241 = vpop.permute.xlu0 %4240
        %4250 = vmatprep.subr.bf16.mxu0 0
        %4251 = vmatpush1.bf16.msra.mxu0 %v4227
        %4252 = vmatprep.subr.bf16.mxu0 0
        %4253 = vmatpush1.bf16.msra.mxu0 %v4229
        %4254 = vmatprep.subr.bf16.mxu0 0
        %4255 = vmatpush1.bf16.msra.mxu0 %v4231
        %4256 = vmatprep.subr.bf16.mxu0 0
        %4257 = vmatpush1.bf16.msra.mxu0 %v4233
        %4258 = vmatprep.subr.bf16.mxu0 0
        %4259 = vmatpush1.bf16.msra.mxu0 %v4235
        %4260 = vmatprep.subr.bf16.mxu0 0
        %4261 = vmatpush1.bf16.msra.mxu0 %v4237
        %4262 = vmatprep.subr.bf16.mxu0 0
        %4263 = vmatpush1.bf16.msra.mxu0 %v4239
        %4264 = vmatprep.subr.bf16.mxu0 0
        %4265 = vmatpush1.bf16.msra.mxu0 %v4241
        %4266 = vmatprep.subr.bf16.mxu0 0
        %4267 = vmatpush1.bf16.msra.mxu0 0
        %4268 = vmatprep.subr.bf16.mxu0 0
        %4269 = vmatpush1.bf16.msra.mxu0 0
        %4270 = vmatprep.subr.bf16.mxu0 0
        %4271 = vmatpush1.bf16.msra.mxu0 0
        %4272 = vmatprep.subr.bf16.mxu0 0
        %4273 = vmatpush1.bf16.msra.mxu0 0
        %4274 = vmatprep.subr.bf16.mxu0 0
        %4275 = vmatpush1.bf16.msra.mxu0 0
        %4276 = vmatprep.subr.bf16.mxu0 0
        %4277 = vmatpush1.bf16.msra.mxu0 0
        %4278 = vmatprep.subr.bf16.mxu0 0
        %4279 = vmatpush1.bf16.msra.mxu0 0
        %4280 = vmatprep.subr.bf16.mxu0 0
        %4281 = vmatpush1.bf16.msra.mxu0 0
        %4282 = vmatprep.mubr.bf16.mxu0 0
        %4283 = vmatmul.mubr.bf16.gmra.mrb[0].mxu0 %v4218
        %v4284 = vpop.f32.mrb[0].mxu0
        %v4285 = vadd.f32 0.0, %v4284
        %v4286 = vpop.f32.mrb[0].mxu0
        %v4287 = vpop.f32.mrb[0].mxu0
        %v4288 = vadd.f32 0.0, %v4287
        %v4289 = vpop.f32.mrb[0].mxu0
        %4290 = vmatprep.mubr.bf16.mxu0 0
        %4291 = vmatmul.mubr.bf16.gmra.mrb[0].mxu0 %v4219
        %v4292 = vpop.f32.mrb[0].mxu0
        %v4293 = vadd.f32 0.0, %v4292
        %v4294 = vpop.f32.mrb[0].mxu0
        %v4295 = vpop.f32.mrb[0].mxu0
        %v4296 = vadd.f32 0.0, %v4295
        %v4297 = vpop.f32.mrb[0].mxu0
        %4298 = vmatprep.mubr.bf16.mxu0 0
        %4299 = vmatmul.mubr.bf16.gmra.mrb[0].mxu0 %v4220
        %v4300 = vpop.f32.mrb[0].mxu0
        %v4301 = vadd.f32 0.0, %v4300
        %v4302 = vpop.f32.mrb[0].mxu0
        %v4303 = vpop.f32.mrb[0].mxu0
        %v4304 = vadd.f32 0.0, %v4303
        %v4305 = vpop.f32.mrb[0].mxu0
        %4306 = vmatprep.mubr.bf16.mxu0 0
        %4307 = vmatmul.mubr.bf16.gmra.mrb[0].mxu0 %v4221
        %v4308 = vpop.f32.mrb[0].mxu0
        %v4309 = vadd.f32 0.0, %v4308
        %v4310 = vpop.f32.mrb[0].mxu0
        %v4311 = vpop.f32.mrb[0].mxu0
        %v4312 = vadd.f32 0.0, %v4311
        %v4313 = vpop.f32.mrb[0].mxu0
        %4314 = vmatprep.mubr.bf16.mxu0 0
        %4315 = vmatmul.mubr.bf16.gmra.mrb[0].mxu0 %v4222
        %v4316 = vpop.f32.mrb[0].mxu0
        %v4317 = vadd.f32 0.0, %v4316
        %v4318 = vpop.f32.mrb[0].mxu0
        %v4319 = vpop.f32.mrb[0].mxu0
        %v4320 = vadd.f32 0.0, %v4319
        %v4321 = vpop.f32.mrb[0].mxu0
        %4322 = vmatprep.mubr.bf16.mxu0 0
        %4323 = vmatmul.mubr.bf16.gmra.mrb[0].mxu0 %v4223
        %v4324 = vpop.f32.mrb[0].mxu0
        %v4325 = vadd.f32 0.0, %v4324
        %v4326 = vpop.f32.mrb[0].mxu0
        %v4327 = vpop.f32.mrb[0].mxu0
        %v4328 = vadd.f32 0.0, %v4327
        %v4329 = vpop.f32.mrb[0].mxu0
        %4330 = vmatprep.mubr.bf16.mxu0 0
        %4331 = vmatmul.mubr.bf16.gmra.mrb[0].mxu0 %v4224
        %v4332 = vpop.f32.mrb[0].mxu0
        %v4333 = vadd.f32 0.0, %v4332
        %v4334 = vpop.f32.mrb[0].mxu0
        %v4335 = vpop.f32.mrb[0].mxu0
        %v4336 = vadd.f32 0.0, %v4335
        %v4337 = vpop.f32.mrb[0].mxu0
        %4338 = vmatprep.mubr.bf16.mxu0 0
        %4339 = vmatmul.mubr.bf16.gmra.mrb[0].mxu0 %v4225
        %v4340 = vpop.f32.mrb[0].mxu0
        %v4341 = vadd.f32 0.0, %v4340
        %v4342 = vpop.f32.mrb[0].mxu0
        %v4343 = vpop.f32.mrb[0].mxu0
        %v4344 = vadd.f32 0.0, %v4343
        %v4345 = vpop.f32.mrb[0].mxu0
        %4346 = vdwg.mxu0
        %v4347 = vrcp.pop %v4187
        %v4348 = vrcp.pop %v4189
        %v4349 = vrcp.pop %v4191
        %v4350 = vrcp.pop %v4193
        %v4351 = vrcp.pop %v4195
        %v4352 = vrcp.pop %v4197
        %v4353 = vrcp.pop %v4199
        %v4354 = vrcp.pop %v4201
        %v4355 = vrcp.pop %v4203
        %v4356 = vrcp.pop %v4205
        %v4357 = vrcp.pop %v4207
        %v4358 = vrcp.pop %v4209
        %v4359 = vrcp.pop %v4211
        %v4360 = vrcp.pop %v4213
        %v4361 = vrcp.pop %v4215
        %v4362 = vrcp.pop %v4217
        %v4363 = vmul.f32 %v4285, %v4347
        %v4364 = vmul.f32 %v4288, %v4348
        %v4365 = vmul.f32 %v4293, %v4349
        %v4366 = vmul.f32 %v4296, %v4350
        %v4367 = vmul.f32 %v4301, %v4351
        %v4368 = vmul.f32 %v4304, %v4352
        %v4369 = vmul.f32 %v4309, %v4353
        %v4370 = vmul.f32 %v4312, %v4354
        %v4371 = vmul.f32 %v4317, %v4355
        %v4372 = vmul.f32 %v4320, %v4356
        %v4373 = vmul.f32 %v4325, %v4357
        %v4374 = vmul.f32 %v4328, %v4358
        %v4375 = vmul.f32 %v4333, %v4359
        %v4376 = vmul.f32 %v4336, %v4360
        %v4377 = vmul.f32 %v4341, %v4361
        %v4378 = vmul.f32 %v4344, %v4362
        %v4379 = vpack.c.bf16 %v4364, %v4363
        %v4380 = vpack.c.bf16 %v4366, %v4365
        %v4381 = vpack.c.bf16 %v4368, %v4367
        %v4382 = vpack.c.bf16 %v4370, %v4369
        %v4383 = vpack.c.bf16 %v4372, %v4371
        %v4384 = vpack.c.bf16 %v4374, %v4373
        %v4385 = vpack.c.bf16 %v4376, %v4375
        %v4386 = vpack.c.bf16 %v4378, %v4377
        %4395 = vrot.lane.b32.xlu0 %v1631, 4
        %v4396 = vpop.permute.xlu0 %4395
        %4397 = vrot.lane.b32.xlu0 %v1632, 4
        %v4398 = vpop.permute.xlu0 %4397
        %4399 = vrot.lane.b32.xlu0 %v1633, 4
        %v4400 = vpop.permute.xlu0 %4399
        %4401 = vrot.lane.b32.xlu0 %v1634, 4
        %v4402 = vpop.permute.xlu0 %4401
        %4403 = vrot.lane.b32.xlu0 %v1635, 4
        %v4404 = vpop.permute.xlu0 %4403
        %4405 = vrot.lane.b32.xlu0 %v1636, 4
        %v4406 = vpop.permute.xlu0 %4405
        %4407 = vrot.lane.b32.xlu0 %v1637, 4
        %v4408 = vpop.permute.xlu0 %4407
        %4409 = vrot.lane.b32.xlu0 %v1638, 4
        %v4410 = vpop.permute.xlu0 %4409
        %4419 = vrot.lane.b32.xlu0 %v2089, 8
        %v4420 = vpop.permute.xlu0 %4419
        %4421 = vrot.lane.b32.xlu0 %v2090, 8
        %v4422 = vpop.permute.xlu0 %4421
        %4423 = vrot.lane.b32.xlu0 %v2091, 8
        %v4424 = vpop.permute.xlu0 %4423
        %4425 = vrot.lane.b32.xlu0 %v2092, 8
        %v4426 = vpop.permute.xlu0 %4425
        %4427 = vrot.lane.b32.xlu0 %v2093, 8
        %v4428 = vpop.permute.xlu0 %4427
        %4429 = vrot.lane.b32.xlu0 %v2094, 8
        %v4430 = vpop.permute.xlu0 %4429
        %4431 = vrot.lane.b32.xlu0 %v2095, 8
        %v4432 = vpop.permute.xlu0 %4431
        %4433 = vrot.lane.b32.xlu0 %v2096, 8
        %v4434 = vpop.permute.xlu0 %4433
        %4443 = vrot.lane.b32.xlu0 %v2547, 12
        %v4444 = vpop.permute.xlu0 %4443
        %4445 = vrot.lane.b32.xlu0 %v2548, 12
        %v4446 = vpop.permute.xlu0 %4445
        %4447 = vrot.lane.b32.xlu0 %v2549, 12
        %v4448 = vpop.permute.xlu0 %4447
        %4449 = vrot.lane.b32.xlu0 %v2550, 12
        %v4450 = vpop.permute.xlu0 %4449
        %4451 = vrot.lane.b32.xlu0 %v2551, 12
        %v4452 = vpop.permute.xlu0 %4451
        %4453 = vrot.lane.b32.xlu0 %v2552, 12
        %v4454 = vpop.permute.xlu0 %4453
        %4455 = vrot.lane.b32.xlu0 %v2553, 12
        %v4456 = vpop.permute.xlu0 %4455
        %4457 = vrot.lane.b32.xlu0 %v2554, 12
        %v4458 = vpop.permute.xlu0 %4457
        %4467 = vrot.lane.b32.xlu0 %v3005, 16
        %v4468 = vpop.permute.xlu0 %4467
        %4469 = vrot.lane.b32.xlu0 %v3006, 16
        %v4470 = vpop.permute.xlu0 %4469
        %4471 = vrot.lane.b32.xlu0 %v3007, 16
        %v4472 = vpop.permute.xlu0 %4471
        %4473 = vrot.lane.b32.xlu0 %v3008, 16
        %v4474 = vpop.permute.xlu0 %4473
        %4475 = vrot.lane.b32.xlu0 %v3009, 16
        %v4476 = vpop.permute.xlu0 %4475
        %4477 = vrot.lane.b32.xlu0 %v3010, 16
        %v4478 = vpop.permute.xlu0 %4477
        %4479 = vrot.lane.b32.xlu0 %v3011, 16
        %v4480 = vpop.permute.xlu0 %4479
        %4481 = vrot.lane.b32.xlu0 %v3012, 16
        %v4482 = vpop.permute.xlu0 %4481
        %4491 = vrot.lane.b32.xlu0 %v3463, 20
        %v4492 = vpop.permute.xlu0 %4491
        %4493 = vrot.lane.b32.xlu0 %v3464, 20
        %v4494 = vpop.permute.xlu0 %4493
        %4495 = vrot.lane.b32.xlu0 %v3465, 20
        %v4496 = vpop.permute.xlu0 %4495
        %4497 = vrot.lane.b32.xlu0 %v3466, 20
        %v4498 = vpop.permute.xlu0 %4497
        %4499 = vrot.lane.b32.xlu0 %v3467, 20
        %v4500 = vpop.permute.xlu0 %4499
        %4501 = vrot.lane.b32.xlu0 %v3468, 20
        %v4502 = vpop.permute.xlu0 %4501
        %4503 = vrot.lane.b32.xlu0 %v3469, 20
        %v4504 = vpop.permute.xlu0 %4503
        %4505 = vrot.lane.b32.xlu0 %v3470, 20
        %v4506 = vpop.permute.xlu0 %4505
        %4515 = vrot.lane.b32.xlu0 %v3921, 24
        %v4516 = vpop.permute.xlu0 %4515
        %4517 = vrot.lane.b32.xlu0 %v3922, 24
        %v4518 = vpop.permute.xlu0 %4517
        %4519 = vrot.lane.b32.xlu0 %v3923, 24
        %v4520 = vpop.permute.xlu0 %4519
        %4521 = vrot.lane.b32.xlu0 %v3924, 24
        %v4522 = vpop.permute.xlu0 %4521
        %4523 = vrot.lane.b32.xlu0 %v3925, 24
        %v4524 = vpop.permute.xlu0 %4523
        %4525 = vrot.lane.b32.xlu0 %v3926, 24
        %v4526 = vpop.permute.xlu0 %4525
        %4527 = vrot.lane.b32.xlu0 %v3927, 24
        %v4528 = vpop.permute.xlu0 %4527
        %4529 = vrot.lane.b32.xlu0 %v3928, 24
        %v4530 = vpop.permute.xlu0 %4529
        %4539 = vrot.lane.b32.xlu0 %v4379, 28
        %v4540 = vpop.permute.xlu0 %4539
        %4541 = vrot.lane.b32.xlu0 %v4380, 28
        %v4542 = vpop.permute.xlu0 %4541
        %4543 = vrot.lane.b32.xlu0 %v4381, 28
        %v4544 = vpop.permute.xlu0 %4543
        %4545 = vrot.lane.b32.xlu0 %v4382, 28
        %v4546 = vpop.permute.xlu0 %4545
        %4547 = vrot.lane.b32.xlu0 %v4383, 28
        %v4548 = vpop.permute.xlu0 %4547
        %4549 = vrot.lane.b32.xlu0 %v4384, 28
        %v4550 = vpop.permute.xlu0 %4549
        %4551 = vrot.lane.b32.xlu0 %v4385, 28
        %v4552 = vpop.permute.xlu0 %4551
        %4553 = vrot.lane.b32.xlu0 %v4386, 28
        %v4554 = vpop.permute.xlu0 %4553
        %v4557 = vsel %vm754, %v1149, %v4396
        %v4560 = vsel %vm754, %v1150, %v4398
        %v4563 = vsel %vm754, %v1151, %v4400
        %v4566 = vsel %vm754, %v1152, %v4402
        %v4569 = vsel %vm754, %v1153, %v4404
        %v4572 = vsel %vm754, %v1154, %v4406
        %v4575 = vsel %vm754, %v1155, %v4408
        %v4578 = vsel %vm754, %v1156, %v4410
        %vm4579 = vcmask 64512
        %v4581 = vsel %vm4579, %v4557, %v4420
        %v4583 = vsel %vm4579, %v4560, %v4422
        %v4585 = vsel %vm4579, %v4563, %v4424
        %v4587 = vsel %vm4579, %v4566, %v4426
        %v4589 = vsel %vm4579, %v4569, %v4428
        %v4591 = vsel %vm4579, %v4572, %v4430
        %v4593 = vsel %vm4579, %v4575, %v4432
        %v4595 = vsel %vm4579, %v4578, %v4434
        %vm4596 = vcmask 97280
        %v4598 = vsel %vm4596, %v4581, %v4444
        %v4600 = vsel %vm4596, %v4583, %v4446
        %v4602 = vsel %vm4596, %v4585, %v4448
        %v4604 = vsel %vm4596, %v4587, %v4450
        %v4606 = vsel %vm4596, %v4589, %v4452
        %v4608 = vsel %vm4596, %v4591, %v4454
        %v4610 = vsel %vm4596, %v4593, %v4456
        %v4612 = vsel %vm4596, %v4595, %v4458
        %vm4613 = vcmask 130048
        %v4615 = vsel %vm4613, %v4598, %v4468
        %v4617 = vsel %vm4613, %v4600, %v4470
        %v4619 = vsel %vm4613, %v4602, %v4472
        %v4621 = vsel %vm4613, %v4604, %v4474
        %v4623 = vsel %vm4613, %v4606, %v4476
        %v4625 = vsel %vm4613, %v4608, %v4478
        %v4627 = vsel %vm4613, %v4610, %v4480
        %v4629 = vsel %vm4613, %v4612, %v4482
        %vm4630 = vcmask 162816
        %v4632 = vsel %vm4630, %v4615, %v4492
        %v4634 = vsel %vm4630, %v4617, %v4494
        %v4636 = vsel %vm4630, %v4619, %v4496
        %v4638 = vsel %vm4630, %v4621, %v4498
        %v4640 = vsel %vm4630, %v4623, %v4500
        %v4642 = vsel %vm4630, %v4625, %v4502
        %v4644 = vsel %vm4630, %v4627, %v4504
        %v4646 = vsel %vm4630, %v4629, %v4506
        %vm4647 = vcmask 195584
        %v4649 = vsel %vm4647, %v4632, %v4516
        %v4651 = vsel %vm4647, %v4634, %v4518
        %v4653 = vsel %vm4647, %v4636, %v4520
        %v4655 = vsel %vm4647, %v4638, %v4522
        %v4657 = vsel %vm4647, %v4640, %v4524
        %v4659 = vsel %vm4647, %v4642, %v4526
        %v4661 = vsel %vm4647, %v4644, %v4528
        %v4663 = vsel %vm4647, %v4646, %v4530
        %vm4664 = vcmask 228352
        %v4666 = vsel %vm4664, %v4649, %v4540
        %v4668 = vsel %vm4664, %v4651, %v4542
        %v4670 = vsel %vm4664, %v4653, %v4544
        %v4672 = vsel %vm4664, %v4655, %v4546
        %v4674 = vsel %vm4664, %v4657, %v4548
        %v4676 = vsel %vm4664, %v4659, %v4550
        %v4678 = vsel %vm4664, %v4661, %v4552
        %v4680 = vsel %vm4664, %v4663, %v4554
        %v4681 = vld [vmem:[#allocation7] sm:$0xf]
        %v4682 = vld [vmem:[#allocation7 + $0x4] sm:$0xf]
        %v4683 = vld [vmem:[#allocation7 + $0x8] sm:$0xf]
        %v4684 = vld [vmem:[#allocation7 + $0xc] sm:$0xf]
        %v4685 = vld [vmem:[%s4] sm:$0x1]
        %v4687 = vlaneseq
        %v4688 = vshrl.u32 %v4687, 7
        %v4689 = vsub.s32 0, %v4688
        %v4690 = vrot.slane %v4685, %v4689
        %v4696 = vunpack.c.l.b16 %v4681
        %v4697 = vunpack.c.l.b16 %v4682
        %v4698 = vunpack.c.l.b16 %v4683
        %v4699 = vunpack.c.l.b16 %v4684
        %v4700 = vpack.c.b16 %v4697, %v4696
        %v4701 = vpack.c.b16 %v4699, %v4698
        %vm4704 = vcmask 261120
        %v4705 = vsel %vm4704, %v4666, 0
        %v4707 = vsel %vm4704, %v4668, 0
        %v4709 = vsel %vm4704, %v4670, 0
        %v4711 = vsel %vm4704, %v4672, 0
        %v4713 = vsel %vm4704, %v4674, 0
        %v4715 = vsel %vm4704, %v4676, 0
        %v4717 = vsel %vm4704, %v4678, 0
        %v4719 = vsel %vm4704, %v4680, 0
        %4721 = vmatprep.subr.bf16.mxu0 0
        %4722 = vmatpush1.bf16.msra.mxu0 %v4700
        %4723 = vmatprep.subr.bf16.mxu0 0
        %4724 = vmatpush1.bf16.msra.mxu0 %v4701
        %4725 = vmatprep.subr.bf16.mxu0 0
        %4726 = vmatpush1.bf16.msra.mxu0 0
        %4727 = vmatprep.subr.bf16.mxu0 0
        %4728 = vmatpush1.bf16.msra.mxu0 0
        %4729 = vmatprep.subr.bf16.mxu0 0
        %4730 = vmatpush1.bf16.msra.mxu0 0
        %4731 = vmatprep.subr.bf16.mxu0 0
        %4732 = vmatpush1.bf16.msra.mxu0 0
        %4733 = vmatprep.subr.bf16.mxu0 0
        %4734 = vmatpush1.bf16.msra.mxu0 0
        %4735 = vmatprep.subr.bf16.mxu0 0
        %4736 = vmatpush1.bf16.msra.mxu0 0
        %4737 = vmatprep.subr.bf16.mxu0 0
        %4738 = vmatpush1.bf16.msra.mxu0 0
        %4739 = vmatprep.subr.bf16.mxu0 0
        %4740 = vmatpush1.bf16.msra.mxu0 0
        %4741 = vmatprep.subr.bf16.mxu0 0
        %4742 = vmatpush1.bf16.msra.mxu0 0
        %4743 = vmatprep.subr.bf16.mxu0 0
        %4744 = vmatpush1.bf16.msra.mxu0 0
        %4745 = vmatprep.subr.bf16.mxu0 0
        %4746 = vmatpush1.bf16.msra.mxu0 0
        %4747 = vmatprep.subr.bf16.mxu0 0
        %4748 = vmatpush1.bf16.msra.mxu0 0
        %4749 = vmatprep.subr.bf16.mxu0 0
        %4750 = vmatpush1.bf16.msra.mxu0 0
        %4751 = vmatprep.subr.bf16.mxu0 0
        %4752 = vmatpush1.bf16.msra.mxu0 0
        %4753 = vmatprep.mubr.bf16.mxu0 0
        %4754 = vmatmul.mubr.bf16.gmra.mrb[0].mxu0 %v4705
        %v4755 = vpop.f32.mrb[0].mxu0
        %v4756 = vadd.f32 %v4690, %v4755
        %v4757 = vpop.f32.mrb[0].mxu0
        %v4758 = vpop.f32.mrb[0].mxu0
        %v4759 = vadd.f32 %v4690, %v4758
        %v4760 = vpop.f32.mrb[0].mxu0
        %4761 = vmatprep.mubr.bf16.mxu0 0
        %4762 = vmatmul.mubr.bf16.gmra.mrb[0].mxu0 %v4707
        %v4763 = vpop.f32.mrb[0].mxu0
        %v4764 = vadd.f32 %v4690, %v4763
        %v4765 = vpop.f32.mrb[0].mxu0
        %v4766 = vpop.f32.mrb[0].mxu0
        %v4767 = vadd.f32 %v4690, %v4766
        %v4768 = vpop.f32.mrb[0].mxu0
        %4769 = vmatprep.mubr.bf16.mxu0 0
        %4770 = vmatmul.mubr.bf16.gmra.mrb[0].mxu0 %v4709
        %v4771 = vpop.f32.mrb[0].mxu0
        %v4772 = vadd.f32 %v4690, %v4771
        %v4773 = vpop.f32.mrb[0].mxu0
        %v4774 = vpop.f32.mrb[0].mxu0
        %v4775 = vadd.f32 %v4690, %v4774
        %v4776 = vpop.f32.mrb[0].mxu0
        %4777 = vmatprep.mubr.bf16.mxu0 0
        %4778 = vmatmul.mubr.bf16.gmra.mrb[0].mxu0 %v4711
        %v4779 = vpop.f32.mrb[0].mxu0
        %v4780 = vadd.f32 %v4690, %v4779
        %v4781 = vpop.f32.mrb[0].mxu0
        %v4782 = vpop.f32.mrb[0].mxu0
        %v4783 = vadd.f32 %v4690, %v4782
        %v4784 = vpop.f32.mrb[0].mxu0
        %4785 = vmatprep.mubr.bf16.mxu0 0
        %4786 = vmatmul.mubr.bf16.gmra.mrb[0].mxu0 %v4713
        %v4787 = vpop.f32.mrb[0].mxu0
        %v4788 = vadd.f32 %v4690, %v4787
        %v4789 = vpop.f32.mrb[0].mxu0
        %v4790 = vpop.f32.mrb[0].mxu0
        %v4791 = vadd.f32 %v4690, %v4790
        %v4792 = vpop.f32.mrb[0].mxu0
        %4793 = vmatprep.mubr.bf16.mxu0 0
        %4794 = vmatmul.mubr.bf16.gmra.mrb[0].mxu0 %v4715
        %v4795 = vpop.f32.mrb[0].mxu0
        %v4796 = vadd.f32 %v4690, %v4795
        %v4797 = vpop.f32.mrb[0].mxu0
        %v4798 = vpop.f32.mrb[0].mxu0
        %v4799 = vadd.f32 %v4690, %v4798
        %v4800 = vpop.f32.mrb[0].mxu0
        %4801 = vmatprep.mubr.bf16.mxu0 0
        %4802 = vmatmul.mubr.bf16.gmra.mrb[0].mxu0 %v4717
        %v4803 = vpop.f32.mrb[0].mxu0
        %v4804 = vadd.f32 %v4690, %v4803
        %v4805 = vpop.f32.mrb[0].mxu0
        %v4806 = vpop.f32.mrb[0].mxu0
        %v4807 = vadd.f32 %v4690, %v4806
        %v4808 = vpop.f32.mrb[0].mxu0
        %4809 = vmatprep.mubr.bf16.mxu0 0
        %4810 = vmatmul.mubr.bf16.gmra.mrb[0].mxu0 %v4719
        %v4811 = vpop.f32.mrb[0].mxu0
        %v4812 = vadd.f32 %v4690, %v4811
        %v4813 = vpop.f32.mrb[0].mxu0
        %v4814 = vpop.f32.mrb[0].mxu0
        %v4815 = vadd.f32 %v4690, %v4814
        %v4816 = vpop.f32.mrb[0].mxu0
        %4817 = vdwg.mxu0
        %4818 = vst [vmem:[%s282] sm:$0xff] %v4756
        %4819 = vst [vmem:[%s282 + $0x8] sm:$0xff] %v4759
        %4820 = vst [vmem:[%s282 + $0x10] sm:$0xff] %v4764
        %4821 = vst [vmem:[%s282 + $0x18] sm:$0xff] %v4767
        %4822 = vst [vmem:[%s282 + $0x20] sm:$0xff] %v4772
        %4823 = vst [vmem:[%s282 + $0x28] sm:$0xff] %v4775
        %4824 = vst [vmem:[%s282 + $0x30] sm:$0xff] %v4780
        %4825 = vst [vmem:[%s282 + $0x38] sm:$0xff] %v4783
        %4826 = vst [vmem:[%s282 + $0x40] sm:$0xff] %v4788
        %4827 = vst [vmem:[%s282 + $0x48] sm:$0xff] %v4791
        %4828 = vst [vmem:[%s282 + $0x50] sm:$0xff] %v4796
        %4829 = vst [vmem:[%s282 + $0x58] sm:$0xff] %v4799
        %4830 = vst [vmem:[%s282 + $0x60] sm:$0xff] %v4804
        %4831 = vst [vmem:[%s282 + $0x68] sm:$0xff] %v4807
        %4832 = vst [vmem:[%s282 + $0x70] sm:$0xff] %v4812
        %4833 = vst [vmem:[%s282 + $0x78] sm:$0xff] %v4815
        %s4834 = sand.u32 %s146, 1
        %s4835 = scalar_lea.sflag [#allocation4], %s4834
        %s4836 = sand.u32 %s146, 1
        %s4837 = smul.addr %s4836, 128
        %s4838 = scalar_lea.vmem [#allocation8], %s4837
        // Predicated region
        $region53: #{tpu_custom_call.1} parent=39 // pred_check
          %p4839 = pneg %p156
        $region54: #{tpu_custom_call.1} parent=39 // pred_check_branch
          %4841 = sbr.rel (%p4839) target = $region56
        $region55: #{tpu_custom_call.1} parent=39 // pred_region
          %s4843 = ssub.s32 2048, 2048
          %4844 = vsyncadd %s4835, %s4843
          %s4845 = smul.addr %s23, 16
          %s4846 = smul.addr %s4845, 128
          %s4847 = scalar_lea.hbm %s5, %s4846
          %s4848 = sshll.u32 %s4838, 4
          %s4849 = int_to_ptr.vmem [resolvable:$true] %s4848
          %4854 = dma.vmem_to_hbm [thread:$0]  %s4849, 2048, %s4847, %s4835, 128, 128, 8
        $region56: #{tpu_custom_call.1} parent=39 // pred_fallthru
          _
      $region40: #{tpu_custom_call.1} parent=5 // pred_fallthru
        _
      %p4855 = scmp.le.s32.totalorder 2, %s18
      // Predicated region
      $region57: #{tpu_custom_call.1} parent=5 // pred_check
        %p4856 = pneg %p4855
      $region58: #{tpu_custom_call.1} parent=5 // pred_check_branch
        %4858 = sbr.rel (%p4856) target = $region60
      $region59: #{tpu_custom_call.1} parent=5 // pred_region
        %s4859 = ssub.s32 %s18, 2
        // Predicated region
        $region61: #{tpu_custom_call.1} parent=59 // pred_check
          %p4860 = pneg %p162
        $region62: #{tpu_custom_call.1} parent=59 // pred_check_branch
          %4862 = sbr.rel (%p4860) target = $region64
        $region63: #{tpu_custom_call.1} parent=59 // pred_region
          %s4863 = sand.u32 %s147, 1
          %s4864 = scalar_lea.sflag [#allocation4], %s4863
          %s4865 = sand.u32 %s147, 1
          %s4866 = smul.addr %s4865, 128
          %s4867 = scalar_lea.vmem [#allocation8], %s4866
          %4868 = dma.done %s4864, 2048
        $region64: #{tpu_custom_call.1} parent=59 // pred_fallthru
          _
      $region60: #{tpu_custom_call.1} parent=5 // pred_fallthru
        _
    $region6: #{tpu_custom_call.1} parent=1 // loop_footer
      %s22 = sadd.s32 1, %s18
    $region7: #{tpu_custom_call.1} parent=1 // loop_footer_branch
      %17 = sbr.rel target = $region3
    $region8: #{tpu_custom_call.1} parent=1 // loop_exit
      _
    %4869 = vsyncpa [#allocation3], 1
    %s4870 = scalar_lea.sflag [#allocation3], 1
    %4871 = vsyncpa %s4870, 1
    %4872 = vsyncpa [#allocation6], 1
    %4873 = vsyncpa [#allocation4], 1
    %s4874 = scalar_lea.sflag [#allocation4], 1
    %4875 = vsyncpa %s4874, 1

</llo_original>
